<compile_context>
chip_gen: v7x
topology: tpu7x:2x2x1
jax: 0.10.0
libtpu: 0.0.40
codegen_flags: <defaults>
</compile_context>

<pallas_src>
import functools

import numpy as np

import jax
import jax.numpy as jnp
from jax.experimental import pallas as pl
from jax.experimental.pallas import tpu as pltpu


def _vmem_capacity_bytes():
    """Physical per-core VMEM; conservative (v7x) fallback if the query is unavailable."""
    try:
        return int(pltpu.get_tpu_info().vmem_capacity_bytes)
    except Exception:
        return 64 * 1024 * 1024


@functools.lru_cache(maxsize=None)
def _roll_mode(shape, dtype_name, axis):
    """Feature-probe pltpu.roll at the exact shape/dtype used in the kernel.

    Returns:
      "pos"   -> pltpu.roll matches np.roll (pass shift = Wp - dx)
      "neg"   -> opposite shift convention (pass shift = dx)
      "slice" -> roll unsupported / unexpected result; use the plain (misaligned) slice.
    """
    shift = shape[axis] - 1                      # the dx=1 shift actually used
    dtype = jnp.dtype(dtype_name)
    x = (np.arange(int(np.prod(shape))) % 251).reshape(shape).astype(dtype)

    def k(x_ref, o_ref):
        o_ref[...] = pltpu.roll(x_ref[...], shift, axis)

    try:
        y = np.asarray(
            pl.pallas_call(k, out_shape=jax.ShapeDtypeStruct(shape, dtype))(
                jnp.asarray(x)))
    except Exception:
        return "slice"
    if np.array_equal(y, np.roll(x, shift, axis=axis)):
        return "pos"
    if np.array_equal(y, np.roll(x, -shift, axis=axis)):
        return "neg"
    return "slice"


def _conv_kernel(x_ref, w_ref, b_ref, o_ref, acc_ref, *, K, th, W, roll_mode):
    # x_ref:   (th+K-1, Wp, Cin)  halo'd activation slab (NHWC, zero-padded borders)
    # w_ref:   (K*K, Cin, Cout)   tap-major weights
    # b_ref:   (1, Cout)          f32 bias
    # o_ref:   (th*W, Cout)       flat output rows for this h-tile
    # acc_ref: (th*W, Cout)       f32 VMEM accumulator scratch
    Wp = x_ref.shape[1]
    Cin = x_ref.shape[2]
    Cout = o_ref.shape[1]

    # Start the accumulator from the broadcast bias (f32) -> bias add is free.
    acc_ref[...] = jnp.broadcast_to(b_ref[...], (th * W, Cout))

    for dy in range(K):
        # dy offset is on the major axis -> free slice of the VMEM slab.
        slab = x_ref[dy:dy + th, :, :]                              # (th, Wp, Cin)
        for dx in range(K):
            if dx == 0:
                tap = slab[:, :W, :]                                # aligned slice
            elif roll_mode == "pos":
                tap = pltpu.roll(slab, Wp - dx, axis=1)[:, :W, :]   # XLU shift-left by dx
            elif roll_mode == "neg":
                tap = pltpu.roll(slab, dx, axis=1)[:, :W, :]        # opposite convention
            else:
                # Fallback: sublane-misaligned slice (relayout copy, always correct).
                tap = slab[:, dx:dx + W, :]
            # One MXU matmul per tap, accumulated in f32.
            acc_ref[...] += jnp.dot(tap.reshape(th * W, Cin),
                                    w_ref[dy * K + dx],
                                    preferred_element_type=jnp.float32)

    o_ref[...] = acc_ref[...].astype(o_ref.dtype)


def _pick_tile_h(H, W, step_bytes, budget, target_rows=512):
    """Choose tile height: smallest divisor of H whose th*W hits the MXU M target and
    fits the VMEM budget; otherwise the largest that fits."""
    cands = [th for th in range(1, H + 1)
             if H % th == 0 and (th == H or (th * W) % 8 == 0)]
    fitting = [th for th in cands if step_bytes(th) <= budget]
    pool = fitting if fitting else cands[:1]
    for th in pool:                       # ascending
        if th * W >= target_rows:
            return th
    return pool[-1]


def conv2d_pallas(x_nchw, weight, bias, *, compute_dtype=jnp.bfloat16):
    """Same-padded 2D conv + bias, matching torch.nn.functional.conv2d semantics.

    x_nchw: (N, Cin, H, W);  weight: (Cout, Cin, K, K) PyTorch OIHW;  bias: (Cout,)
    compute_dtype: matmul operand dtype (bf16 default for v6e/v7x MXU peak);
                   accumulation and bias add are always f32.
    returns (N, Cout, H, W) in x's dtype.
    """
    N, Cin, H, W = x_nchw.shape
    Cout, Cin_w, K, K2 = weight.shape
    assert Cin_w == Cin and K == K2
    assert K % 2 == 1, "only odd kernels (torch 'same' padding) / stride 1 supported"
    pad = K // 2
    Wp = W + 2 * pad
    out_dtype = x_nchw.dtype

    in_isz = jnp.dtype(compute_dtype).itemsize
    out_isz = jnp.dtype(out_dtype).itemsize
    cin_l = ((Cin + 127) // 128) * 128
    cout_l = ((Cout + 127) // 128) * 128
    wp_s = ((Wp + 7) // 8) * 8

    vmem_cap = _vmem_capacity_bytes()

    def step_bytes(th):
        slab = (th + K - 1) * wp_s * cin_l * in_isz       # input slab   (x2 buffers)
        outb = th * W * cout_l * out_isz                   # output block (x2 buffers)
        acc = th * W * cout_l * 4                          # f32 accumulator scratch
        wgt = K * K * Cin * cout_l * in_isz                # weights      (x2 buffers)
        return 2 * slab + 2 * outb + acc + 2 * (wgt + cout_l * 4)

    th = _pick_tile_h(H, W, step_bytes, budget=int(0.6 * vmem_cap))
    num_h = H // th

    roll_mode = ("slice" if K == 1 else
                 _roll_mode((th, Wp, Cin), jnp.dtype(compute_dtype).name, 1))

    # Wrapper glue (external NCHW contract): NCHW->NHWC, zero pad, halo'd h-slab
    # extraction so each grid step streams only its (th+K-1, Wp, Cin) window.
    x_nhwc = jnp.transpose(x_nchw, (0, 2, 3, 1)).astype(compute_dtype)   # (N,H,W,Cin)
    x_pad = jnp.pad(x_nhwc, ((0, 0), (pad, pad), (pad, pad), (0, 0)))    # (N,Hp,Wp,Cin)
    rows = jnp.arange(num_h)[:, None] * th + jnp.arange(th + 2 * pad)[None, :]
    x_slabs = x_pad[:, rows]                              # (N, num_h, th+K-1, Wp, Cin)

    # Weights -> (K*K, Cin, Cout) tap-major; bias -> (1, Cout) f32.
    w_taps = jnp.transpose(weight, (2, 3, 1, 0)).reshape(K * K, Cin, Cout)
    w_taps = w_taps.astype(compute_dtype)
    b2 = bias.reshape(1, Cout).astype(jnp.float32)

    kernel = functools.partial(_conv_kernel, K=K, th=th, W=W, roll_mode=roll_mode)

    # Always set the scoped VMEM limit (v5e default is only 16 MiB) but never request
    # more than ~85% of the physical per-core capacity (64 MiB on v7x).
    vmem_limit = min(int(0.85 * vmem_cap),
                     max(32 * 1024 * 1024, int(1.5 * step_bytes(th))))

    out_flat = pl.pallas_call(
        kernel,
        out_shape=jax.ShapeDtypeStruct((N, H * W, Cout), out_dtype),
        grid_spec=pltpu.PrefetchScalarGridSpec(
            num_scalar_prefetch=0,
            grid=(N, num_h),
            in_specs=[
                # halo'd slab for (n, h): streamed, double-buffered, tile-sized
                pl.BlockSpec((None, None, th + 2 * pad, Wp, Cin),
                             lambda n, h: (n, h, 0, 0, 0)),
                # weights / bias: constant index -> fetched once, stay in VMEM
                pl.BlockSpec((K * K, Cin, Cout), lambda n, h: (0, 0, 0)),
                pl.BlockSpec((1, Cout), lambda n, h: (0, 0)),
            ],
            out_specs=pl.BlockSpec((None, th * W, Cout), lambda n, h: (n, h, 0)),
            scratch_shapes=[pltpu.VMEM((th * W, Cout), jnp.float32)],
        ),
        compiler_params=pltpu.CompilerParams(
            dimension_semantics=("parallel", "parallel"),
            vmem_limit_bytes=vmem_limit,
        ),
    )(x_slabs, w_taps, b2)

    out_nhwc = out_flat.reshape(N, H, W, Cout)
    return jnp.transpose(out_nhwc, (0, 3, 1, 2))          # back to NCHW


def init_conv2d_params(key, in_channels, out_channels, kernel,
                       init_mode="kaiming_normal", init_weight=1.0, init_bias=0.0):
    """Deterministic parameter init matching weight_init() in the PyTorch module."""
    if init_mode != "kaiming_normal":
        raise ValueError("only kaiming_normal reproduced here")
    fan_in = in_channels * kernel * kernel
    kw, kb = jax.random.split(key)
    w = jnp.sqrt(1.0 / fan_in) * jax.random.normal(
        kw, (out_channels, in_channels, kernel, kernel), dtype=jnp.float32)
    b = jnp.sqrt(1.0 / fan_in) * jax.random.normal(kb, (out_channels,), dtype=jnp.float32)
    return w * init_weight, b * init_bias


if __name__ == "__main__":
    # TODO(synk): up/down resample branches (resample_filter conv paths) are not part of
    # the default config (up=False, down=False) and are not implemented here.
    key = jax.random.PRNGKey(0)
    k_x, k_p = jax.random.split(key)

    N, Cin, H, W = 2, 4, 16, 16
    Cout, K = 8, 3

    x = jax.random.normal(k_x, (N, Cin, H, W), dtype=jnp.float32)
    # init_bias=1.0 so the bias-add path is actually exercised by the check.
    weight, bias = init_conv2d_params(k_p, Cin, Cout, K, init_bias=1.0)

    # Reference: XLA conv with the same semantics as torch conv2d (NCHW / OIHW) + bias.
    y_ref = jax.lax.conv_general_dilated(
        x, weight, window_strides=(1, 1),
        padding=((K // 2, K // 2), (K // 2, K // 2)),
        dimension_numbers=("NCHW", "OIHW", "NCHW"),
    ) + bias.reshape(1, -1, 1, 1)
    scale = jnp.maximum(1.0, jnp.max(jnp.abs(y_ref)))

    # Default path: bf16 matmul operands, f32 accumulation (v6e/v7x MXU peak).
    y_bf16 = jax.block_until_ready(conv2d_pallas(x, weight, bias))
    assert y_bf16.shape == (N, Cout, H, W)
    assert jnp.max(jnp.abs(y_bf16 - y_ref)) / scale < 1e-1

    # f32 operand path (tighter check of the tap/shift/accumulate structure).
    y_f32 = jax.block_until_ready(
        conv2d_pallas(x, weight, bias, compute_dtype=jnp.float32))
    assert jnp.max(jnp.abs(y_f32 - y_ref)) / scale < 2e-2

    print("KERNEL_OK")
</pallas_src>

<mosaic_0001>
module attributes {stable_mosaic.version = 11 : i64} {
  func.func @k(%arg0: memref<16x18x4xbf16, #tpu.memory_space<vmem>>, %arg1: memref<16x18x4xbf16, #tpu.memory_space<vmem>>) attributes {dimension_semantics = [], scalar_prefetch = 0 : i64, scratch_operands = 0 : i64, tpu.core_type = #tpu.core_type<tc>} {
    %c0 = arith.constant 0 : index
    %c0_0 = arith.constant 0 : index
    %c0_1 = arith.constant 0 : index
    %0 = vector.load %arg0[%c0, %c0_0, %c0_1] : memref<16x18x4xbf16, #tpu.memory_space<vmem>>, vector<16x18x4xbf16>
    %c17_i32 = arith.constant 17 : i32
    %1 = tpu.dynamic_rotate %0 by %c17_i32 dim 1 : vector<16x18x4xbf16>, i32 -> vector<16x18x4xbf16>
    %c0_2 = arith.constant 0 : index
    %c0_3 = arith.constant 0 : index
    %c0_4 = arith.constant 0 : index
    %2 = vector.load %arg1[%c0_2, %c0_3, %c0_4] : memref<16x18x4xbf16, #tpu.memory_space<vmem>>, vector<16x18x4xbf16>
    tpu.vector_store %arg1[%c0_2, %c0_3, %c0_4], %1 {strides = array<i32>} : memref<16x18x4xbf16, #tpu.memory_space<vmem>>, vector<16x18x4xbf16>,
    return
  }
}

module attributes {stable_mosaic.version = 11 : i64} {
  func.func @_conv_kernel(%arg0: i32, %arg1: i32, %arg2: memref<1x1x18x18x4xbf16, #tpu.memory_space<vmem>>, %arg3: memref<9x4x8xbf16, #tpu.memory_space<vmem>>, %arg4: memref<1x8xf32, #tpu.memory_space<vmem>>, %arg5: memref<1x256x8xf32, #tpu.memory_space<vmem>>, %arg6: memref<256x8xf32, #tpu.memory_space<vmem>>) attributes {dimension_semantics = [#tpu.dimension_semantics<parallel>, #tpu.dimension_semantics<parallel>], iteration_bounds = array<i64: 2, 1>, scalar_prefetch = 0 : i64, scratch_operands = 1 : i64, tpu.core_type = #tpu.core_type<tc>, window_params = [{transform_indices = @transform_0, window_bounds = array<i64: 1, 1, 18, 18, 4>}, {pipeline_mode = #tpu.pipeline_mode<synchronous>, transform_indices = @transform_1, window_bounds = array<i64: 9, 4, 8>}, {pipeline_mode = #tpu.pipeline_mode<synchronous>, transform_indices = @transform_2, window_bounds = array<i64: 1, 8>}, {transform_indices = @transform_3, window_bounds = array<i64: 1, 256, 8>}]} {
    %c0 = arith.constant 0 : index
    %c0_0 = arith.constant 0 : index
    %0 = vector.load %arg4[%c0, %c0_0] : memref<1x8xf32, #tpu.memory_space<vmem>>, vector<1x8xf32>
    %1 = vector.shape_cast %0 : vector<1x8xf32> to vector<1x8xf32>
    %2 = vector.broadcast %1 : vector<1x8xf32> to vector<256x8xf32>
    %c0_1 = arith.constant 0 : index
    %c0_2 = arith.constant 0 : index
    %3 = vector.load %arg6[%c0_1, %c0_2] : memref<256x8xf32, #tpu.memory_space<vmem>>, vector<256x8xf32>
    tpu.vector_store %arg6[%c0_1, %c0_2], %2 {strides = array<i32>} : memref<256x8xf32, #tpu.memory_space<vmem>>, vector<256x8xf32>,
    %c0_3 = arith.constant 0 : index
    %c0_4 = arith.constant 0 : index
    %c0_5 = arith.constant 0 : index
    %c0_6 = arith.constant 0 : index
    %c0_7 = arith.constant 0 : index
    %4 = vector.load %arg2[%c0_3, %c0_4, %c0_5, %c0_6, %c0_7] : memref<1x1x18x18x4xbf16, #tpu.memory_space<vmem>>, vector<1x1x16x18x4xbf16>
    %5 = vector.shape_cast %4 : vector<1x1x16x18x4xbf16> to vector<16x18x4xbf16>
    %6 = vector.extract_strided_slice %5 {offsets = [0, 0, 0], sizes = [16, 16, 4], strides = [1, 1, 1]} : vector<16x18x4xbf16> to vector<16x16x4xbf16>
    %c0_8 = arith.constant 0 : index
    %c0_9 = arith.constant 0 : index
    %7 = vector.load %arg6[%c0_8, %c0_9] : memref<256x8xf32, #tpu.memory_space<vmem>>, vector<256x8xf32>
    %8 = vector.shape_cast %6 : vector<16x16x4xbf16> to vector<256x4xbf16>
    %c0_10 = arith.constant 0 : index
    %c0_11 = arith.constant 0 : index
    %c0_12 = arith.constant 0 : index
    %9 = vector.load %arg3[%c0_10, %c0_11, %c0_12] : memref<9x4x8xbf16, #tpu.memory_space<vmem>>, vector<1x4x8xbf16>
    %10 = vector.shape_cast %9 : vector<1x4x8xbf16> to vector<4x8xbf16>
    %cst = arith.constant dense<0.000000e+00> : vector<256x8xf32>
    %11 = tpu.matmul %8, %10, %cst {dimension_numbers = #tpu.dot_dimension_numbers<[1], [0], [0], [1], [0, 0, 1, 1], [], []>} : vector<256x4xbf16>, vector<4x8xbf16>, vector<256x8xf32> -> vector<256x8xf32>
    %12 = arith.addf %7, %11 : vector<256x8xf32>
    %c0_13 = arith.constant 0 : index
    %c0_14 = arith.constant 0 : index
    %13 = vector.load %arg6[%c0_13, %c0_14] : memref<256x8xf32, #tpu.memory_space<vmem>>, vector<256x8xf32>
    tpu.vector_store %arg6[%c0_13, %c0_14], %12 {strides = array<i32>} : memref<256x8xf32, #tpu.memory_space<vmem>>, vector<256x8xf32>,
    %14 = vector.extract_strided_slice %5 {offsets = [0, 1, 0], sizes = [16, 16, 4], strides = [1, 1, 1]} : vector<16x18x4xbf16> to vector<16x16x4xbf16>
    %c0_15 = arith.constant 0 : index
    %c0_16 = arith.constant 0 : index
    %15 = vector.load %arg6[%c0_15, %c0_16] : memref<256x8xf32, #tpu.memory_space<vmem>>, vector<256x8xf32>
    %16 = vector.shape_cast %14 : vector<16x16x4xbf16> to vector<256x4xbf16>
    %c1 = arith.constant 1 : index
    %c0_17 = arith.constant 0 : index
    %c0_18 = arith.constant 0 : index
    %17 = vector.load %arg3[%c1, %c0_17, %c0_18] : memref<9x4x8xbf16, #tpu.memory_space<vmem>>, vector<1x4x8xbf16>
    %18 = vector.shape_cast %17 : vector<1x4x8xbf16> to vector<4x8xbf16>
    %cst_19 = arith.constant dense<0.000000e+00> : vector<256x8xf32>
    %19 = tpu.matmul %16, %18, %cst_19 {dimension_numbers = #tpu.dot_dimension_numbers<[1], [0], [0], [1], [0, 0, 1, 1], [], []>} : vector<256x4xbf16>, vector<4x8xbf16>, vector<256x8xf32> -> vector<256x8xf32>
    %20 = arith.addf %15, %19 : vector<256x8xf32>
    %c0_20 = arith.constant 0 : index
    %c0_21 = arith.constant 0 : index
    %21 = vector.load %arg6[%c0_20, %c0_21] : memref<256x8xf32, #tpu.memory_space<vmem>>, vector<256x8xf32>
    tpu.vector_store %arg6[%c0_20, %c0_21], %20 {strides = array<i32>} : memref<256x8xf32, #tpu.memory_space<vmem>>, vector<256x8xf32>,
    %22 = vector.extract_strided_slice %5 {offsets = [0, 2, 0], sizes = [16, 16, 4], strides = [1, 1, 1]} : vector<16x18x4xbf16> to vector<16x16x4xbf16>
    %c0_22 = arith.constant 0 : index
    %c0_23 = arith.constant 0 : index
    %23 = vector.load %arg6[%c0_22, %c0_23] : memref<256x8xf32, #tpu.memory_space<vmem>>, vector<256x8xf32>
    %24 = vector.shape_cast %22 : vector<16x16x4xbf16> to vector<256x4xbf16>
    %c2 = arith.constant 2 : index
    %c0_24 = arith.constant 0 : index
    %c0_25 = arith.constant 0 : index
    %25 = vector.load %arg3[%c2, %c0_24, %c0_25] : memref<9x4x8xbf16, #tpu.memory_space<vmem>>, vector<1x4x8xbf16>
    %26 = vector.shape_cast %25 : vector<1x4x8xbf16> to vector<4x8xbf16>
    %cst_26 = arith.constant dense<0.000000e+00> : vector<256x8xf32>
    %27 = tpu.matmul %24, %26, %cst_26 {dimension_numbers = #tpu.dot_dimension_numbers<[1], [0], [0], [1], [0, 0, 1, 1], [], []>} : vector<256x4xbf16>, vector<4x8xbf16>, vector<256x8xf32> -> vector<256x8xf32>
    %28 = arith.addf %23, %27 : vector<256x8xf32>
    %c0_27 = arith.constant 0 : index
    %c0_28 = arith.constant 0 : index
    %29 = vector.load %arg6[%c0_27, %c0_28] : memref<256x8xf32, #tpu.memory_space<vmem>>, vector<256x8xf32>
    tpu.vector_store %arg6[%c0_27, %c0_28], %28 {strides = array<i32>} : memref<256x8xf32, #tpu.memory_space<vmem>>, vector<256x8xf32>,
    %c0_29 = arith.constant 0 : index
    %c0_30 = arith.constant 0 : index
    %c1_31 = arith.constant 1 : index
    %c0_32 = arith.constant 0 : index
    %c0_33 = arith.constant 0 : index
    %30 = vector.load %arg2[%c0_29, %c0_30, %c1_31, %c0_32, %c0_33] : memref<1x1x18x18x4xbf16, #tpu.memory_space<vmem>>, vector<1x1x16x18x4xbf16>
    %31 = vector.shape_cast %30 : vector<1x1x16x18x4xbf16> to vector<16x18x4xbf16>
    %32 = vector.extract_strided_slice %31 {offsets = [0, 0, 0], sizes = [16, 16, 4], strides = [1, 1, 1]} : vector<16x18x4xbf16> to vector<16x16x4xbf16>
    %c0_34 = arith.constant 0 : index
    %c0_35 = arith.constant 0 : index
    %33 = vector.load %arg6[%c0_34, %c0_35] : memref<256x8xf32, #tpu.memory_space<vmem>>, vector<256x8xf32>
    %34 = vector.shape_cast %32 : vector<16x16x4xbf16> to vector<256x4xbf16>
    %c3 = arith.constant 3 : index
    %c0_36 = arith.constant 0 : index
    %c0_37 = arith.constant 0 : index
    %35 = vector.load %arg3[%c3, %c0_36, %c0_37] : memref<9x4x8xbf16, #tpu.memory_space<vmem>>, vector<1x4x8xbf16>
    %36 = vector.shape_cast %35 : vector<1x4x8xbf16> to vector<4x8xbf16>
    %cst_38 = arith.constant dense<0.000000e+00> : vector<256x8xf32>
    %37 = tpu.matmul %34, %36, %cst_38 {dimension_numbers = #tpu.dot_dimension_numbers<[1], [0], [0], [1], [0, 0, 1, 1], [], []>} : vector<256x4xbf16>, vector<4x8xbf16>, vector<256x8xf32> -> vector<256x8xf32>
    %38 = arith.addf %33, %37 : vector<256x8xf32>
    %c0_39 = arith.constant 0 : index
    %c0_40 = arith.constant 0 : index
    %39 = vector.load %arg6[%c0_39, %c0_40] : memref<256x8xf32, #tpu.memory_space<vmem>>, vector<256x8xf32>
    tpu.vector_store %arg6[%c0_39, %c0_40], %38 {strides = array<i32>} : memref<256x8xf32, #tpu.memory_space<vmem>>, vector<256x8xf32>,
    %40 = vector.extract_strided_slice %31 {offsets = [0, 1, 0], sizes = [16, 16, 4], strides = [1, 1, 1]} : vector<16x18x4xbf16> to vector<16x16x4xbf16>
    %c0_41 = arith.constant 0 : index
    %c0_42 = arith.constant 0 : index
    %41 = vector.load %arg6[%c0_41, %c0_42] : memref<256x8xf32, #tpu.memory_space<vmem>>, vector<256x8xf32>
    %42 = vector.shape_cast %40 : vector<16x16x4xbf16> to vector<256x4xbf16>
    %c4 = arith.constant 4 : index
    %c0_43 = arith.constant 0 : index
    %c0_44 = arith.constant 0 : index
    %43 = vector.load %arg3[%c4, %c0_43, %c0_44] : memref<9x4x8xbf16, #tpu.memory_space<vmem>>, vector<1x4x8xbf16>
    %44 = vector.shape_cast %43 : vector<1x4x8xbf16> to vector<4x8xbf16>
    %cst_45 = arith.constant dense<0.000000e+00> : vector<256x8xf32>
    %45 = tpu.matmul %42, %44, %cst_45 {dimension_numbers = #tpu.dot_dimension_numbers<[1], [0], [0], [1], [0, 0, 1, 1], [], []>} : vector<256x4xbf16>, vector<4x8xbf16>, vector<256x8xf32> -> vector<256x8xf32>
    %46 = arith.addf %41, %45 : vector<256x8xf32>
    %c0_46 = arith.constant 0 : index
    %c0_47 = arith.constant 0 : index
    %47 = vector.load %arg6[%c0_46, %c0_47] : memref<256x8xf32, #tpu.memory_space<vmem>>, vector<256x8xf32>
    tpu.vector_store %arg6[%c0_46, %c0_47], %46 {strides = array<i32>} : memref<256x8xf32, #tpu.memory_space<vmem>>, vector<256x8xf32>,
    %48 = vector.extract_strided_slice %31 {offsets = [0, 2, 0], sizes = [16, 16, 4], strides = [1, 1, 1]} : vector<16x18x4xbf16> to vector<16x16x4xbf16>
    %c0_48 = arith.constant 0 : index
    %c0_49 = arith.constant 0 : index
    %49 = vector.load %arg6[%c0_48, %c0_49] : memref<256x8xf32, #tpu.memory_space<vmem>>, vector<256x8xf32>
    %50 = vector.shape_cast %48 : vector<16x16x4xbf16> to vector<256x4xbf16>
    %c5 = arith.constant 5 : index
    %c0_50 = arith.constant 0 : index
    %c0_51 = arith.constant 0 : index
    %51 = vector.load %arg3[%c5, %c0_50, %c0_51] : memref<9x4x8xbf16, #tpu.memory_space<vmem>>, vector<1x4x8xbf16>
    %52 = vector.shape_cast %51 : vector<1x4x8xbf16> to vector<4x8xbf16>
    %cst_52 = arith.constant dense<0.000000e+00> : vector<256x8xf32>
    %53 = tpu.matmul %50, %52, %cst_52 {dimension_numbers = #tpu.dot_dimension_numbers<[1], [0], [0], [1], [0, 0, 1, 1], [], []>} : vector<256x4xbf16>, vector<4x8xbf16>, vector<256x8xf32> -> vector<256x8xf32>
    %54 = arith.addf %49, %53 : vector<256x8xf32>
    %c0_53 = arith.constant 0 : index
    %c0_54 = arith.constant 0 : index
    %55 = vector.load %arg6[%c0_53, %c0_54] : memref<256x8xf32, #tpu.memory_space<vmem>>, vector<256x8xf32>
    tpu.vector_store %arg6[%c0_53, %c0_54], %54 {strides = array<i32>} : memref<256x8xf32, #tpu.memory_space<vmem>>, vector<256x8xf32>,
    %c0_55 = arith.constant 0 : index
    %c0_56 = arith.constant 0 : index
    %c2_57 = arith.constant 2 : index
    %c0_58 = arith.constant 0 : index
    %c0_59 = arith.constant 0 : index
    %56 = vector.load %arg2[%c0_55, %c0_56, %c2_57, %c0_58, %c0_59] : memref<1x1x18x18x4xbf16, #tpu.memory_space<vmem>>, vector<1x1x16x18x4xbf16>
    %57 = vector.shape_cast %56 : vector<1x1x16x18x4xbf16> to vector<16x18x4xbf16>
    %58 = vector.extract_strided_slice %57 {offsets = [0, 0, 0], sizes = [16, 16, 4], strides = [1, 1, 1]} : vector<16x18x4xbf16> to vector<16x16x4xbf16>
    %c0_60 = arith.constant 0 : index
    %c0_61 = arith.constant 0 : index
    %59 = vector.load %arg6[%c0_60, %c0_61] : memref<256x8xf32, #tpu.memory_space<vmem>>, vector<256x8xf32>
    %60 = vector.shape_cast %58 : vector<16x16x4xbf16> to vector<256x4xbf16>
    %c6 = arith.constant 6 : index
    %c0_62 = arith.constant 0 : index
    %c0_63 = arith.constant 0 : index
    %61 = vector.load %arg3[%c6, %c0_62, %c0_63] : memref<9x4x8xbf16, #tpu.memory_space<vmem>>, vector<1x4x8xbf16>
    %62 = vector.shape_cast %61 : vector<1x4x8xbf16> to vector<4x8xbf16>
    %cst_64 = arith.constant dense<0.000000e+00> : vector<256x8xf32>
    %63 = tpu.matmul %60, %62, %cst_64 {dimension_numbers = #tpu.dot_dimension_numbers<[1], [0], [0], [1], [0, 0, 1, 1], [], []>} : vector<256x4xbf16>, vector<4x8xbf16>, vector<256x8xf32> -> vector<256x8xf32>
    %64 = arith.addf %59, %63 : vector<256x8xf32>
    %c0_65 = arith.constant 0 : index
    %c0_66 = arith.constant 0 : index
    %65 = vector.load %arg6[%c0_65, %c0_66] : memref<256x8xf32, #tpu.memory_space<vmem>>, vector<256x8xf32>
    tpu.vector_store %arg6[%c0_65, %c0_66], %64 {strides = array<i32>} : memref<256x8xf32, #tpu.memory_space<vmem>>, vector<256x8xf32>,
    %66 = vector.extract_strided_slice %57 {offsets = [0, 1, 0], sizes = [16, 16, 4], strides = [1, 1, 1]} : vector<16x18x4xbf16> to vector<16x16x4xbf16>
    %c0_67 = arith.constant 0 : index
    %c0_68 = arith.constant 0 : index
    %67 = vector.load %arg6[%c0_67, %c0_68] : memref<256x8xf32, #tpu.memory_space<vmem>>, vector<256x8xf32>
    %68 = vector.shape_cast %66 : vector<16x16x4xbf16> to vector<256x4xbf16>
    %c7 = arith.constant 7 : index
    %c0_69 = arith.constant 0 : index
    %c0_70 = arith.constant 0 : index
    %69 = vector.load %arg3[%c7, %c0_69, %c0_70] : memref<9x4x8xbf16, #tpu.memory_space<vmem>>, vector<1x4x8xbf16>
    %70 = vector.shape_cast %69 : vector<1x4x8xbf16> to vector<4x8xbf16>
    %cst_71 = arith.constant dense<0.000000e+00> : vector<256x8xf32>
    %71 = tpu.matmul %68, %70, %cst_71 {dimension_numbers = #tpu.dot_dimension_numbers<[1], [0], [0], [1], [0, 0, 1, 1], [], []>} : vector<256x4xbf16>, vector<4x8xbf16>, vector<256x8xf32> -> vector<256x8xf32>
    %72 = arith.addf %67, %71 : vector<256x8xf32>
    %c0_72 = arith.constant 0 : index
    %c0_73 = arith.constant 0 : index
    %73 = vector.load %arg6[%c0_72, %c0_73] : memref<256x8xf32, #tpu.memory_space<vmem>>, vector<256x8xf32>
    tpu.vector_store %arg6[%c0_72, %c0_73], %72 {strides = array<i32>} : memref<256x8xf32, #tpu.memory_space<vmem>>, vector<256x8xf32>,
    %74 = vector.extract_strided_slice %57 {offsets = [0, 2, 0], sizes = [16, 16, 4], strides = [1, 1, 1]} : vector<16x18x4xbf16> to vector<16x16x4xbf16>
    %c0_74 = arith.constant 0 : index
    %c0_75 = arith.constant 0 : index
    %75 = vector.load %arg6[%c0_74, %c0_75] : memref<256x8xf32, #tpu.memory_space<vmem>>, vector<256x8xf32>
    %76 = vector.shape_cast %74 : vector<16x16x4xbf16> to vector<256x4xbf16>
    %c8 = arith.constant 8 : index
    %c0_76 = arith.constant 0 : index
    %c0_77 = arith.constant 0 : index
    %77 = vector.load %arg3[%c8, %c0_76, %c0_77] : memref<9x4x8xbf16, #tpu.memory_space<vmem>>, vector<1x4x8xbf16>
    %78 = vector.shape_cast %77 : vector<1x4x8xbf16> to vector<4x8xbf16>
    %cst_78 = arith.constant dense<0.000000e+00> : vector<256x8xf32>
    %79 = tpu.matmul %76, %78, %cst_78 {dimension_numbers = #tpu.dot_dimension_numbers<[1], [0], [0], [1], [0, 0, 1, 1], [], []>} : vector<256x4xbf16>, vector<4x8xbf16>, vector<256x8xf32> -> vector<256x8xf32>
    %80 = arith.addf %75, %79 : vector<256x8xf32>
    %c0_79 = arith.constant 0 : index
    %c0_80 = arith.constant 0 : index
    %81 = vector.load %arg6[%c0_79, %c0_80] : memref<256x8xf32, #tpu.memory_space<vmem>>, vector<256x8xf32>
    tpu.vector_store %arg6[%c0_79, %c0_80], %80 {strides = array<i32>} : memref<256x8xf32, #tpu.memory_space<vmem>>, vector<256x8xf32>,
    %c0_81 = arith.constant 0 : index
    %c0_82 = arith.constant 0 : index
    %82 = vector.load %arg6[%c0_81, %c0_82] : memref<256x8xf32, #tpu.memory_space<vmem>>, vector<256x8xf32>
    %c0_83 = arith.constant 0 : index
    %c0_84 = arith.constant 0 : index
    %c0_85 = arith.constant 0 : index
    %83 = vector.load %arg5[%c0_83, %c0_84, %c0_85] : memref<1x256x8xf32, #tpu.memory_space<vmem>>, vector<1x256x8xf32>
    %84 = vector.shape_cast %83 : vector<1x256x8xf32> to vector<256x8xf32>
    %85 = vector.shape_cast %82 : vector<256x8xf32> to vector<1x256x8xf32>
    tpu.vector_store %arg5[%c0_83, %c0_84, %c0_85], %85 {strides = array<i32>} : memref<1x256x8xf32, #tpu.memory_space<vmem>>, vector<1x256x8xf32>,
    return
  }
  func.func @transform_0(%arg0: i32, %arg1: i32) -> (i32, i32, i32, i32, i32) {
    %c0_i32 = arith.constant 0 : i32
    %c0_i32_0 = arith.constant 0 : i32
    %c0_i32_1 = arith.constant 0 : i32
    %c0_i32_2 = arith.constant 0 : i32
    return %arg0, %arg1, %c0_i32, %c0_i32_0, %c0_i32_1 : i32, i32, i32, i32, i32
  }
  func.func @transform_1(%arg0: i32, %arg1: i32) -> (i32, i32, i32) {
    %c0_i32 = arith.constant 0 : i32
    %c0_i32_0 = arith.constant 0 : i32
    %c0_i32_1 = arith.constant 0 : i32
    %c0_i32_2 = arith.constant 0 : i32
    return %c0_i32, %c0_i32_0, %c0_i32_1 : i32, i32, i32
  }
  func.func @transform_2(%arg0: i32, %arg1: i32) -> (i32, i32) {
    %c0_i32 = arith.constant 0 : i32
    %c0_i32_0 = arith.constant 0 : i32
    %c0_i32_1 = arith.constant 0 : i32
    return %c0_i32, %c0_i32_0 : i32, i32
  }
  func.func @transform_3(%arg0: i32, %arg1: i32) -> (i32, i32, i32) {
    %c0_i32 = arith.constant 0 : i32
    %c0_i32_0 = arith.constant 0 : i32
    return %arg0, %arg1, %c0_i32 : i32, i32, i32
  }
}

</mosaic_0001>

<llo_original>
// kernel: tpu_custom_call.1
$region0: #{tpu_custom_call.1}
  #allocation0 [shape = 'u32[]', space=smem, size = 0x4, offset = 0x4, fixed_abs, tag = 'smem constant byte address 0x4 - core index']
  #allocation1 [shape = 'u32[144,128]{1,0:T(1,128)}', space=vmem, size = 0x12000, scoped, tag = 'internal scratch']
  #allocation2 [shape = 'f32[256,8]{1,0:T(8,128)}', space=vmem, size = 0x20000, scoped, tag = 'scratch operand']
  %s0 = inlined_call_operand.vmem [shape: bf16[2,1,18,18,4], index: 0, kind: input, shape index: {}]
  %s1 = inlined_call_operand.vmem [shape: bf16[9,4,8], index: 1, kind: input, shape index: {}]
  %s2 = inlined_call_operand.vmem [shape: f32[1,8], index: 2, kind: input, shape index: {}]
  %s3 = inlined_call_operand.vmem [shape: f32[2,256,8], index: 3, kind: output, shape index: {}]
  %s4 = sld [smem:[#allocation0]]
  $region45: #{tpu_custom_call.1} parent=0
    _
  %s6 = ssub.s32 1, %s4
  %s7 = scalar_select 0, %s6, %s4
  loop: start=0, step=1, limit=4
  $region2: #{tpu_custom_call.1} parent=0 // loop_pre_header
    _
  $region3: #{tpu_custom_call.1} parent=0 // loop_header
    %s9 = sphi 0, %s13
    %p10 = scmp.ge.s32.totalorder %s9, 4
    %s16 = sphi 0, %s28
    %s17 = sphi 0, %s24
    %s18 = sphi 0, %s16
    %s19 = sphi 0, %s17
    %s20 = sphi 0, %s18
    %s21 = sphi 0, %s19
    %s33 = sphi 0, %s35
    %s36 = sphi 0, %s33
    %s37 = sphi 0, %s36
    %s53 = sphi 0, %s37
    %s57 = sphi 0, %s57
    %s59 = sphi 0, %s57
    %s60 = sphi 0, %s59
    %s74 = sphi 0, %s60
    %s78 = sphi 0, %s78
    %s80 = sphi 0, %s78
    %s81 = sphi 0, %s80
    %s95 = sphi 0, %s81
    %s103 = sphi 0, %s105
    %s106 = sphi 0, %s103
    %s107 = sphi 0, %s106
    %s123 = sphi 0, %s107
  $region4: #{tpu_custom_call.1} parent=0 // loop_header_branch
    %12 = sbr.rel (%p10) target = $region8
  $region5: #{tpu_custom_call.1} parent=0 // loop_body
    %s14 = ssub.s32 %s9, 1
    %s15 = ssub.s32 %s9, 2
    %s22 = sadd.s32 1, %s17
    %p23 = scmp.ge.s32.totalorder %s22, 1
    %s24 = scalar_select %p23, 0, %s22
    %s25 = sadd.s32 1, %s16
    %s26 = scalar_select %p23, %s25, %s16
    %p27 = scmp.ge.s32.totalorder %s26, 2
    %s28 = scalar_select %p27, 0, %s26
    %s29 = ssub.s32 %s16, %s28
    %s30 = ssub.s32 %s17, %s24
    %s31 = sor.u32 %s29, %s30
    %p32 = scmp.eq.s32.totalorder %s31, 0
    %s34 = sadd.s32 %s33, 1
    %s35 = scalar_select %p32, %s33, %s34
    %p38 = pneg %p32
    %p39 = scmp.eq.s32.totalorder %s9, 1
    %p40 = por %p38, %p39
    %p41 = scmp.ne.s32.totalorder %s33, %s36
    %p42 = scmp.eq.s32.totalorder %s9, 0
    %p43 = por %p41, %p42
    %p44 = scmp.ne.s32.totalorder %s33, %s36
    %p45 = scmp.eq.s32.totalorder %s14, 1
    %p46 = por %p44, %p45
    %p47 = scmp.ne.s32.totalorder %s36, %s37
    %p48 = scmp.eq.s32.totalorder %s14, 0
    %p49 = por %p47, %p48
    %p50 = scmp.ne.s32.totalorder %s36, %s37
    %p51 = scmp.eq.s32.totalorder %s15, 1
    %p52 = por %p50, %p51
    %p54 = scmp.ne.s32.totalorder %s37, %s53
    %p55 = scmp.eq.s32.totalorder %s15, 0
    %p56 = por %p54, %p55
    %s58 = sadd.s32 %s57, 1
    %p61 = scmp.eq.s32.totalorder %s9, 1
    %p62 = scmp.ne.s32.totalorder %s57, %s59
    %p63 = scmp.eq.s32.totalorder %s9, 0
    %p64 = por %p62, %p63
    %p65 = scmp.ne.s32.totalorder %s57, %s59
    %p66 = scmp.eq.s32.totalorder %s14, 1
    %p67 = por %p65, %p66
    %p68 = scmp.ne.s32.totalorder %s59, %s60
    %p69 = scmp.eq.s32.totalorder %s14, 0
    %p70 = por %p68, %p69
    %p71 = scmp.ne.s32.totalorder %s59, %s60
    %p72 = scmp.eq.s32.totalorder %s15, 1
    %p73 = por %p71, %p72
    %p75 = scmp.ne.s32.totalorder %s60, %s74
    %p76 = scmp.eq.s32.totalorder %s15, 0
    %p77 = por %p75, %p76
    %s79 = sadd.s32 %s78, 1
    %p82 = scmp.eq.s32.totalorder %s9, 1
    %p83 = scmp.ne.s32.totalorder %s78, %s80
    %p84 = scmp.eq.s32.totalorder %s9, 0
    %p85 = por %p83, %p84
    %p86 = scmp.ne.s32.totalorder %s78, %s80
    %p87 = scmp.eq.s32.totalorder %s14, 1
    %p88 = por %p86, %p87
    %p89 = scmp.ne.s32.totalorder %s80, %s81
    %p90 = scmp.eq.s32.totalorder %s14, 0
    %p91 = por %p89, %p90
    %p92 = scmp.ne.s32.totalorder %s80, %s81
    %p93 = scmp.eq.s32.totalorder %s15, 1
    %p94 = por %p92, %p93
    %p96 = scmp.ne.s32.totalorder %s81, %s95
    %p97 = scmp.eq.s32.totalorder %s15, 0
    %p98 = por %p96, %p97
    %s99 = ssub.s32 %s16, %s28
    %s100 = ssub.s32 %s17, %s24
    %s101 = sor.u32 %s99, %s100
    %p102 = scmp.eq.s32.totalorder %s101, 0
    %s104 = sadd.s32 %s103, 1
    %s105 = scalar_select %p102, %s103, %s104
    %p108 = pneg %p102
    %p109 = scmp.eq.s32.totalorder %s9, 1
    %p110 = por %p108, %p109
    %p111 = scmp.ne.s32.totalorder %s103, %s106
    %p112 = scmp.eq.s32.totalorder %s9, 0
    %p113 = por %p111, %p112
    %p114 = scmp.ne.s32.totalorder %s103, %s106
    %p115 = scmp.eq.s32.totalorder %s14, 1
    %p116 = por %p114, %p115
    %p117 = scmp.ne.s32.totalorder %s106, %s107
    %p118 = scmp.eq.s32.totalorder %s14, 0
    %p119 = por %p117, %p118
    %p120 = scmp.ne.s32.totalorder %s106, %s107
    %p121 = scmp.eq.s32.totalorder %s15, 1
    %p122 = por %p120, %p121
    %p124 = scmp.ne.s32.totalorder %s107, %s123
    %p125 = scmp.eq.s32.totalorder %s15, 0
    %p126 = por %p124, %p125
    %p127 = scmp.le.s32.totalorder 1, %s9
    %p128 = scmp.lt.s32.totalorder %s9, 3
    %p129 = pnand %p127, %p128
    %p130 = pneg %p129
    // Predicated region
    $region9: #{tpu_custom_call.1} parent=5 // pred_check
      _
    $region10: #{tpu_custom_call.1} parent=5 // pred_check_branch
      %132 = sbr.rel (%p129) target = $region12
    $region11: #{tpu_custom_call.1} parent=5 // pred_region
      %s133 = ssub.s32 %s9, 1
      // Predicated region
      $region13: #{tpu_custom_call.1} parent=11 // pred_check
        %p134 = pneg %p70
      $region14: #{tpu_custom_call.1} parent=11 // pred_check_branch
        %136 = sbr.rel (%p134) target = $region16
      $region15: #{tpu_custom_call.1} parent=11 // pred_region
        _
      $region16: #{tpu_custom_call.1} parent=11 // pred_fallthru
        _
      // Predicated region
      $region17: #{tpu_custom_call.1} parent=11 // pred_check
        %p137 = pneg %p91
      $region18: #{tpu_custom_call.1} parent=11 // pred_check_branch
        %139 = sbr.rel (%p137) target = $region20
      $region19: #{tpu_custom_call.1} parent=11 // pred_region
        _
      $region20: #{tpu_custom_call.1} parent=11 // pred_fallthru
        _
    $region12: #{tpu_custom_call.1} parent=5 // pred_fallthru
      _
    %p140 = scmp.lt.s32.totalorder %s9, 2
    // Predicated region
    $region21: #{tpu_custom_call.1} parent=5 // pred_check
      %p141 = pneg %p140
    $region22: #{tpu_custom_call.1} parent=5 // pred_check_branch
      %143 = sbr.rel (%p141) target = $region24
    $region23: #{tpu_custom_call.1} parent=5 // pred_region
      // Predicated region
      $region25: #{tpu_custom_call.1} parent=23 // pred_check
        %p144 = pneg %p43
      $region26: #{tpu_custom_call.1} parent=23 // pred_check_branch
        %146 = sbr.rel (%p144) target = $region28
      $region27: #{tpu_custom_call.1} parent=23 // pred_region
        %p147 = scmp.lt.s32.totalorder %s16, 1
        %s148 = scalar_select %p147, %s16, 1
        %p149 = scmp.lt.s32.totalorder %s17, 0
        %s150 = scalar_select %p149, %s17, 0
        %s151 = smul.addr %s150, 54
        %s152 = smul.addr %s148, 54
        %s153 = sadd.s32 %s151, %s152
        %s154 = smul.addr %s153, 4
        %s155 = scalar_lea.vmem %s0, %s154
      $region28: #{tpu_custom_call.1} parent=23 // pred_fallthru
        _
    $region24: #{tpu_custom_call.1} parent=5 // pred_fallthru
      _
    %p156 = scmp.le.s32.totalorder 1, %s9
    %p157 = scmp.lt.s32.totalorder %s9, 3
    %p158 = pnand %p156, %p157
    %p159 = pneg %p158
    // Predicated region
    $region29: #{tpu_custom_call.1} parent=5 // pred_check
      _
    $region30: #{tpu_custom_call.1} parent=5 // pred_check_branch
      %161 = sbr.rel (%p158) target = $region32
    $region31: #{tpu_custom_call.1} parent=5 // pred_region
      %s162 = ssub.s32 %s9, 1
      %p163 = scmp.lt.s32.totalorder %s18, 1
      %s164 = scalar_select %p163, %s18, 1
      %p165 = scmp.lt.s32.totalorder %s19, 0
      %s166 = scalar_select %p165, %s19, 0
      %s167 = smul.addr %s166, 54
      %s168 = smul.addr %s164, 54
      %s169 = sadd.s32 %s167, %s168
      %s170 = smul.addr %s169, 4
      %s171 = scalar_lea.vmem %s0, %s170
      %p172 = pneg %p49
      %p173 = pneg %p46
      %p174 = pneg %p70
      %p175 = pneg %p67
      %p176 = pneg %p91
      %p177 = pneg %p88
      %p178 = pneg %p119
      %p179 = pneg %p116
      %s180 = smul.u32 32, %s19
      %p181 = scmp.lt.s32.totalorder %s18, 1
      %s182 = scalar_select %p181, %s18, 1
      %p183 = scmp.lt.s32.totalorder %s180, 31
      %s184 = scalar_select %p183, %s180, 31
      %s185 = smul.addr %s182, 32
      %s186 = sadd.s32 %s184, %s185
      %s187 = smul.addr %s186, 8
      %s188 = scalar_lea.vmem %s3, %s187
      %p189 = scmp.lt.s32.totalorder %s18, 1
      %s190 = scalar_select %p189, %s18, 1
      %p191 = scmp.lt.s32.totalorder %s19, 0
      %s192 = scalar_select %p191, %s19, 0
      %s193 = smul.addr %s192, 54
      %s194 = smul.addr %s190, 54
      %s195 = sadd.s32 %s193, %s194
      %s196 = smul.addr %s195, 4
      %s197 = scalar_lea.vmem %s0, %s196
      %s198 = smul.u32 32, %s19
      %p199 = scmp.lt.s32.totalorder %s18, 1
      %s200 = scalar_select %p199, %s18, 1
      %p201 = scmp.lt.s32.totalorder %s198, 31
      %s202 = scalar_select %p201, %s198, 31
      %s203 = smul.addr %s200, 32
      %s204 = sadd.s32 %s202, %s203
      %s205 = smul.addr %s204, 8
      %s206 = scalar_lea.vmem %s3, %s205
      %s207 = smul.u32 32, %s19
      %v209 = vld [vmem:[%s2] sm:$0x1]
      %v211 = vlaneseq
      %v212 = vshrl.u32 %v211, 7
      %v213 = vsub.s32 0, %v212
      %v214 = vrot.slane %v209, %v213
      %vm216 = vcmask 64512
      %217 = vst.msk [vmem:[#allocation2] sm:$0xff] %vm216, %v214
      %218 = vst.msk [vmem:[#allocation2 + $0x8] sm:$0xff] %vm216, %v214
      %219 = vst.msk [vmem:[#allocation2 + $0x10] sm:$0xff] %vm216, %v214
      %220 = vst.msk [vmem:[#allocation2 + $0x18] sm:$0xff] %vm216, %v214
      %221 = vst.msk [vmem:[#allocation2 + $0x20] sm:$0xff] %vm216, %v214
      %222 = vst.msk [vmem:[#allocation2 + $0x28] sm:$0xff] %vm216, %v214
      %223 = vst.msk [vmem:[#allocation2 + $0x30] sm:$0xff] %vm216, %v214
      %224 = vst.msk [vmem:[#allocation2 + $0x38] sm:$0xff] %vm216, %v214
      %225 = vst.msk [vmem:[#allocation2 + $0x40] sm:$0xff] %vm216, %v214
      %226 = vst.msk [vmem:[#allocation2 + $0x48] sm:$0xff] %vm216, %v214
      %227 = vst.msk [vmem:[#allocation2 + $0x50] sm:$0xff] %vm216, %v214
      %228 = vst.msk [vmem:[#allocation2 + $0x58] sm:$0xff] %vm216, %v214
      %229 = vst.msk [vmem:[#allocation2 + $0x60] sm:$0xff] %vm216, %v214
      %230 = vst.msk [vmem:[#allocation2 + $0x68] sm:$0xff] %vm216, %v214
      %231 = vst.msk [vmem:[#allocation2 + $0x70] sm:$0xff] %vm216, %v214
      %232 = vst.msk [vmem:[#allocation2 + $0x78] sm:$0xff] %vm216, %v214
      %233 = vst.msk [vmem:[#allocation2 + $0x80] sm:$0xff] %vm216, %v214
      %234 = vst.msk [vmem:[#allocation2 + $0x88] sm:$0xff] %vm216, %v214
      %235 = vst.msk [vmem:[#allocation2 + $0x90] sm:$0xff] %vm216, %v214
      %236 = vst.msk [vmem:[#allocation2 + $0x98] sm:$0xff] %vm216, %v214
      %237 = vst.msk [vmem:[#allocation2 + $0xa0] sm:$0xff] %vm216, %v214
      %238 = vst.msk [vmem:[#allocation2 + $0xa8] sm:$0xff] %vm216, %v214
      %239 = vst.msk [vmem:[#allocation2 + $0xb0] sm:$0xff] %vm216, %v214
      %240 = vst.msk [vmem:[#allocation2 + $0xb8] sm:$0xff] %vm216, %v214
      %241 = vst.msk [vmem:[#allocation2 + $0xc0] sm:$0xff] %vm216, %v214
      %242 = vst.msk [vmem:[#allocation2 + $0xc8] sm:$0xff] %vm216, %v214
      %243 = vst.msk [vmem:[#allocation2 + $0xd0] sm:$0xff] %vm216, %v214
      %244 = vst.msk [vmem:[#allocation2 + $0xd8] sm:$0xff] %vm216, %v214
      %245 = vst.msk [vmem:[#allocation2 + $0xe0] sm:$0xff] %vm216, %v214
      %246 = vst.msk [vmem:[#allocation2 + $0xe8] sm:$0xff] %vm216, %v214
      %247 = vst.msk [vmem:[#allocation2 + $0xf0] sm:$0xff] %vm216, %v214
      %248 = vst.msk [vmem:[#allocation2 + $0xf8] sm:$0xff] %vm216, %v214
      %v249 = vld [vmem:[%s197] sm:$0xf]
      %v250 = vld [vmem:[%s197 + $0x4] sm:$0xf]
      %v251 = vld [vmem:[%s197 + $0x8] sm:$0x1]
      %v252 = vld [vmem:[%s197 + $0xc] sm:$0xf]
      %v253 = vld [vmem:[%s197 + $0x10] sm:$0xf]
      %v254 = vld [vmem:[%s197 + $0x14] sm:$0x1]
      %v255 = vld [vmem:[%s197 + $0x18] sm:$0xf]
      %v256 = vld [vmem:[%s197 + $0x1c] sm:$0xf]
      %v257 = vld [vmem:[%s197 + $0x20] sm:$0x1]
      %v258 = vld [vmem:[%s197 + $0x24] sm:$0xf]
      %v259 = vld [vmem:[%s197 + $0x28] sm:$0xf]
      %v260 = vld [vmem:[%s197 + $0x2c] sm:$0x1]
      %v261 = vld [vmem:[%s197 + $0x30] sm:$0xf]
      %v262 = vld [vmem:[%s197 + $0x34] sm:$0xf]
      %v263 = vld [vmem:[%s197 + $0x38] sm:$0x1]
      %v264 = vld [vmem:[%s197 + $0x3c] sm:$0xf]
      %v265 = vld [vmem:[%s197 + $0x40] sm:$0xf]
      %v266 = vld [vmem:[%s197 + $0x44] sm:$0x1]
      %v267 = vld [vmem:[%s197 + $0x48] sm:$0xf]
      %v268 = vld [vmem:[%s197 + $0x4c] sm:$0xf]
      %v269 = vld [vmem:[%s197 + $0x50] sm:$0x1]
      %v270 = vld [vmem:[%s197 + $0x54] sm:$0xf]
      %v271 = vld [vmem:[%s197 + $0x58] sm:$0xf]
      %v272 = vld [vmem:[%s197 + $0x5c] sm:$0x1]
      %v273 = vld [vmem:[%s197 + $0x60] sm:$0xf]
      %v274 = vld [vmem:[%s197 + $0x64] sm:$0xf]
      %v275 = vld [vmem:[%s197 + $0x68] sm:$0x1]
      %v276 = vld [vmem:[%s197 + $0x6c] sm:$0xf]
      %v277 = vld [vmem:[%s197 + $0x70] sm:$0xf]
      %v278 = vld [vmem:[%s197 + $0x74] sm:$0x1]
      %v279 = vld [vmem:[%s197 + $0x78] sm:$0xf]
      %v280 = vld [vmem:[%s197 + $0x7c] sm:$0xf]
      %v281 = vld [vmem:[%s197 + $0x80] sm:$0x1]
      %v282 = vld [vmem:[%s197 + $0x84] sm:$0xf]
      %v283 = vld [vmem:[%s197 + $0x88] sm:$0xf]
      %v284 = vld [vmem:[%s197 + $0x8c] sm:$0x1]
      %v285 = vld [vmem:[%s197 + $0x90] sm:$0xf]
      %v286 = vld [vmem:[%s197 + $0x94] sm:$0xf]
      %v287 = vld [vmem:[%s197 + $0x98] sm:$0x1]
      %v288 = vld [vmem:[%s197 + $0x9c] sm:$0xf]
      %v289 = vld [vmem:[%s197 + $0xa0] sm:$0xf]
      %v290 = vld [vmem:[%s197 + $0xa4] sm:$0x1]
      %v291 = vld [vmem:[%s197 + $0xa8] sm:$0xf]
      %v292 = vld [vmem:[%s197 + $0xac] sm:$0xf]
      %v293 = vld [vmem:[%s197 + $0xb0] sm:$0x1]
      %v294 = vld [vmem:[%s197 + $0xb4] sm:$0xf]
      %v295 = vld [vmem:[%s197 + $0xb8] sm:$0xf]
      %v296 = vld [vmem:[%s197 + $0xbc] sm:$0x1]
      %v297 = vld [vmem:[#allocation2] sm:$0xff]
      %v298 = vld [vmem:[#allocation2 + $0x8] sm:$0xff]
      %v299 = vld [vmem:[#allocation2 + $0x10] sm:$0xff]
      %v300 = vld [vmem:[#allocation2 + $0x18] sm:$0xff]
      %v301 = vld [vmem:[#allocation2 + $0x20] sm:$0xff]
      %v302 = vld [vmem:[#allocation2 + $0x28] sm:$0xff]
      %v303 = vld [vmem:[#allocation2 + $0x30] sm:$0xff]
      %v304 = vld [vmem:[#allocation2 + $0x38] sm:$0xff]
      %v305 = vld [vmem:[#allocation2 + $0x40] sm:$0xff]
      %v306 = vld [vmem:[#allocation2 + $0x48] sm:$0xff]
      %v307 = vld [vmem:[#allocation2 + $0x50] sm:$0xff]
      %v308 = vld [vmem:[#allocation2 + $0x58] sm:$0xff]
      %v309 = vld [vmem:[#allocation2 + $0x60] sm:$0xff]
      %v310 = vld [vmem:[#allocation2 + $0x68] sm:$0xff]
      %v311 = vld [vmem:[#allocation2 + $0x70] sm:$0xff]
      %v312 = vld [vmem:[#allocation2 + $0x78] sm:$0xff]
      %v313 = vld [vmem:[#allocation2 + $0x80] sm:$0xff]
      %v314 = vld [vmem:[#allocation2 + $0x88] sm:$0xff]
      %v315 = vld [vmem:[#allocation2 + $0x90] sm:$0xff]
      %v316 = vld [vmem:[#allocation2 + $0x98] sm:$0xff]
      %v317 = vld [vmem:[#allocation2 + $0xa0] sm:$0xff]
      %v318 = vld [vmem:[#allocation2 + $0xa8] sm:$0xff]
      %v319 = vld [vmem:[#allocation2 + $0xb0] sm:$0xff]
      %v320 = vld [vmem:[#allocation2 + $0xb8] sm:$0xff]
      %v321 = vld [vmem:[#allocation2 + $0xc0] sm:$0xff]
      %v322 = vld [vmem:[#allocation2 + $0xc8] sm:$0xff]
      %v323 = vld [vmem:[#allocation2 + $0xd0] sm:$0xff]
      %v324 = vld [vmem:[#allocation2 + $0xd8] sm:$0xff]
      %v325 = vld [vmem:[#allocation2 + $0xe0] sm:$0xff]
      %v326 = vld [vmem:[#allocation2 + $0xe8] sm:$0xff]
      %v327 = vld [vmem:[#allocation2 + $0xf0] sm:$0xff]
      %v328 = vld [vmem:[#allocation2 + $0xf8] sm:$0xff]
      %v329 = vld [vmem:[%s1] sm:$0x3]
      %v362 = vunpack.c.l.b16 %v249
      %v363 = vunpack.c.l.b16 %v250
      %v364 = vunpack.c.l.b16 %v252
      %v365 = vunpack.c.l.b16 %v253
      %v366 = vunpack.c.l.b16 %v255
      %v367 = vunpack.c.l.b16 %v256
      %v368 = vunpack.c.l.b16 %v258
      %v369 = vunpack.c.l.b16 %v259
      %v370 = vunpack.c.l.b16 %v261
      %v371 = vunpack.c.l.b16 %v262
      %v372 = vunpack.c.l.b16 %v264
      %v373 = vunpack.c.l.b16 %v265
      %v374 = vunpack.c.l.b16 %v267
      %v375 = vunpack.c.l.b16 %v268
      %v376 = vunpack.c.l.b16 %v270
      %v377 = vunpack.c.l.b16 %v271
      %v378 = vunpack.c.l.b16 %v273
      %v379 = vunpack.c.l.b16 %v274
      %v380 = vunpack.c.l.b16 %v276
      %v381 = vunpack.c.l.b16 %v277
      %v382 = vunpack.c.l.b16 %v279
      %v383 = vunpack.c.l.b16 %v280
      %v384 = vunpack.c.l.b16 %v282
      %v385 = vunpack.c.l.b16 %v283
      %v386 = vunpack.c.l.b16 %v285
      %v387 = vunpack.c.l.b16 %v286
      %v388 = vunpack.c.l.b16 %v288
      %v389 = vunpack.c.l.b16 %v289
      %v390 = vunpack.c.l.b16 %v291
      %v391 = vunpack.c.l.b16 %v292
      %v392 = vunpack.c.l.b16 %v294
      %v393 = vunpack.c.l.b16 %v295
      %v394 = vpack.c.b16 %v363, %v362
      %v395 = vpack.c.b16 %v365, %v364
      %v396 = vpack.c.b16 %v367, %v366
      %v397 = vpack.c.b16 %v369, %v368
      %v398 = vpack.c.b16 %v371, %v370
      %v399 = vpack.c.b16 %v373, %v372
      %v400 = vpack.c.b16 %v375, %v374
      %v401 = vpack.c.b16 %v377, %v376
      %v402 = vpack.c.b16 %v379, %v378
      %v403 = vpack.c.b16 %v381, %v380
      %v404 = vpack.c.b16 %v383, %v382
      %v405 = vpack.c.b16 %v385, %v384
      %v406 = vpack.c.b16 %v387, %v386
      %v407 = vpack.c.b16 %v389, %v388
      %v408 = vpack.c.b16 %v391, %v390
      %v409 = vpack.c.b16 %v393, %v392
      %vm410 = vcmask 31744
      %v412 = vsel %vm410, %v394, 0
      %v415 = vsel %vm410, %v395, 0
      %v418 = vsel %vm410, %v396, 0
      %v421 = vsel %vm410, %v397, 0
      %v424 = vsel %vm410, %v398, 0
      %v427 = vsel %vm410, %v399, 0
      %v430 = vsel %vm410, %v400, 0
      %v433 = vsel %vm410, %v401, 0
      %v436 = vsel %vm410, %v402, 0
      %v439 = vsel %vm410, %v403, 0
      %v442 = vsel %vm410, %v404, 0
      %v445 = vsel %vm410, %v405, 0
      %v448 = vsel %vm410, %v406, 0
      %v451 = vsel %vm410, %v407, 0
      %v454 = vsel %vm410, %v408, 0
      %v457 = vsel %vm410, %v409, 0
      %vm459 = vcmask 1041408
      %v461 = vsel %vm459, %v329, 0
      %463 = vmatprep.subr.bf16.mxu0 0
      %464 = vmatpush1.bf16.msra.mxu0 %v461
      %465 = vmatprep.subr.bf16.mxu0 0
      %466 = vmatpush1.bf16.msra.mxu0 0
      %467 = vmatprep.subr.bf16.mxu0 0
      %468 = vmatpush1.bf16.msra.mxu0 0
      %469 = vmatprep.subr.bf16.mxu0 0
      %470 = vmatpush1.bf16.msra.mxu0 0
      %471 = vmatprep.subr.bf16.mxu0 0
      %472 = vmatpush1.bf16.msra.mxu0 0
      %473 = vmatprep.subr.bf16.mxu0 0
      %474 = vmatpush1.bf16.msra.mxu0 0
      %475 = vmatprep.subr.bf16.mxu0 0
      %476 = vmatpush1.bf16.msra.mxu0 0
      %477 = vmatprep.subr.bf16.mxu0 0
      %478 = vmatpush1.bf16.msra.mxu0 0
      %479 = vmatprep.subr.bf16.mxu0 0
      %480 = vmatpush1.bf16.msra.mxu0 0
      %481 = vmatprep.subr.bf16.mxu0 0
      %482 = vmatpush1.bf16.msra.mxu0 0
      %483 = vmatprep.subr.bf16.mxu0 0
      %484 = vmatpush1.bf16.msra.mxu0 0
      %485 = vmatprep.subr.bf16.mxu0 0
      %486 = vmatpush1.bf16.msra.mxu0 0
      %487 = vmatprep.subr.bf16.mxu0 0
      %488 = vmatpush1.bf16.msra.mxu0 0
      %489 = vmatprep.subr.bf16.mxu0 0
      %490 = vmatpush1.bf16.msra.mxu0 0
      %491 = vmatprep.subr.bf16.mxu0 0
      %492 = vmatpush1.bf16.msra.mxu0 0
      %493 = vmatprep.subr.bf16.mxu0 0
      %494 = vmatpush1.bf16.msra.mxu0 0
      %495 = vmatprep.mubr.bf16.mxu0 0
      %496 = vmatmul.mubr.bf16.gmra.mrb[0].mxu0 %v412
      %v497 = vpop.f32.mrb[0].mxu0
      %v498 = vadd.f32 0.0, %v497
      %v499 = vpop.f32.mrb[0].mxu0
      %v500 = vpop.f32.mrb[0].mxu0
      %v501 = vadd.f32 0.0, %v500
      %v502 = vpop.f32.mrb[0].mxu0
      %503 = vmatprep.mubr.bf16.mxu0 0
      %504 = vmatmul.mubr.bf16.gmra.mrb[0].mxu0 %v415
      %v505 = vpop.f32.mrb[0].mxu0
      %v506 = vadd.f32 0.0, %v505
      %v507 = vpop.f32.mrb[0].mxu0
      %v508 = vpop.f32.mrb[0].mxu0
      %v509 = vadd.f32 0.0, %v508
      %v510 = vpop.f32.mrb[0].mxu0
      %511 = vmatprep.mubr.bf16.mxu0 0
      %512 = vmatmul.mubr.bf16.gmra.mrb[0].mxu0 %v418
      %v513 = vpop.f32.mrb[0].mxu0
      %v514 = vadd.f32 0.0, %v513
      %v515 = vpop.f32.mrb[0].mxu0
      %v516 = vpop.f32.mrb[0].mxu0
      %v517 = vadd.f32 0.0, %v516
      %v518 = vpop.f32.mrb[0].mxu0
      %519 = vmatprep.mubr.bf16.mxu0 0
      %520 = vmatmul.mubr.bf16.gmra.mrb[0].mxu0 %v421
      %v521 = vpop.f32.mrb[0].mxu0
      %v522 = vadd.f32 0.0, %v521
      %v523 = vpop.f32.mrb[0].mxu0
      %v524 = vpop.f32.mrb[0].mxu0
      %v525 = vadd.f32 0.0, %v524
      %v526 = vpop.f32.mrb[0].mxu0
      %527 = vmatprep.mubr.bf16.mxu0 0
      %528 = vmatmul.mubr.bf16.gmra.mrb[0].mxu0 %v424
      %v529 = vpop.f32.mrb[0].mxu0
      %v530 = vadd.f32 0.0, %v529
      %v531 = vpop.f32.mrb[0].mxu0
      %v532 = vpop.f32.mrb[0].mxu0
      %v533 = vadd.f32 0.0, %v532
      %v534 = vpop.f32.mrb[0].mxu0
      %535 = vmatprep.mubr.bf16.mxu0 0
      %536 = vmatmul.mubr.bf16.gmra.mrb[0].mxu0 %v427
      %v537 = vpop.f32.mrb[0].mxu0
      %v538 = vadd.f32 0.0, %v537
      %v539 = vpop.f32.mrb[0].mxu0
      %v540 = vpop.f32.mrb[0].mxu0
      %v541 = vadd.f32 0.0, %v540
      %v542 = vpop.f32.mrb[0].mxu0
      %543 = vmatprep.mubr.bf16.mxu0 0
      %544 = vmatmul.mubr.bf16.gmra.mrb[0].mxu0 %v430
      %v545 = vpop.f32.mrb[0].mxu0
      %v546 = vadd.f32 0.0, %v545
      %v547 = vpop.f32.mrb[0].mxu0
      %v548 = vpop.f32.mrb[0].mxu0
      %v549 = vadd.f32 0.0, %v548
      %v550 = vpop.f32.mrb[0].mxu0
      %551 = vmatprep.mubr.bf16.mxu0 0
      %552 = vmatmul.mubr.bf16.gmra.mrb[0].mxu0 %v433
      %v553 = vpop.f32.mrb[0].mxu0
      %v554 = vadd.f32 0.0, %v553
      %v555 = vpop.f32.mrb[0].mxu0
      %v556 = vpop.f32.mrb[0].mxu0
      %v557 = vadd.f32 0.0, %v556
      %v558 = vpop.f32.mrb[0].mxu0
      %559 = vmatprep.mubr.bf16.mxu0 0
      %560 = vmatmul.mubr.bf16.gmra.mrb[0].mxu0 %v436
      %v561 = vpop.f32.mrb[0].mxu0
      %v562 = vadd.f32 0.0, %v561
      %v563 = vpop.f32.mrb[0].mxu0
      %v564 = vpop.f32.mrb[0].mxu0
      %v565 = vadd.f32 0.0, %v564
      %v566 = vpop.f32.mrb[0].mxu0
      %567 = vmatprep.mubr.bf16.mxu0 0
      %568 = vmatmul.mubr.bf16.gmra.mrb[0].mxu0 %v439
      %v569 = vpop.f32.mrb[0].mxu0
      %v570 = vadd.f32 0.0, %v569
      %v571 = vpop.f32.mrb[0].mxu0
      %v572 = vpop.f32.mrb[0].mxu0
      %v573 = vadd.f32 0.0, %v572
      %v574 = vpop.f32.mrb[0].mxu0
      %575 = vmatprep.mubr.bf16.mxu0 0
      %576 = vmatmul.mubr.bf16.gmra.mrb[0].mxu0 %v442
      %v577 = vpop.f32.mrb[0].mxu0
      %v578 = vadd.f32 0.0, %v577
      %v579 = vpop.f32.mrb[0].mxu0
      %v580 = vpop.f32.mrb[0].mxu0
      %v581 = vadd.f32 0.0, %v580
      %v582 = vpop.f32.mrb[0].mxu0
      %583 = vmatprep.mubr.bf16.mxu0 0
      %584 = vmatmul.mubr.bf16.gmra.mrb[0].mxu0 %v445
      %v585 = vpop.f32.mrb[0].mxu0
      %v586 = vadd.f32 0.0, %v585
      %v587 = vpop.f32.mrb[0].mxu0
      %v588 = vpop.f32.mrb[0].mxu0
      %v589 = vadd.f32 0.0, %v588
      %v590 = vpop.f32.mrb[0].mxu0
      %591 = vmatprep.mubr.bf16.mxu0 0
      %592 = vmatmul.mubr.bf16.gmra.mrb[0].mxu0 %v448
      %v593 = vpop.f32.mrb[0].mxu0
      %v594 = vadd.f32 0.0, %v593
      %v595 = vpop.f32.mrb[0].mxu0
      %v596 = vpop.f32.mrb[0].mxu0
      %v597 = vadd.f32 0.0, %v596
      %v598 = vpop.f32.mrb[0].mxu0
      %599 = vmatprep.mubr.bf16.mxu0 0
      %600 = vmatmul.mubr.bf16.gmra.mrb[0].mxu0 %v451
      %v601 = vpop.f32.mrb[0].mxu0
      %v602 = vadd.f32 0.0, %v601
      %v603 = vpop.f32.mrb[0].mxu0
      %v604 = vpop.f32.mrb[0].mxu0
      %v605 = vadd.f32 0.0, %v604
      %v606 = vpop.f32.mrb[0].mxu0
      %607 = vmatprep.mubr.bf16.mxu0 0
      %608 = vmatmul.mubr.bf16.gmra.mrb[0].mxu0 %v454
      %v609 = vpop.f32.mrb[0].mxu0
      %v610 = vadd.f32 0.0, %v609
      %v611 = vpop.f32.mrb[0].mxu0
      %v612 = vpop.f32.mrb[0].mxu0
      %v613 = vadd.f32 0.0, %v612
      %v614 = vpop.f32.mrb[0].mxu0
      %615 = vmatprep.mubr.bf16.mxu0 0
      %616 = vmatmul.mubr.bf16.gmra.mrb[0].mxu0 %v457
      %v617 = vpop.f32.mrb[0].mxu0
      %v618 = vadd.f32 0.0, %v617
      %v619 = vpop.f32.mrb[0].mxu0
      %v620 = vpop.f32.mrb[0].mxu0
      %v621 = vadd.f32 0.0, %v620
      %v622 = vpop.f32.mrb[0].mxu0
      %623 = vdwg.mxu0
      %v624 = vadd.f32 %v297, %v498
      %v625 = vadd.f32 %v298, %v501
      %v626 = vadd.f32 %v299, %v506
      %v627 = vadd.f32 %v300, %v509
      %v628 = vadd.f32 %v301, %v514
      %v629 = vadd.f32 %v302, %v517
      %v630 = vadd.f32 %v303, %v522
      %v631 = vadd.f32 %v304, %v525
      %v632 = vadd.f32 %v305, %v530
      %v633 = vadd.f32 %v306, %v533
      %v634 = vadd.f32 %v307, %v538
      %v635 = vadd.f32 %v308, %v541
      %v636 = vadd.f32 %v309, %v546
      %v637 = vadd.f32 %v310, %v549
      %v638 = vadd.f32 %v311, %v554
      %v639 = vadd.f32 %v312, %v557
      %v640 = vadd.f32 %v313, %v562
      %v641 = vadd.f32 %v314, %v565
      %v642 = vadd.f32 %v315, %v570
      %v643 = vadd.f32 %v316, %v573
      %v644 = vadd.f32 %v317, %v578
      %v645 = vadd.f32 %v318, %v581
      %v646 = vadd.f32 %v319, %v586
      %v647 = vadd.f32 %v320, %v589
      %v648 = vadd.f32 %v321, %v594
      %v649 = vadd.f32 %v322, %v597
      %v650 = vadd.f32 %v323, %v602
      %v651 = vadd.f32 %v324, %v605
      %v652 = vadd.f32 %v325, %v610
      %v653 = vadd.f32 %v326, %v613
      %v654 = vadd.f32 %v327, %v618
      %v655 = vadd.f32 %v328, %v621
      %656 = vst.msk [vmem:[#allocation2] sm:$0xff] %vm216, %v624
      %657 = vst.msk [vmem:[#allocation2 + $0x8] sm:$0xff] %vm216, %v625
      %658 = vst.msk [vmem:[#allocation2 + $0x10] sm:$0xff] %vm216, %v626
      %659 = vst.msk [vmem:[#allocation2 + $0x18] sm:$0xff] %vm216, %v627
      %660 = vst.msk [vmem:[#allocation2 + $0x20] sm:$0xff] %vm216, %v628
      %661 = vst.msk [vmem:[#allocation2 + $0x28] sm:$0xff] %vm216, %v629
      %662 = vst.msk [vmem:[#allocation2 + $0x30] sm:$0xff] %vm216, %v630
      %663 = vst.msk [vmem:[#allocation2 + $0x38] sm:$0xff] %vm216, %v631
      %664 = vst.msk [vmem:[#allocation2 + $0x40] sm:$0xff] %vm216, %v632
      %665 = vst.msk [vmem:[#allocation2 + $0x48] sm:$0xff] %vm216, %v633
      %666 = vst.msk [vmem:[#allocation2 + $0x50] sm:$0xff] %vm216, %v634
      %667 = vst.msk [vmem:[#allocation2 + $0x58] sm:$0xff] %vm216, %v635
      %668 = vst.msk [vmem:[#allocation2 + $0x60] sm:$0xff] %vm216, %v636
      %669 = vst.msk [vmem:[#allocation2 + $0x68] sm:$0xff] %vm216, %v637
      %670 = vst.msk [vmem:[#allocation2 + $0x70] sm:$0xff] %vm216, %v638
      %671 = vst.msk [vmem:[#allocation2 + $0x78] sm:$0xff] %vm216, %v639
      %672 = vst.msk [vmem:[#allocation2 + $0x80] sm:$0xff] %vm216, %v640
      %673 = vst.msk [vmem:[#allocation2 + $0x88] sm:$0xff] %vm216, %v641
      %674 = vst.msk [vmem:[#allocation2 + $0x90] sm:$0xff] %vm216, %v642
      %675 = vst.msk [vmem:[#allocation2 + $0x98] sm:$0xff] %vm216, %v643
      %676 = vst.msk [vmem:[#allocation2 + $0xa0] sm:$0xff] %vm216, %v644
      %677 = vst.msk [vmem:[#allocation2 + $0xa8] sm:$0xff] %vm216, %v645
      %678 = vst.msk [vmem:[#allocation2 + $0xb0] sm:$0xff] %vm216, %v646
      %679 = vst.msk [vmem:[#allocation2 + $0xb8] sm:$0xff] %vm216, %v647
      %680 = vst.msk [vmem:[#allocation2 + $0xc0] sm:$0xff] %vm216, %v648
      %681 = vst.msk [vmem:[#allocation2 + $0xc8] sm:$0xff] %vm216, %v649
      %682 = vst.msk [vmem:[#allocation2 + $0xd0] sm:$0xff] %vm216, %v650
      %683 = vst.msk [vmem:[#allocation2 + $0xd8] sm:$0xff] %vm216, %v651
      %684 = vst.msk [vmem:[#allocation2 + $0xe0] sm:$0xff] %vm216, %v652
      %685 = vst.msk [vmem:[#allocation2 + $0xe8] sm:$0xff] %vm216, %v653
      %686 = vst.msk [vmem:[#allocation2 + $0xf0] sm:$0xff] %vm216, %v654
      %687 = vst.msk [vmem:[#allocation2 + $0xf8] sm:$0xff] %vm216, %v655
      %v688 = vld [vmem:[#allocation2] sm:$0xff]
      %v689 = vld [vmem:[#allocation2 + $0x8] sm:$0xff]
      %v690 = vld [vmem:[#allocation2 + $0x10] sm:$0xff]
      %v691 = vld [vmem:[#allocation2 + $0x18] sm:$0xff]
      %v692 = vld [vmem:[#allocation2 + $0x20] sm:$0xff]
      %v693 = vld [vmem:[#allocation2 + $0x28] sm:$0xff]
      %v694 = vld [vmem:[#allocation2 + $0x30] sm:$0xff]
      %v695 = vld [vmem:[#allocation2 + $0x38] sm:$0xff]
      %v696 = vld [vmem:[#allocation2 + $0x40] sm:$0xff]
      %v697 = vld [vmem:[#allocation2 + $0x48] sm:$0xff]
      %v698 = vld [vmem:[#allocation2 + $0x50] sm:$0xff]
      %v699 = vld [vmem:[#allocation2 + $0x58] sm:$0xff]
      %v700 = vld [vmem:[#allocation2 + $0x60] sm:$0xff]
      %v701 = vld [vmem:[#allocation2 + $0x68] sm:$0xff]
      %v702 = vld [vmem:[#allocation2 + $0x70] sm:$0xff]
      %v703 = vld [vmem:[#allocation2 + $0x78] sm:$0xff]
      %v704 = vld [vmem:[#allocation2 + $0x80] sm:$0xff]
      %v705 = vld [vmem:[#allocation2 + $0x88] sm:$0xff]
      %v706 = vld [vmem:[#allocation2 + $0x90] sm:$0xff]
      %v707 = vld [vmem:[#allocation2 + $0x98] sm:$0xff]
      %v708 = vld [vmem:[#allocation2 + $0xa0] sm:$0xff]
      %v709 = vld [vmem:[#allocation2 + $0xa8] sm:$0xff]
      %v710 = vld [vmem:[#allocation2 + $0xb0] sm:$0xff]
      %v711 = vld [vmem:[#allocation2 + $0xb8] sm:$0xff]
      %v712 = vld [vmem:[#allocation2 + $0xc0] sm:$0xff]
      %v713 = vld [vmem:[#allocation2 + $0xc8] sm:$0xff]
      %v714 = vld [vmem:[#allocation2 + $0xd0] sm:$0xff]
      %v715 = vld [vmem:[#allocation2 + $0xd8] sm:$0xff]
      %v716 = vld [vmem:[#allocation2 + $0xe0] sm:$0xff]
      %v717 = vld [vmem:[#allocation2 + $0xe8] sm:$0xff]
      %v718 = vld [vmem:[#allocation2 + $0xf0] sm:$0xff]
      %v719 = vld [vmem:[#allocation2 + $0xf8] sm:$0xff]
      %vm720 = vsmask.f32 3328
      %vm721 = vsmask.f32 7440
      %vm722 = vmor %vm720, %vm721
      %v724 = vshrl.u32 %v249, 16
      %v726 = vrot.slane %v724, 4
      %v727 = vshll.u32 %v249, 16
      %v729 = vrot.slane %v727, 5
      %v730 = vor.u32 %v726, %v729
      %v731 = vrot.slane %v730, 4
      %v733 = vshll.u32 %v250, 16
      %v735 = vrot.slane %v733, 5
      %v736 = vsel %vm722, %v731, %v735
      %v737 = vshrl.u32 %v250, 16
      %v739 = vrot.slane %v737, 4
      %v740 = vor.u32 %v739, %v735
      %v741 = vrot.slane %v740, 4
      %v743 = vshll.u32 %v251, 16
      %v745 = vrot.slane %v743, 5
      %v746 = vsel %vm722, %v741, %v745
      %v748 = vshrl.u32 %v252, 16
      %v750 = vrot.slane %v748, 4
      %v751 = vshll.u32 %v252, 16
      %v753 = vrot.slane %v751, 5
      %v754 = vor.u32 %v750, %v753
      %v755 = vrot.slane %v754, 4
      %v757 = vshll.u32 %v253, 16
      %v759 = vrot.slane %v757, 5
      %v760 = vsel %vm722, %v755, %v759
      %v761 = vshrl.u32 %v253, 16
      %v763 = vrot.slane %v761, 4
      %v764 = vor.u32 %v763, %v759
      %v765 = vrot.slane %v764, 4
      %v767 = vshll.u32 %v254, 16
      %v769 = vrot.slane %v767, 5
      %v770 = vsel %vm722, %v765, %v769
      %v772 = vshrl.u32 %v255, 16
      %v774 = vrot.slane %v772, 4
      %v775 = vshll.u32 %v255, 16
      %v777 = vrot.slane %v775, 5
      %v778 = vor.u32 %v774, %v777
      %v779 = vrot.slane %v778, 4
      %v781 = vshll.u32 %v256, 16
      %v783 = vrot.slane %v781, 5
      %v784 = vsel %vm722, %v779, %v783
      %v785 = vshrl.u32 %v256, 16
      %v787 = vrot.slane %v785, 4
      %v788 = vor.u32 %v787, %v783
      %v789 = vrot.slane %v788, 4
      %v791 = vshll.u32 %v257, 16
      %v793 = vrot.slane %v791, 5
      %v794 = vsel %vm722, %v789, %v793
      %v796 = vshrl.u32 %v258, 16
      %v798 = vrot.slane %v796, 4
      %v799 = vshll.u32 %v258, 16
      %v801 = vrot.slane %v799, 5
      %v802 = vor.u32 %v798, %v801
      %v803 = vrot.slane %v802, 4
      %v805 = vshll.u32 %v259, 16
      %v807 = vrot.slane %v805, 5
      %v808 = vsel %vm722, %v803, %v807
      %v809 = vshrl.u32 %v259, 16
      %v811 = vrot.slane %v809, 4
      %v812 = vor.u32 %v811, %v807
      %v813 = vrot.slane %v812, 4
      %v815 = vshll.u32 %v260, 16
      %v817 = vrot.slane %v815, 5
      %v818 = vsel %vm722, %v813, %v817
      %v820 = vshrl.u32 %v261, 16
      %v822 = vrot.slane %v820, 4
      %v823 = vshll.u32 %v261, 16
      %v825 = vrot.slane %v823, 5
      %v826 = vor.u32 %v822, %v825
      %v827 = vrot.slane %v826, 4
      %v829 = vshll.u32 %v262, 16
      %v831 = vrot.slane %v829, 5
      %v832 = vsel %vm722, %v827, %v831
      %v833 = vshrl.u32 %v262, 16
      %v835 = vrot.slane %v833, 4
      %v836 = vor.u32 %v835, %v831
      %v837 = vrot.slane %v836, 4
      %v839 = vshll.u32 %v263, 16
      %v841 = vrot.slane %v839, 5
      %v842 = vsel %vm722, %v837, %v841
      %v844 = vshrl.u32 %v264, 16
      %v846 = vrot.slane %v844, 4
      %v847 = vshll.u32 %v264, 16
      %v849 = vrot.slane %v847, 5
      %v850 = vor.u32 %v846, %v849
      %v851 = vrot.slane %v850, 4
      %v853 = vshll.u32 %v265, 16
      %v855 = vrot.slane %v853, 5
      %v856 = vsel %vm722, %v851, %v855
      %v857 = vshrl.u32 %v265, 16
      %v859 = vrot.slane %v857, 4
      %v860 = vor.u32 %v859, %v855
      %v861 = vrot.slane %v860, 4
      %v863 = vshll.u32 %v266, 16
      %v865 = vrot.slane %v863, 5
      %v866 = vsel %vm722, %v861, %v865
      %v868 = vshrl.u32 %v267, 16
      %v870 = vrot.slane %v868, 4
      %v871 = vshll.u32 %v267, 16
      %v873 = vrot.slane %v871, 5
      %v874 = vor.u32 %v870, %v873
      %v875 = vrot.slane %v874, 4
      %v877 = vshll.u32 %v268, 16
      %v879 = vrot.slane %v877, 5
      %v880 = vsel %vm722, %v875, %v879
      %v881 = vshrl.u32 %v268, 16
      %v883 = vrot.slane %v881, 4
      %v884 = vor.u32 %v883, %v879
      %v885 = vrot.slane %v884, 4
      %v887 = vshll.u32 %v269, 16
      %v889 = vrot.slane %v887, 5
      %v890 = vsel %vm722, %v885, %v889
      %v892 = vshrl.u32 %v270, 16
      %v894 = vrot.slane %v892, 4
      %v895 = vshll.u32 %v270, 16
      %v897 = vrot.slane %v895, 5
      %v898 = vor.u32 %v894, %v897
      %v899 = vrot.slane %v898, 4
      %v901 = vshll.u32 %v271, 16
      %v903 = vrot.slane %v901, 5
      %v904 = vsel %vm722, %v899, %v903
      %v905 = vshrl.u32 %v271, 16
      %v907 = vrot.slane %v905, 4
      %v908 = vor.u32 %v907, %v903
      %v909 = vrot.slane %v908, 4
      %v911 = vshll.u32 %v272, 16
      %v913 = vrot.slane %v911, 5
      %v914 = vsel %vm722, %v909, %v913
      %v916 = vshrl.u32 %v273, 16
      %v918 = vrot.slane %v916, 4
      %v919 = vshll.u32 %v273, 16
      %v921 = vrot.slane %v919, 5
      %v922 = vor.u32 %v918, %v921
      %v923 = vrot.slane %v922, 4
      %v925 = vshll.u32 %v274, 16
      %v927 = vrot.slane %v925, 5
      %v928 = vsel %vm722, %v923, %v927
      %v929 = vshrl.u32 %v274, 16
      %v931 = vrot.slane %v929, 4
      %v932 = vor.u32 %v931, %v927
      %v933 = vrot.slane %v932, 4
      %v935 = vshll.u32 %v275, 16
      %v937 = vrot.slane %v935, 5
      %v938 = vsel %vm722, %v933, %v937
      %v940 = vshrl.u32 %v276, 16
      %v942 = vrot.slane %v940, 4
      %v943 = vshll.u32 %v276, 16
      %v945 = vrot.slane %v943, 5
      %v946 = vor.u32 %v942, %v945
      %v947 = vrot.slane %v946, 4
      %v949 = vshll.u32 %v277, 16
      %v951 = vrot.slane %v949, 5
      %v952 = vsel %vm722, %v947, %v951
      %v953 = vshrl.u32 %v277, 16
      %v955 = vrot.slane %v953, 4
      %v956 = vor.u32 %v955, %v951
      %v957 = vrot.slane %v956, 4
      %v959 = vshll.u32 %v278, 16
      %v961 = vrot.slane %v959, 5
      %v962 = vsel %vm722, %v957, %v961
      %v964 = vshrl.u32 %v279, 16
      %v966 = vrot.slane %v964, 4
      %v967 = vshll.u32 %v279, 16
      %v969 = vrot.slane %v967, 5
      %v970 = vor.u32 %v966, %v969
      %v971 = vrot.slane %v970, 4
      %v973 = vshll.u32 %v280, 16
      %v975 = vrot.slane %v973, 5
      %v976 = vsel %vm722, %v971, %v975
      %v977 = vshrl.u32 %v280, 16
      %v979 = vrot.slane %v977, 4
      %v980 = vor.u32 %v979, %v975
      %v981 = vrot.slane %v980, 4
      %v983 = vshll.u32 %v281, 16
      %v985 = vrot.slane %v983, 5
      %v986 = vsel %vm722, %v981, %v985
      %v988 = vshrl.u32 %v282, 16
      %v990 = vrot.slane %v988, 4
      %v991 = vshll.u32 %v282, 16
      %v993 = vrot.slane %v991, 5
      %v994 = vor.u32 %v990, %v993
      %v995 = vrot.slane %v994, 4
      %v997 = vshll.u32 %v283, 16
      %v999 = vrot.slane %v997, 5
      %v1000 = vsel %vm722, %v995, %v999
      %v1001 = vshrl.u32 %v283, 16
      %v1003 = vrot.slane %v1001, 4
      %v1004 = vor.u32 %v1003, %v999
      %v1005 = vrot.slane %v1004, 4
      %v1007 = vshll.u32 %v284, 16
      %v1009 = vrot.slane %v1007, 5
      %v1010 = vsel %vm722, %v1005, %v1009
      %v1012 = vshrl.u32 %v285, 16
      %v1014 = vrot.slane %v1012, 4
      %v1015 = vshll.u32 %v285, 16
      %v1017 = vrot.slane %v1015, 5
      %v1018 = vor.u32 %v1014, %v1017
      %v1019 = vrot.slane %v1018, 4
      %v1021 = vshll.u32 %v286, 16
      %v1023 = vrot.slane %v1021, 5
      %v1024 = vsel %vm722, %v1019, %v1023
      %v1025 = vshrl.u32 %v286, 16
      %v1027 = vrot.slane %v1025, 4
      %v1028 = vor.u32 %v1027, %v1023
      %v1029 = vrot.slane %v1028, 4
      %v1031 = vshll.u32 %v287, 16
      %v1033 = vrot.slane %v1031, 5
      %v1034 = vsel %vm722, %v1029, %v1033
      %v1036 = vshrl.u32 %v288, 16
      %v1038 = vrot.slane %v1036, 4
      %v1039 = vshll.u32 %v288, 16
      %v1041 = vrot.slane %v1039, 5
      %v1042 = vor.u32 %v1038, %v1041
      %v1043 = vrot.slane %v1042, 4
      %v1045 = vshll.u32 %v289, 16
      %v1047 = vrot.slane %v1045, 5
      %v1048 = vsel %vm722, %v1043, %v1047
      %v1049 = vshrl.u32 %v289, 16
      %v1051 = vrot.slane %v1049, 4
      %v1052 = vor.u32 %v1051, %v1047
      %v1053 = vrot.slane %v1052, 4
      %v1055 = vshll.u32 %v290, 16
      %v1057 = vrot.slane %v1055, 5
      %v1058 = vsel %vm722, %v1053, %v1057
      %v1060 = vshrl.u32 %v291, 16
      %v1062 = vrot.slane %v1060, 4
      %v1063 = vshll.u32 %v291, 16
      %v1065 = vrot.slane %v1063, 5
      %v1066 = vor.u32 %v1062, %v1065
      %v1067 = vrot.slane %v1066, 4
      %v1069 = vshll.u32 %v292, 16
      %v1071 = vrot.slane %v1069, 5
      %v1072 = vsel %vm722, %v1067, %v1071
      %v1073 = vshrl.u32 %v292, 16
      %v1075 = vrot.slane %v1073, 4
      %v1076 = vor.u32 %v1075, %v1071
      %v1077 = vrot.slane %v1076, 4
      %v1079 = vshll.u32 %v293, 16
      %v1081 = vrot.slane %v1079, 5
      %v1082 = vsel %vm722, %v1077, %v1081
      %v1084 = vshrl.u32 %v294, 16
      %v1086 = vrot.slane %v1084, 4
      %v1087 = vshll.u32 %v294, 16
      %v1089 = vrot.slane %v1087, 5
      %v1090 = vor.u32 %v1086, %v1089
      %v1091 = vrot.slane %v1090, 4
      %v1093 = vshll.u32 %v295, 16
      %v1095 = vrot.slane %v1093, 5
      %v1096 = vsel %vm722, %v1091, %v1095
      %v1097 = vshrl.u32 %v295, 16
      %v1099 = vrot.slane %v1097, 4
      %v1100 = vor.u32 %v1099, %v1095
      %v1101 = vrot.slane %v1100, 4
      %v1103 = vshll.u32 %v296, 16
      %v1105 = vrot.slane %v1103, 5
      %v1106 = vsel %vm722, %v1101, %v1105
      %s1107 = scalar_lea.vmem %s1, 2
      %v1108 = vld [vmem:[%s1107] sm:$0x3]
      %v1109 = vunpack.c.l.b16 %v736
      %v1110 = vunpack.c.l.b16 %v746
      %v1111 = vunpack.c.l.b16 %v760
      %v1112 = vunpack.c.l.b16 %v770
      %v1113 = vunpack.c.l.b16 %v784
      %v1114 = vunpack.c.l.b16 %v794
      %v1115 = vunpack.c.l.b16 %v808
      %v1116 = vunpack.c.l.b16 %v818
      %v1117 = vunpack.c.l.b16 %v832
      %v1118 = vunpack.c.l.b16 %v842
      %v1119 = vunpack.c.l.b16 %v856
      %v1120 = vunpack.c.l.b16 %v866
      %v1121 = vunpack.c.l.b16 %v880
      %v1122 = vunpack.c.l.b16 %v890
      %v1123 = vunpack.c.l.b16 %v904
      %v1124 = vunpack.c.l.b16 %v914
      %v1125 = vunpack.c.l.b16 %v928
      %v1126 = vunpack.c.l.b16 %v938
      %v1127 = vunpack.c.l.b16 %v952
      %v1128 = vunpack.c.l.b16 %v962
      %v1129 = vunpack.c.l.b16 %v976
      %v1130 = vunpack.c.l.b16 %v986
      %v1131 = vunpack.c.l.b16 %v1000
      %v1132 = vunpack.c.l.b16 %v1010
      %v1133 = vunpack.c.l.b16 %v1024
      %v1134 = vunpack.c.l.b16 %v1034
      %v1135 = vunpack.c.l.b16 %v1048
      %v1136 = vunpack.c.l.b16 %v1058
      %v1137 = vunpack.c.l.b16 %v1072
      %v1138 = vunpack.c.l.b16 %v1082
      %v1139 = vunpack.c.l.b16 %v1096
      %v1140 = vunpack.c.l.b16 %v1106
      %v1141 = vpack.c.b16 %v1110, %v1109
      %v1142 = vpack.c.b16 %v1112, %v1111
      %v1143 = vpack.c.b16 %v1114, %v1113
      %v1144 = vpack.c.b16 %v1116, %v1115
      %v1145 = vpack.c.b16 %v1118, %v1117
      %v1146 = vpack.c.b16 %v1120, %v1119
      %v1147 = vpack.c.b16 %v1122, %v1121
      %v1148 = vpack.c.b16 %v1124, %v1123
      %v1149 = vpack.c.b16 %v1126, %v1125
      %v1150 = vpack.c.b16 %v1128, %v1127
      %v1151 = vpack.c.b16 %v1130, %v1129
      %v1152 = vpack.c.b16 %v1132, %v1131
      %v1153 = vpack.c.b16 %v1134, %v1133
      %v1154 = vpack.c.b16 %v1136, %v1135
      %v1155 = vpack.c.b16 %v1138, %v1137
      %v1156 = vpack.c.b16 %v1140, %v1139
      %v1158 = vsel %vm410, %v1141, 0
      %v1161 = vsel %vm410, %v1142, 0
      %v1164 = vsel %vm410, %v1143, 0
      %v1167 = vsel %vm410, %v1144, 0
      %v1170 = vsel %vm410, %v1145, 0
      %v1173 = vsel %vm410, %v1146, 0
      %v1176 = vsel %vm410, %v1147, 0
      %v1179 = vsel %vm410, %v1148, 0
      %v1182 = vsel %vm410, %v1149, 0
      %v1185 = vsel %vm410, %v1150, 0
      %v1188 = vsel %vm410, %v1151, 0
      %v1191 = vsel %vm410, %v1152, 0
      %v1194 = vsel %vm410, %v1153, 0
      %v1197 = vsel %vm410, %v1154, 0
      %v1200 = vsel %vm410, %v1155, 0
      %v1203 = vsel %vm410, %v1156, 0
      %v1206 = vsel %vm459, %v1108, 0
      %1208 = vmatprep.subr.bf16.mxu0 0
      %1209 = vmatpush1.bf16.msra.mxu0 %v1206
      %1210 = vmatprep.subr.bf16.mxu0 0
      %1211 = vmatpush1.bf16.msra.mxu0 0
      %1212 = vmatprep.subr.bf16.mxu0 0
      %1213 = vmatpush1.bf16.msra.mxu0 0
      %1214 = vmatprep.subr.bf16.mxu0 0
      %1215 = vmatpush1.bf16.msra.mxu0 0
      %1216 = vmatprep.subr.bf16.mxu0 0
      %1217 = vmatpush1.bf16.msra.mxu0 0
      %1218 = vmatprep.subr.bf16.mxu0 0
      %1219 = vmatpush1.bf16.msra.mxu0 0
      %1220 = vmatprep.subr.bf16.mxu0 0
      %1221 = vmatpush1.bf16.msra.mxu0 0
      %1222 = vmatprep.subr.bf16.mxu0 0
      %1223 = vmatpush1.bf16.msra.mxu0 0
      %1224 = vmatprep.subr.bf16.mxu0 0
      %1225 = vmatpush1.bf16.msra.mxu0 0
      %1226 = vmatprep.subr.bf16.mxu0 0
      %1227 = vmatpush1.bf16.msra.mxu0 0
      %1228 = vmatprep.subr.bf16.mxu0 0
      %1229 = vmatpush1.bf16.msra.mxu0 0
      %1230 = vmatprep.subr.bf16.mxu0 0
      %1231 = vmatpush1.bf16.msra.mxu0 0
      %1232 = vmatprep.subr.bf16.mxu0 0
      %1233 = vmatpush1.bf16.msra.mxu0 0
      %1234 = vmatprep.subr.bf16.mxu0 0
      %1235 = vmatpush1.bf16.msra.mxu0 0
      %1236 = vmatprep.subr.bf16.mxu0 0
      %1237 = vmatpush1.bf16.msra.mxu0 0
      %1238 = vmatprep.subr.bf16.mxu0 0
      %1239 = vmatpush1.bf16.msra.mxu0 0
      %1240 = vmatprep.mubr.bf16.mxu0 0
      %1241 = vmatmul.mubr.bf16.gmra.mrb[0].mxu0 %v1158
      %v1242 = vpop.f32.mrb[0].mxu0
      %v1243 = vadd.f32 0.0, %v1242
      %v1244 = vpop.f32.mrb[0].mxu0
      %v1245 = vpop.f32.mrb[0].mxu0
      %v1246 = vadd.f32 0.0, %v1245
      %v1247 = vpop.f32.mrb[0].mxu0
      %1248 = vmatprep.mubr.bf16.mxu0 0
      %1249 = vmatmul.mubr.bf16.gmra.mrb[0].mxu0 %v1161
      %v1250 = vpop.f32.mrb[0].mxu0
      %v1251 = vadd.f32 0.0, %v1250
      %v1252 = vpop.f32.mrb[0].mxu0
      %v1253 = vpop.f32.mrb[0].mxu0
      %v1254 = vadd.f32 0.0, %v1253
      %v1255 = vpop.f32.mrb[0].mxu0
      %1256 = vmatprep.mubr.bf16.mxu0 0
      %1257 = vmatmul.mubr.bf16.gmra.mrb[0].mxu0 %v1164
      %v1258 = vpop.f32.mrb[0].mxu0
      %v1259 = vadd.f32 0.0, %v1258
      %v1260 = vpop.f32.mrb[0].mxu0
      %v1261 = vpop.f32.mrb[0].mxu0
      %v1262 = vadd.f32 0.0, %v1261
      %v1263 = vpop.f32.mrb[0].mxu0
      %1264 = vmatprep.mubr.bf16.mxu0 0
      %1265 = vmatmul.mubr.bf16.gmra.mrb[0].mxu0 %v1167
      %v1266 = vpop.f32.mrb[0].mxu0
      %v1267 = vadd.f32 0.0, %v1266
      %v1268 = vpop.f32.mrb[0].mxu0
      %v1269 = vpop.f32.mrb[0].mxu0
      %v1270 = vadd.f32 0.0, %v1269
      %v1271 = vpop.f32.mrb[0].mxu0
      %1272 = vmatprep.mubr.bf16.mxu0 0
      %1273 = vmatmul.mubr.bf16.gmra.mrb[0].mxu0 %v1170
      %v1274 = vpop.f32.mrb[0].mxu0
      %v1275 = vadd.f32 0.0, %v1274
      %v1276 = vpop.f32.mrb[0].mxu0
      %v1277 = vpop.f32.mrb[0].mxu0
      %v1278 = vadd.f32 0.0, %v1277
      %v1279 = vpop.f32.mrb[0].mxu0
      %1280 = vmatprep.mubr.bf16.mxu0 0
      %1281 = vmatmul.mubr.bf16.gmra.mrb[0].mxu0 %v1173
      %v1282 = vpop.f32.mrb[0].mxu0
      %v1283 = vadd.f32 0.0, %v1282
      %v1284 = vpop.f32.mrb[0].mxu0
      %v1285 = vpop.f32.mrb[0].mxu0
      %v1286 = vadd.f32 0.0, %v1285
      %v1287 = vpop.f32.mrb[0].mxu0
      %1288 = vmatprep.mubr.bf16.mxu0 0
      %1289 = vmatmul.mubr.bf16.gmra.mrb[0].mxu0 %v1176
      %v1290 = vpop.f32.mrb[0].mxu0
      %v1291 = vadd.f32 0.0, %v1290
      %v1292 = vpop.f32.mrb[0].mxu0
      %v1293 = vpop.f32.mrb[0].mxu0
      %v1294 = vadd.f32 0.0, %v1293
      %v1295 = vpop.f32.mrb[0].mxu0
      %1296 = vmatprep.mubr.bf16.mxu0 0
      %1297 = vmatmul.mubr.bf16.gmra.mrb[0].mxu0 %v1179
      %v1298 = vpop.f32.mrb[0].mxu0
      %v1299 = vadd.f32 0.0, %v1298
      %v1300 = vpop.f32.mrb[0].mxu0
      %v1301 = vpop.f32.mrb[0].mxu0
      %v1302 = vadd.f32 0.0, %v1301
      %v1303 = vpop.f32.mrb[0].mxu0
      %1304 = vmatprep.mubr.bf16.mxu0 0
      %1305 = vmatmul.mubr.bf16.gmra.mrb[0].mxu0 %v1182
      %v1306 = vpop.f32.mrb[0].mxu0
      %v1307 = vadd.f32 0.0, %v1306
      %v1308 = vpop.f32.mrb[0].mxu0
      %v1309 = vpop.f32.mrb[0].mxu0
      %v1310 = vadd.f32 0.0, %v1309
      %v1311 = vpop.f32.mrb[0].mxu0
      %1312 = vmatprep.mubr.bf16.mxu0 0
      %1313 = vmatmul.mubr.bf16.gmra.mrb[0].mxu0 %v1185
      %v1314 = vpop.f32.mrb[0].mxu0
      %v1315 = vadd.f32 0.0, %v1314
      %v1316 = vpop.f32.mrb[0].mxu0
      %v1317 = vpop.f32.mrb[0].mxu0
      %v1318 = vadd.f32 0.0, %v1317
      %v1319 = vpop.f32.mrb[0].mxu0
      %1320 = vmatprep.mubr.bf16.mxu0 0
      %1321 = vmatmul.mubr.bf16.gmra.mrb[0].mxu0 %v1188
      %v1322 = vpop.f32.mrb[0].mxu0
      %v1323 = vadd.f32 0.0, %v1322
      %v1324 = vpop.f32.mrb[0].mxu0
      %v1325 = vpop.f32.mrb[0].mxu0
      %v1326 = vadd.f32 0.0, %v1325
      %v1327 = vpop.f32.mrb[0].mxu0
      %1328 = vmatprep.mubr.bf16.mxu0 0
      %1329 = vmatmul.mubr.bf16.gmra.mrb[0].mxu0 %v1191
      %v1330 = vpop.f32.mrb[0].mxu0
      %v1331 = vadd.f32 0.0, %v1330
      %v1332 = vpop.f32.mrb[0].mxu0
      %v1333 = vpop.f32.mrb[0].mxu0
      %v1334 = vadd.f32 0.0, %v1333
      %v1335 = vpop.f32.mrb[0].mxu0
      %1336 = vmatprep.mubr.bf16.mxu0 0
      %1337 = vmatmul.mubr.bf16.gmra.mrb[0].mxu0 %v1194
      %v1338 = vpop.f32.mrb[0].mxu0
      %v1339 = vadd.f32 0.0, %v1338
      %v1340 = vpop.f32.mrb[0].mxu0
      %v1341 = vpop.f32.mrb[0].mxu0
      %v1342 = vadd.f32 0.0, %v1341
      %v1343 = vpop.f32.mrb[0].mxu0
      %1344 = vmatprep.mubr.bf16.mxu0 0
      %1345 = vmatmul.mubr.bf16.gmra.mrb[0].mxu0 %v1197
      %v1346 = vpop.f32.mrb[0].mxu0
      %v1347 = vadd.f32 0.0, %v1346
      %v1348 = vpop.f32.mrb[0].mxu0
      %v1349 = vpop.f32.mrb[0].mxu0
      %v1350 = vadd.f32 0.0, %v1349
      %v1351 = vpop.f32.mrb[0].mxu0
      %1352 = vmatprep.mubr.bf16.mxu0 0
      %1353 = vmatmul.mubr.bf16.gmra.mrb[0].mxu0 %v1200
      %v1354 = vpop.f32.mrb[0].mxu0
      %v1355 = vadd.f32 0.0, %v1354
      %v1356 = vpop.f32.mrb[0].mxu0
      %v1357 = vpop.f32.mrb[0].mxu0
      %v1358 = vadd.f32 0.0, %v1357
      %v1359 = vpop.f32.mrb[0].mxu0
      %1360 = vmatprep.mubr.bf16.mxu0 0
      %1361 = vmatmul.mubr.bf16.gmra.mrb[0].mxu0 %v1203
      %v1362 = vpop.f32.mrb[0].mxu0
      %v1363 = vadd.f32 0.0, %v1362
      %v1364 = vpop.f32.mrb[0].mxu0
      %v1365 = vpop.f32.mrb[0].mxu0
      %v1366 = vadd.f32 0.0, %v1365
      %v1367 = vpop.f32.mrb[0].mxu0
      %1368 = vdwg.mxu0
      %v1369 = vadd.f32 %v688, %v1243
      %v1370 = vadd.f32 %v689, %v1246
      %v1371 = vadd.f32 %v690, %v1251
      %v1372 = vadd.f32 %v691, %v1254
      %v1373 = vadd.f32 %v692, %v1259
      %v1374 = vadd.f32 %v693, %v1262
      %v1375 = vadd.f32 %v694, %v1267
      %v1376 = vadd.f32 %v695, %v1270
      %v1377 = vadd.f32 %v696, %v1275
      %v1378 = vadd.f32 %v697, %v1278
      %v1379 = vadd.f32 %v698, %v1283
      %v1380 = vadd.f32 %v699, %v1286
      %v1381 = vadd.f32 %v700, %v1291
      %v1382 = vadd.f32 %v701, %v1294
      %v1383 = vadd.f32 %v702, %v1299
      %v1384 = vadd.f32 %v703, %v1302
      %v1385 = vadd.f32 %v704, %v1307
      %v1386 = vadd.f32 %v705, %v1310
      %v1387 = vadd.f32 %v706, %v1315
      %v1388 = vadd.f32 %v707, %v1318
      %v1389 = vadd.f32 %v708, %v1323
      %v1390 = vadd.f32 %v709, %v1326
      %v1391 = vadd.f32 %v710, %v1331
      %v1392 = vadd.f32 %v711, %v1334
      %v1393 = vadd.f32 %v712, %v1339
      %v1394 = vadd.f32 %v713, %v1342
      %v1395 = vadd.f32 %v714, %v1347
      %v1396 = vadd.f32 %v715, %v1350
      %v1397 = vadd.f32 %v716, %v1355
      %v1398 = vadd.f32 %v717, %v1358
      %v1399 = vadd.f32 %v718, %v1363
      %v1400 = vadd.f32 %v719, %v1366
      %1401 = vst.msk [vmem:[#allocation2] sm:$0xff] %vm216, %v1369
      %1402 = vst.msk [vmem:[#allocation2 + $0x8] sm:$0xff] %vm216, %v1370
      %1403 = vst.msk [vmem:[#allocation2 + $0x10] sm:$0xff] %vm216, %v1371
      %1404 = vst.msk [vmem:[#allocation2 + $0x18] sm:$0xff] %vm216, %v1372
      %1405 = vst.msk [vmem:[#allocation2 + $0x20] sm:$0xff] %vm216, %v1373
      %1406 = vst.msk [vmem:[#allocation2 + $0x28] sm:$0xff] %vm216, %v1374
      %1407 = vst.msk [vmem:[#allocation2 + $0x30] sm:$0xff] %vm216, %v1375
      %1408 = vst.msk [vmem:[#allocation2 + $0x38] sm:$0xff] %vm216, %v1376
      %1409 = vst.msk [vmem:[#allocation2 + $0x40] sm:$0xff] %vm216, %v1377
      %1410 = vst.msk [vmem:[#allocation2 + $0x48] sm:$0xff] %vm216, %v1378
      %1411 = vst.msk [vmem:[#allocation2 + $0x50] sm:$0xff] %vm216, %v1379
      %1412 = vst.msk [vmem:[#allocation2 + $0x58] sm:$0xff] %vm216, %v1380
      %1413 = vst.msk [vmem:[#allocation2 + $0x60] sm:$0xff] %vm216, %v1381
      %1414 = vst.msk [vmem:[#allocation2 + $0x68] sm:$0xff] %vm216, %v1382
      %1415 = vst.msk [vmem:[#allocation2 + $0x70] sm:$0xff] %vm216, %v1383
      %1416 = vst.msk [vmem:[#allocation2 + $0x78] sm:$0xff] %vm216, %v1384
      %1417 = vst.msk [vmem:[#allocation2 + $0x80] sm:$0xff] %vm216, %v1385
      %1418 = vst.msk [vmem:[#allocation2 + $0x88] sm:$0xff] %vm216, %v1386
      %1419 = vst.msk [vmem:[#allocation2 + $0x90] sm:$0xff] %vm216, %v1387
      %1420 = vst.msk [vmem:[#allocation2 + $0x98] sm:$0xff] %vm216, %v1388
      %1421 = vst.msk [vmem:[#allocation2 + $0xa0] sm:$0xff] %vm216, %v1389
      %1422 = vst.msk [vmem:[#allocation2 + $0xa8] sm:$0xff] %vm216, %v1390
      %1423 = vst.msk [vmem:[#allocation2 + $0xb0] sm:$0xff] %vm216, %v1391
      %1424 = vst.msk [vmem:[#allocation2 + $0xb8] sm:$0xff] %vm216, %v1392
      %1425 = vst.msk [vmem:[#allocation2 + $0xc0] sm:$0xff] %vm216, %v1393
      %1426 = vst.msk [vmem:[#allocation2 + $0xc8] sm:$0xff] %vm216, %v1394
      %1427 = vst.msk [vmem:[#allocation2 + $0xd0] sm:$0xff] %vm216, %v1395
      %1428 = vst.msk [vmem:[#allocation2 + $0xd8] sm:$0xff] %vm216, %v1396
      %1429 = vst.msk [vmem:[#allocation2 + $0xe0] sm:$0xff] %vm216, %v1397
      %1430 = vst.msk [vmem:[#allocation2 + $0xe8] sm:$0xff] %vm216, %v1398
      %1431 = vst.msk [vmem:[#allocation2 + $0xf0] sm:$0xff] %vm216, %v1399
      %1432 = vst.msk [vmem:[#allocation2 + $0xf8] sm:$0xff] %vm216, %v1400
      %v1433 = vld [vmem:[#allocation2] sm:$0xff]
      %v1434 = vld [vmem:[#allocation2 + $0x8] sm:$0xff]
      %v1435 = vld [vmem:[#allocation2 + $0x10] sm:$0xff]
      %v1436 = vld [vmem:[#allocation2 + $0x18] sm:$0xff]
      %v1437 = vld [vmem:[#allocation2 + $0x20] sm:$0xff]
      %v1438 = vld [vmem:[#allocation2 + $0x28] sm:$0xff]
      %v1439 = vld [vmem:[#allocation2 + $0x30] sm:$0xff]
      %v1440 = vld [vmem:[#allocation2 + $0x38] sm:$0xff]
      %v1441 = vld [vmem:[#allocation2 + $0x40] sm:$0xff]
      %v1442 = vld [vmem:[#allocation2 + $0x48] sm:$0xff]
      %v1443 = vld [vmem:[#allocation2 + $0x50] sm:$0xff]
      %v1444 = vld [vmem:[#allocation2 + $0x58] sm:$0xff]
      %v1445 = vld [vmem:[#allocation2 + $0x60] sm:$0xff]
      %v1446 = vld [vmem:[#allocation2 + $0x68] sm:$0xff]
      %v1447 = vld [vmem:[#allocation2 + $0x70] sm:$0xff]
      %v1448 = vld [vmem:[#allocation2 + $0x78] sm:$0xff]
      %v1449 = vld [vmem:[#allocation2 + $0x80] sm:$0xff]
      %v1450 = vld [vmem:[#allocation2 + $0x88] sm:$0xff]
      %v1451 = vld [vmem:[#allocation2 + $0x90] sm:$0xff]
      %v1452 = vld [vmem:[#allocation2 + $0x98] sm:$0xff]
      %v1453 = vld [vmem:[#allocation2 + $0xa0] sm:$0xff]
      %v1454 = vld [vmem:[#allocation2 + $0xa8] sm:$0xff]
      %v1455 = vld [vmem:[#allocation2 + $0xb0] sm:$0xff]
      %v1456 = vld [vmem:[#allocation2 + $0xb8] sm:$0xff]
      %v1457 = vld [vmem:[#allocation2 + $0xc0] sm:$0xff]
      %v1458 = vld [vmem:[#allocation2 + $0xc8] sm:$0xff]
      %v1459 = vld [vmem:[#allocation2 + $0xd0] sm:$0xff]
      %v1460 = vld [vmem:[#allocation2 + $0xd8] sm:$0xff]
      %v1461 = vld [vmem:[#allocation2 + $0xe0] sm:$0xff]
      %v1462 = vld [vmem:[#allocation2 + $0xe8] sm:$0xff]
      %v1463 = vld [vmem:[#allocation2 + $0xf0] sm:$0xff]
      %v1464 = vld [vmem:[#allocation2 + $0xf8] sm:$0xff]
      %vm1481 = vcmask 1042432
      %vm1482 = vcmask 1046532
      %vm1483 = vmor %vm1481, %vm1482
      %v1484 = vrot.slane %v249, 5
      %v1485 = vrot.slane %v1484, 4
      %v1486 = vrot.slane %v250, 5
      %v1487 = vsel %vm1483, %v1485, %v1486
      %v1488 = vrot.slane %v1486, 4
      %v1489 = vrot.slane %v251, 5
      %v1490 = vsel %vm1483, %v1488, %v1489
      %v1491 = vrot.slane %v252, 5
      %v1492 = vrot.slane %v1491, 4
      %v1493 = vrot.slane %v253, 5
      %v1494 = vsel %vm1483, %v1492, %v1493
      %v1495 = vrot.slane %v1493, 4
      %v1496 = vrot.slane %v254, 5
      %v1497 = vsel %vm1483, %v1495, %v1496
      %v1498 = vrot.slane %v255, 5
      %v1499 = vrot.slane %v1498, 4
      %v1500 = vrot.slane %v256, 5
      %v1501 = vsel %vm1483, %v1499, %v1500
      %v1502 = vrot.slane %v1500, 4
      %v1503 = vrot.slane %v257, 5
      %v1504 = vsel %vm1483, %v1502, %v1503
      %v1505 = vrot.slane %v258, 5
      %v1506 = vrot.slane %v1505, 4
      %v1507 = vrot.slane %v259, 5
      %v1508 = vsel %vm1483, %v1506, %v1507
      %v1509 = vrot.slane %v1507, 4
      %v1510 = vrot.slane %v260, 5
      %v1511 = vsel %vm1483, %v1509, %v1510
      %v1512 = vrot.slane %v261, 5
      %v1513 = vrot.slane %v1512, 4
      %v1514 = vrot.slane %v262, 5
      %v1515 = vsel %vm1483, %v1513, %v1514
      %v1516 = vrot.slane %v1514, 4
      %v1517 = vrot.slane %v263, 5
      %v1518 = vsel %vm1483, %v1516, %v1517
      %v1519 = vrot.slane %v264, 5
      %v1520 = vrot.slane %v1519, 4
      %v1521 = vrot.slane %v265, 5
      %v1522 = vsel %vm1483, %v1520, %v1521
      %v1523 = vrot.slane %v1521, 4
      %v1524 = vrot.slane %v266, 5
      %v1525 = vsel %vm1483, %v1523, %v1524
      %v1526 = vrot.slane %v267, 5
      %v1527 = vrot.slane %v1526, 4
      %v1528 = vrot.slane %v268, 5
      %v1529 = vsel %vm1483, %v1527, %v1528
      %v1530 = vrot.slane %v1528, 4
      %v1531 = vrot.slane %v269, 5
      %v1532 = vsel %vm1483, %v1530, %v1531
      %v1533 = vrot.slane %v270, 5
      %v1534 = vrot.slane %v1533, 4
      %v1535 = vrot.slane %v271, 5
      %v1536 = vsel %vm1483, %v1534, %v1535
      %v1537 = vrot.slane %v1535, 4
      %v1538 = vrot.slane %v272, 5
      %v1539 = vsel %vm1483, %v1537, %v1538
      %v1540 = vrot.slane %v273, 5
      %v1541 = vrot.slane %v1540, 4
      %v1542 = vrot.slane %v274, 5
      %v1543 = vsel %vm1483, %v1541, %v1542
      %v1544 = vrot.slane %v1542, 4
      %v1545 = vrot.slane %v275, 5
      %v1546 = vsel %vm1483, %v1544, %v1545
      %v1547 = vrot.slane %v276, 5
      %v1548 = vrot.slane %v1547, 4
      %v1549 = vrot.slane %v277, 5
      %v1550 = vsel %vm1483, %v1548, %v1549
      %v1551 = vrot.slane %v1549, 4
      %v1552 = vrot.slane %v278, 5
      %v1553 = vsel %vm1483, %v1551, %v1552
      %v1554 = vrot.slane %v279, 5
      %v1555 = vrot.slane %v1554, 4
      %v1556 = vrot.slane %v280, 5
      %v1557 = vsel %vm1483, %v1555, %v1556
      %v1558 = vrot.slane %v1556, 4
      %v1559 = vrot.slane %v281, 5
      %v1560 = vsel %vm1483, %v1558, %v1559
      %v1561 = vrot.slane %v282, 5
      %v1562 = vrot.slane %v1561, 4
      %v1563 = vrot.slane %v283, 5
      %v1564 = vsel %vm1483, %v1562, %v1563
      %v1565 = vrot.slane %v1563, 4
      %v1566 = vrot.slane %v284, 5
      %v1567 = vsel %vm1483, %v1565, %v1566
      %v1568 = vrot.slane %v285, 5
      %v1569 = vrot.slane %v1568, 4
      %v1570 = vrot.slane %v286, 5
      %v1571 = vsel %vm1483, %v1569, %v1570
      %v1572 = vrot.slane %v1570, 4
      %v1573 = vrot.slane %v287, 5
      %v1574 = vsel %vm1483, %v1572, %v1573
      %v1575 = vrot.slane %v288, 5
      %v1576 = vrot.slane %v1575, 4
      %v1577 = vrot.slane %v289, 5
      %v1578 = vsel %vm1483, %v1576, %v1577
      %v1579 = vrot.slane %v1577, 4
      %v1580 = vrot.slane %v290, 5
      %v1581 = vsel %vm1483, %v1579, %v1580
      %v1582 = vrot.slane %v291, 5
      %v1583 = vrot.slane %v1582, 4
      %v1584 = vrot.slane %v292, 5
      %v1585 = vsel %vm1483, %v1583, %v1584
      %v1586 = vrot.slane %v1584, 4
      %v1587 = vrot.slane %v293, 5
      %v1588 = vsel %vm1483, %v1586, %v1587
      %v1589 = vrot.slane %v294, 5
      %v1590 = vrot.slane %v1589, 4
      %v1591 = vrot.slane %v295, 5
      %v1592 = vsel %vm1483, %v1590, %v1591
      %v1593 = vrot.slane %v1591, 4
      %v1594 = vrot.slane %v296, 5
      %v1595 = vsel %vm1483, %v1593, %v1594
      %s1596 = scalar_lea.vmem %s1, 4
      %v1597 = vld [vmem:[%s1596] sm:$0x3]
      %v1598 = vunpack.c.l.b16 %v1487
      %v1599 = vunpack.c.l.b16 %v1490
      %v1600 = vunpack.c.l.b16 %v1494
      %v1601 = vunpack.c.l.b16 %v1497
      %v1602 = vunpack.c.l.b16 %v1501
      %v1603 = vunpack.c.l.b16 %v1504
      %v1604 = vunpack.c.l.b16 %v1508
      %v1605 = vunpack.c.l.b16 %v1511
      %v1606 = vunpack.c.l.b16 %v1515
      %v1607 = vunpack.c.l.b16 %v1518
      %v1608 = vunpack.c.l.b16 %v1522
      %v1609 = vunpack.c.l.b16 %v1525
      %v1610 = vunpack.c.l.b16 %v1529
      %v1611 = vunpack.c.l.b16 %v1532
      %v1612 = vunpack.c.l.b16 %v1536
      %v1613 = vunpack.c.l.b16 %v1539
      %v1614 = vunpack.c.l.b16 %v1543
      %v1615 = vunpack.c.l.b16 %v1546
      %v1616 = vunpack.c.l.b16 %v1550
      %v1617 = vunpack.c.l.b16 %v1553
      %v1618 = vunpack.c.l.b16 %v1557
      %v1619 = vunpack.c.l.b16 %v1560
      %v1620 = vunpack.c.l.b16 %v1564
      %v1621 = vunpack.c.l.b16 %v1567
      %v1622 = vunpack.c.l.b16 %v1571
      %v1623 = vunpack.c.l.b16 %v1574
      %v1624 = vunpack.c.l.b16 %v1578
      %v1625 = vunpack.c.l.b16 %v1581
      %v1626 = vunpack.c.l.b16 %v1585
      %v1627 = vunpack.c.l.b16 %v1588
      %v1628 = vunpack.c.l.b16 %v1592
      %v1629 = vunpack.c.l.b16 %v1595
      %v1630 = vpack.c.b16 %v1599, %v1598
      %v1631 = vpack.c.b16 %v1601, %v1600
      %v1632 = vpack.c.b16 %v1603, %v1602
      %v1633 = vpack.c.b16 %v1605, %v1604
      %v1634 = vpack.c.b16 %v1607, %v1606
      %v1635 = vpack.c.b16 %v1609, %v1608
      %v1636 = vpack.c.b16 %v1611, %v1610
      %v1637 = vpack.c.b16 %v1613, %v1612
      %v1638 = vpack.c.b16 %v1615, %v1614
      %v1639 = vpack.c.b16 %v1617, %v1616
      %v1640 = vpack.c.b16 %v1619, %v1618
      %v1641 = vpack.c.b16 %v1621, %v1620
      %v1642 = vpack.c.b16 %v1623, %v1622
      %v1643 = vpack.c.b16 %v1625, %v1624
      %v1644 = vpack.c.b16 %v1627, %v1626
      %v1645 = vpack.c.b16 %v1629, %v1628
      %v1647 = vsel %vm410, %v1630, 0
      %v1650 = vsel %vm410, %v1631, 0
      %v1653 = vsel %vm410, %v1632, 0
      %v1656 = vsel %vm410, %v1633, 0
      %v1659 = vsel %vm410, %v1634, 0
      %v1662 = vsel %vm410, %v1635, 0
      %v1665 = vsel %vm410, %v1636, 0
      %v1668 = vsel %vm410, %v1637, 0
      %v1671 = vsel %vm410, %v1638, 0
      %v1674 = vsel %vm410, %v1639, 0
      %v1677 = vsel %vm410, %v1640, 0
      %v1680 = vsel %vm410, %v1641, 0
      %v1683 = vsel %vm410, %v1642, 0
      %v1686 = vsel %vm410, %v1643, 0
      %v1689 = vsel %vm410, %v1644, 0
      %v1692 = vsel %vm410, %v1645, 0
      %v1695 = vsel %vm459, %v1597, 0
      %1697 = vmatprep.subr.bf16.mxu0 0
      %1698 = vmatpush1.bf16.msra.mxu0 %v1695
      %1699 = vmatprep.subr.bf16.mxu0 0
      %1700 = vmatpush1.bf16.msra.mxu0 0
      %1701 = vmatprep.subr.bf16.mxu0 0
      %1702 = vmatpush1.bf16.msra.mxu0 0
      %1703 = vmatprep.subr.bf16.mxu0 0
      %1704 = vmatpush1.bf16.msra.mxu0 0
      %1705 = vmatprep.subr.bf16.mxu0 0
      %1706 = vmatpush1.bf16.msra.mxu0 0
      %1707 = vmatprep.subr.bf16.mxu0 0
      %1708 = vmatpush1.bf16.msra.mxu0 0
      %1709 = vmatprep.subr.bf16.mxu0 0
      %1710 = vmatpush1.bf16.msra.mxu0 0
      %1711 = vmatprep.subr.bf16.mxu0 0
      %1712 = vmatpush1.bf16.msra.mxu0 0
      %1713 = vmatprep.subr.bf16.mxu0 0
      %1714 = vmatpush1.bf16.msra.mxu0 0
      %1715 = vmatprep.subr.bf16.mxu0 0
      %1716 = vmatpush1.bf16.msra.mxu0 0
      %1717 = vmatprep.subr.bf16.mxu0 0
      %1718 = vmatpush1.bf16.msra.mxu0 0
      %1719 = vmatprep.subr.bf16.mxu0 0
      %1720 = vmatpush1.bf16.msra.mxu0 0
      %1721 = vmatprep.subr.bf16.mxu0 0
      %1722 = vmatpush1.bf16.msra.mxu0 0
      %1723 = vmatprep.subr.bf16.mxu0 0
      %1724 = vmatpush1.bf16.msra.mxu0 0
      %1725 = vmatprep.subr.bf16.mxu0 0
      %1726 = vmatpush1.bf16.msra.mxu0 0
      %1727 = vmatprep.subr.bf16.mxu0 0
      %1728 = vmatpush1.bf16.msra.mxu0 0
      %1729 = vmatprep.mubr.bf16.mxu0 0
      %1730 = vmatmul.mubr.bf16.gmra.mrb[0].mxu0 %v1647
      %v1731 = vpop.f32.mrb[0].mxu0
      %v1732 = vadd.f32 0.0, %v1731
      %v1733 = vpop.f32.mrb[0].mxu0
      %v1734 = vpop.f32.mrb[0].mxu0
      %v1735 = vadd.f32 0.0, %v1734
      %v1736 = vpop.f32.mrb[0].mxu0
      %1737 = vmatprep.mubr.bf16.mxu0 0
      %1738 = vmatmul.mubr.bf16.gmra.mrb[0].mxu0 %v1650
      %v1739 = vpop.f32.mrb[0].mxu0
      %v1740 = vadd.f32 0.0, %v1739
      %v1741 = vpop.f32.mrb[0].mxu0
      %v1742 = vpop.f32.mrb[0].mxu0
      %v1743 = vadd.f32 0.0, %v1742
      %v1744 = vpop.f32.mrb[0].mxu0
      %1745 = vmatprep.mubr.bf16.mxu0 0
      %1746 = vmatmul.mubr.bf16.gmra.mrb[0].mxu0 %v1653
      %v1747 = vpop.f32.mrb[0].mxu0
      %v1748 = vadd.f32 0.0, %v1747
      %v1749 = vpop.f32.mrb[0].mxu0
      %v1750 = vpop.f32.mrb[0].mxu0
      %v1751 = vadd.f32 0.0, %v1750
      %v1752 = vpop.f32.mrb[0].mxu0
      %1753 = vmatprep.mubr.bf16.mxu0 0
      %1754 = vmatmul.mubr.bf16.gmra.mrb[0].mxu0 %v1656
      %v1755 = vpop.f32.mrb[0].mxu0
      %v1756 = vadd.f32 0.0, %v1755
      %v1757 = vpop.f32.mrb[0].mxu0
      %v1758 = vpop.f32.mrb[0].mxu0
      %v1759 = vadd.f32 0.0, %v1758
      %v1760 = vpop.f32.mrb[0].mxu0
      %1761 = vmatprep.mubr.bf16.mxu0 0
      %1762 = vmatmul.mubr.bf16.gmra.mrb[0].mxu0 %v1659
      %v1763 = vpop.f32.mrb[0].mxu0
      %v1764 = vadd.f32 0.0, %v1763
      %v1765 = vpop.f32.mrb[0].mxu0
      %v1766 = vpop.f32.mrb[0].mxu0
      %v1767 = vadd.f32 0.0, %v1766
      %v1768 = vpop.f32.mrb[0].mxu0
      %1769 = vmatprep.mubr.bf16.mxu0 0
      %1770 = vmatmul.mubr.bf16.gmra.mrb[0].mxu0 %v1662
      %v1771 = vpop.f32.mrb[0].mxu0
      %v1772 = vadd.f32 0.0, %v1771
      %v1773 = vpop.f32.mrb[0].mxu0
      %v1774 = vpop.f32.mrb[0].mxu0
      %v1775 = vadd.f32 0.0, %v1774
      %v1776 = vpop.f32.mrb[0].mxu0
      %1777 = vmatprep.mubr.bf16.mxu0 0
      %1778 = vmatmul.mubr.bf16.gmra.mrb[0].mxu0 %v1665
      %v1779 = vpop.f32.mrb[0].mxu0
      %v1780 = vadd.f32 0.0, %v1779
      %v1781 = vpop.f32.mrb[0].mxu0
      %v1782 = vpop.f32.mrb[0].mxu0
      %v1783 = vadd.f32 0.0, %v1782
      %v1784 = vpop.f32.mrb[0].mxu0
      %1785 = vmatprep.mubr.bf16.mxu0 0
      %1786 = vmatmul.mubr.bf16.gmra.mrb[0].mxu0 %v1668
      %v1787 = vpop.f32.mrb[0].mxu0
      %v1788 = vadd.f32 0.0, %v1787
      %v1789 = vpop.f32.mrb[0].mxu0
      %v1790 = vpop.f32.mrb[0].mxu0
      %v1791 = vadd.f32 0.0, %v1790
      %v1792 = vpop.f32.mrb[0].mxu0
      %1793 = vmatprep.mubr.bf16.mxu0 0
      %1794 = vmatmul.mubr.bf16.gmra.mrb[0].mxu0 %v1671
      %v1795 = vpop.f32.mrb[0].mxu0
      %v1796 = vadd.f32 0.0, %v1795
      %v1797 = vpop.f32.mrb[0].mxu0
      %v1798 = vpop.f32.mrb[0].mxu0
      %v1799 = vadd.f32 0.0, %v1798
      %v1800 = vpop.f32.mrb[0].mxu0
      %1801 = vmatprep.mubr.bf16.mxu0 0
      %1802 = vmatmul.mubr.bf16.gmra.mrb[0].mxu0 %v1674
      %v1803 = vpop.f32.mrb[0].mxu0
      %v1804 = vadd.f32 0.0, %v1803
      %v1805 = vpop.f32.mrb[0].mxu0
      %v1806 = vpop.f32.mrb[0].mxu0
      %v1807 = vadd.f32 0.0, %v1806
      %v1808 = vpop.f32.mrb[0].mxu0
      %1809 = vmatprep.mubr.bf16.mxu0 0
      %1810 = vmatmul.mubr.bf16.gmra.mrb[0].mxu0 %v1677
      %v1811 = vpop.f32.mrb[0].mxu0
      %v1812 = vadd.f32 0.0, %v1811
      %v1813 = vpop.f32.mrb[0].mxu0
      %v1814 = vpop.f32.mrb[0].mxu0
      %v1815 = vadd.f32 0.0, %v1814
      %v1816 = vpop.f32.mrb[0].mxu0
      %1817 = vmatprep.mubr.bf16.mxu0 0
      %1818 = vmatmul.mubr.bf16.gmra.mrb[0].mxu0 %v1680
      %v1819 = vpop.f32.mrb[0].mxu0
      %v1820 = vadd.f32 0.0, %v1819
      %v1821 = vpop.f32.mrb[0].mxu0
      %v1822 = vpop.f32.mrb[0].mxu0
      %v1823 = vadd.f32 0.0, %v1822
      %v1824 = vpop.f32.mrb[0].mxu0
      %1825 = vmatprep.mubr.bf16.mxu0 0
      %1826 = vmatmul.mubr.bf16.gmra.mrb[0].mxu0 %v1683
      %v1827 = vpop.f32.mrb[0].mxu0
      %v1828 = vadd.f32 0.0, %v1827
      %v1829 = vpop.f32.mrb[0].mxu0
      %v1830 = vpop.f32.mrb[0].mxu0
      %v1831 = vadd.f32 0.0, %v1830
      %v1832 = vpop.f32.mrb[0].mxu0
      %1833 = vmatprep.mubr.bf16.mxu0 0
      %1834 = vmatmul.mubr.bf16.gmra.mrb[0].mxu0 %v1686
      %v1835 = vpop.f32.mrb[0].mxu0
      %v1836 = vadd.f32 0.0, %v1835
      %v1837 = vpop.f32.mrb[0].mxu0
      %v1838 = vpop.f32.mrb[0].mxu0
      %v1839 = vadd.f32 0.0, %v1838
      %v1840 = vpop.f32.mrb[0].mxu0
      %1841 = vmatprep.mubr.bf16.mxu0 0
      %1842 = vmatmul.mubr.bf16.gmra.mrb[0].mxu0 %v1689
      %v1843 = vpop.f32.mrb[0].mxu0
      %v1844 = vadd.f32 0.0, %v1843
      %v1845 = vpop.f32.mrb[0].mxu0
      %v1846 = vpop.f32.mrb[0].mxu0
      %v1847 = vadd.f32 0.0, %v1846
      %v1848 = vpop.f32.mrb[0].mxu0
      %1849 = vmatprep.mubr.bf16.mxu0 0
      %1850 = vmatmul.mubr.bf16.gmra.mrb[0].mxu0 %v1692
      %v1851 = vpop.f32.mrb[0].mxu0
      %v1852 = vadd.f32 0.0, %v1851
      %v1853 = vpop.f32.mrb[0].mxu0
      %v1854 = vpop.f32.mrb[0].mxu0
      %v1855 = vadd.f32 0.0, %v1854
      %v1856 = vpop.f32.mrb[0].mxu0
      %1857 = vdwg.mxu0
      %v1858 = vadd.f32 %v1433, %v1732
      %v1859 = vadd.f32 %v1434, %v1735
      %v1860 = vadd.f32 %v1435, %v1740
      %v1861 = vadd.f32 %v1436, %v1743
      %v1862 = vadd.f32 %v1437, %v1748
      %v1863 = vadd.f32 %v1438, %v1751
      %v1864 = vadd.f32 %v1439, %v1756
      %v1865 = vadd.f32 %v1440, %v1759
      %v1866 = vadd.f32 %v1441, %v1764
      %v1867 = vadd.f32 %v1442, %v1767
      %v1868 = vadd.f32 %v1443, %v1772
      %v1869 = vadd.f32 %v1444, %v1775
      %v1870 = vadd.f32 %v1445, %v1780
      %v1871 = vadd.f32 %v1446, %v1783
      %v1872 = vadd.f32 %v1447, %v1788
      %v1873 = vadd.f32 %v1448, %v1791
      %v1874 = vadd.f32 %v1449, %v1796
      %v1875 = vadd.f32 %v1450, %v1799
      %v1876 = vadd.f32 %v1451, %v1804
      %v1877 = vadd.f32 %v1452, %v1807
      %v1878 = vadd.f32 %v1453, %v1812
      %v1879 = vadd.f32 %v1454, %v1815
      %v1880 = vadd.f32 %v1455, %v1820
      %v1881 = vadd.f32 %v1456, %v1823
      %v1882 = vadd.f32 %v1457, %v1828
      %v1883 = vadd.f32 %v1458, %v1831
      %v1884 = vadd.f32 %v1459, %v1836
      %v1885 = vadd.f32 %v1460, %v1839
      %v1886 = vadd.f32 %v1461, %v1844
      %v1887 = vadd.f32 %v1462, %v1847
      %v1888 = vadd.f32 %v1463, %v1852
      %v1889 = vadd.f32 %v1464, %v1855
      %1890 = vst.msk [vmem:[#allocation2] sm:$0xff] %vm216, %v1858
      %1891 = vst.msk [vmem:[#allocation2 + $0x8] sm:$0xff] %vm216, %v1859
      %1892 = vst.msk [vmem:[#allocation2 + $0x10] sm:$0xff] %vm216, %v1860
      %1893 = vst.msk [vmem:[#allocation2 + $0x18] sm:$0xff] %vm216, %v1861
      %1894 = vst.msk [vmem:[#allocation2 + $0x20] sm:$0xff] %vm216, %v1862
      %1895 = vst.msk [vmem:[#allocation2 + $0x28] sm:$0xff] %vm216, %v1863
      %1896 = vst.msk [vmem:[#allocation2 + $0x30] sm:$0xff] %vm216, %v1864
      %1897 = vst.msk [vmem:[#allocation2 + $0x38] sm:$0xff] %vm216, %v1865
      %1898 = vst.msk [vmem:[#allocation2 + $0x40] sm:$0xff] %vm216, %v1866
      %1899 = vst.msk [vmem:[#allocation2 + $0x48] sm:$0xff] %vm216, %v1867
      %1900 = vst.msk [vmem:[#allocation2 + $0x50] sm:$0xff] %vm216, %v1868
      %1901 = vst.msk [vmem:[#allocation2 + $0x58] sm:$0xff] %vm216, %v1869
      %1902 = vst.msk [vmem:[#allocation2 + $0x60] sm:$0xff] %vm216, %v1870
      %1903 = vst.msk [vmem:[#allocation2 + $0x68] sm:$0xff] %vm216, %v1871
      %1904 = vst.msk [vmem:[#allocation2 + $0x70] sm:$0xff] %vm216, %v1872
      %1905 = vst.msk [vmem:[#allocation2 + $0x78] sm:$0xff] %vm216, %v1873
      %1906 = vst.msk [vmem:[#allocation2 + $0x80] sm:$0xff] %vm216, %v1874
      %1907 = vst.msk [vmem:[#allocation2 + $0x88] sm:$0xff] %vm216, %v1875
      %1908 = vst.msk [vmem:[#allocation2 + $0x90] sm:$0xff] %vm216, %v1876
      %1909 = vst.msk [vmem:[#allocation2 + $0x98] sm:$0xff] %vm216, %v1877
      %1910 = vst.msk [vmem:[#allocation2 + $0xa0] sm:$0xff] %vm216, %v1878
      %1911 = vst.msk [vmem:[#allocation2 + $0xa8] sm:$0xff] %vm216, %v1879
      %1912 = vst.msk [vmem:[#allocation2 + $0xb0] sm:$0xff] %vm216, %v1880
      %1913 = vst.msk [vmem:[#allocation2 + $0xb8] sm:$0xff] %vm216, %v1881
      %1914 = vst.msk [vmem:[#allocation2 + $0xc0] sm:$0xff] %vm216, %v1882
      %1915 = vst.msk [vmem:[#allocation2 + $0xc8] sm:$0xff] %vm216, %v1883
      %1916 = vst.msk [vmem:[#allocation2 + $0xd0] sm:$0xff] %vm216, %v1884
      %1917 = vst.msk [vmem:[#allocation2 + $0xd8] sm:$0xff] %vm216, %v1885
      %1918 = vst.msk [vmem:[#allocation2 + $0xe0] sm:$0xff] %vm216, %v1886
      %1919 = vst.msk [vmem:[#allocation2 + $0xe8] sm:$0xff] %vm216, %v1887
      %1920 = vst.msk [vmem:[#allocation2 + $0xf0] sm:$0xff] %vm216, %v1888
      %1921 = vst.msk [vmem:[#allocation2 + $0xf8] sm:$0xff] %vm216, %v1889
      %s1922 = scalar_lea.vmem %s197, 12
      %v1923 = vld [vmem:[%s1922] sm:$0xf]
      %v1924 = vld [vmem:[%s1922 + $0x4] sm:$0xf]
      %v1925 = vld [vmem:[%s1922 + $0x8] sm:$0x1]
      %v1926 = vld [vmem:[%s1922 + $0xc] sm:$0xf]
      %v1927 = vld [vmem:[%s1922 + $0x10] sm:$0xf]
      %v1928 = vld [vmem:[%s1922 + $0x14] sm:$0x1]
      %v1929 = vld [vmem:[%s1922 + $0x18] sm:$0xf]
      %v1930 = vld [vmem:[%s1922 + $0x1c] sm:$0xf]
      %v1931 = vld [vmem:[%s1922 + $0x20] sm:$0x1]
      %v1932 = vld [vmem:[%s1922 + $0x24] sm:$0xf]
      %v1933 = vld [vmem:[%s1922 + $0x28] sm:$0xf]
      %v1934 = vld [vmem:[%s1922 + $0x2c] sm:$0x1]
      %v1935 = vld [vmem:[%s1922 + $0x30] sm:$0xf]
      %v1936 = vld [vmem:[%s1922 + $0x34] sm:$0xf]
      %v1937 = vld [vmem:[%s1922 + $0x38] sm:$0x1]
      %v1938 = vld [vmem:[%s1922 + $0x3c] sm:$0xf]
      %v1939 = vld [vmem:[%s1922 + $0x40] sm:$0xf]
      %v1940 = vld [vmem:[%s1922 + $0x44] sm:$0x1]
      %v1941 = vld [vmem:[%s1922 + $0x48] sm:$0xf]
      %v1942 = vld [vmem:[%s1922 + $0x4c] sm:$0xf]
      %v1943 = vld [vmem:[%s1922 + $0x50] sm:$0x1]
      %v1944 = vld [vmem:[%s1922 + $0x54] sm:$0xf]
      %v1945 = vld [vmem:[%s1922 + $0x58] sm:$0xf]
      %v1946 = vld [vmem:[%s1922 + $0x5c] sm:$0x1]
      %v1947 = vld [vmem:[%s1922 + $0x60] sm:$0xf]
      %v1948 = vld [vmem:[%s1922 + $0x64] sm:$0xf]
      %v1949 = vld [vmem:[%s1922 + $0x68] sm:$0x1]
      %v1950 = vld [vmem:[%s1922 + $0x6c] sm:$0xf]
      %v1951 = vld [vmem:[%s1922 + $0x70] sm:$0xf]
      %v1952 = vld [vmem:[%s1922 + $0x74] sm:$0x1]
      %v1953 = vld [vmem:[%s1922 + $0x78] sm:$0xf]
      %v1954 = vld [vmem:[%s1922 + $0x7c] sm:$0xf]
      %v1955 = vld [vmem:[%s1922 + $0x80] sm:$0x1]
      %v1956 = vld [vmem:[%s1922 + $0x84] sm:$0xf]
      %v1957 = vld [vmem:[%s1922 + $0x88] sm:$0xf]
      %v1958 = vld [vmem:[%s1922 + $0x8c] sm:$0x1]
      %v1959 = vld [vmem:[%s1922 + $0x90] sm:$0xf]
      %v1960 = vld [vmem:[%s1922 + $0x94] sm:$0xf]
      %v1961 = vld [vmem:[%s1922 + $0x98] sm:$0x1]
      %v1962 = vld [vmem:[%s1922 + $0x9c] sm:$0xf]
      %v1963 = vld [vmem:[%s1922 + $0xa0] sm:$0xf]
      %v1964 = vld [vmem:[%s1922 + $0xa4] sm:$0x1]
      %v1965 = vld [vmem:[%s1922 + $0xa8] sm:$0xf]
      %v1966 = vld [vmem:[%s1922 + $0xac] sm:$0xf]
      %v1967 = vld [vmem:[%s1922 + $0xb0] sm:$0x1]
      %v1968 = vld [vmem:[%s1922 + $0xb4] sm:$0xf]
      %v1969 = vld [vmem:[%s1922 + $0xb8] sm:$0xf]
      %v1970 = vld [vmem:[%s1922 + $0xbc] sm:$0x1]
      %v1971 = vld [vmem:[#allocation2] sm:$0xff]
      %v1972 = vld [vmem:[#allocation2 + $0x8] sm:$0xff]
      %v1973 = vld [vmem:[#allocation2 + $0x10] sm:$0xff]
      %v1974 = vld [vmem:[#allocation2 + $0x18] sm:$0xff]
      %v1975 = vld [vmem:[#allocation2 + $0x20] sm:$0xff]
      %v1976 = vld [vmem:[#allocation2 + $0x28] sm:$0xff]
      %v1977 = vld [vmem:[#allocation2 + $0x30] sm:$0xff]
      %v1978 = vld [vmem:[#allocation2 + $0x38] sm:$0xff]
      %v1979 = vld [vmem:[#allocation2 + $0x40] sm:$0xff]
      %v1980 = vld [vmem:[#allocation2 + $0x48] sm:$0xff]
      %v1981 = vld [vmem:[#allocation2 + $0x50] sm:$0xff]
      %v1982 = vld [vmem:[#allocation2 + $0x58] sm:$0xff]
      %v1983 = vld [vmem:[#allocation2 + $0x60] sm:$0xff]
      %v1984 = vld [vmem:[#allocation2 + $0x68] sm:$0xff]
      %v1985 = vld [vmem:[#allocation2 + $0x70] sm:$0xff]
      %v1986 = vld [vmem:[#allocation2 + $0x78] sm:$0xff]
      %v1987 = vld [vmem:[#allocation2 + $0x80] sm:$0xff]
      %v1988 = vld [vmem:[#allocation2 + $0x88] sm:$0xff]
      %v1989 = vld [vmem:[#allocation2 + $0x90] sm:$0xff]
      %v1990 = vld [vmem:[#allocation2 + $0x98] sm:$0xff]
      %v1991 = vld [vmem:[#allocation2 + $0xa0] sm:$0xff]
      %v1992 = vld [vmem:[#allocation2 + $0xa8] sm:$0xff]
      %v1993 = vld [vmem:[#allocation2 + $0xb0] sm:$0xff]
      %v1994 = vld [vmem:[#allocation2 + $0xb8] sm:$0xff]
      %v1995 = vld [vmem:[#allocation2 + $0xc0] sm:$0xff]
      %v1996 = vld [vmem:[#allocation2 + $0xc8] sm:$0xff]
      %v1997 = vld [vmem:[#allocation2 + $0xd0] sm:$0xff]
      %v1998 = vld [vmem:[#allocation2 + $0xd8] sm:$0xff]
      %v1999 = vld [vmem:[#allocation2 + $0xe0] sm:$0xff]
      %v2000 = vld [vmem:[#allocation2 + $0xe8] sm:$0xff]
      %v2001 = vld [vmem:[#allocation2 + $0xf0] sm:$0xff]
      %v2002 = vld [vmem:[#allocation2 + $0xf8] sm:$0xff]
      %s2003 = scalar_lea.vmem %s1, 6
      %v2004 = vld [vmem:[%s2003] sm:$0x3]
      %v2037 = vunpack.c.l.b16 %v1923
      %v2038 = vunpack.c.l.b16 %v1924
      %v2039 = vunpack.c.l.b16 %v1926
      %v2040 = vunpack.c.l.b16 %v1927
      %v2041 = vunpack.c.l.b16 %v1929
      %v2042 = vunpack.c.l.b16 %v1930
      %v2043 = vunpack.c.l.b16 %v1932
      %v2044 = vunpack.c.l.b16 %v1933
      %v2045 = vunpack.c.l.b16 %v1935
      %v2046 = vunpack.c.l.b16 %v1936
      %v2047 = vunpack.c.l.b16 %v1938
      %v2048 = vunpack.c.l.b16 %v1939
      %v2049 = vunpack.c.l.b16 %v1941
      %v2050 = vunpack.c.l.b16 %v1942
      %v2051 = vunpack.c.l.b16 %v1944
      %v2052 = vunpack.c.l.b16 %v1945
      %v2053 = vunpack.c.l.b16 %v1947
      %v2054 = vunpack.c.l.b16 %v1948
      %v2055 = vunpack.c.l.b16 %v1950
      %v2056 = vunpack.c.l.b16 %v1951
      %v2057 = vunpack.c.l.b16 %v1953
      %v2058 = vunpack.c.l.b16 %v1954
      %v2059 = vunpack.c.l.b16 %v1956
      %v2060 = vunpack.c.l.b16 %v1957
      %v2061 = vunpack.c.l.b16 %v1959
      %v2062 = vunpack.c.l.b16 %v1960
      %v2063 = vunpack.c.l.b16 %v1962
      %v2064 = vunpack.c.l.b16 %v1963
      %v2065 = vunpack.c.l.b16 %v1965
      %v2066 = vunpack.c.l.b16 %v1966
      %v2067 = vunpack.c.l.b16 %v1968
      %v2068 = vunpack.c.l.b16 %v1969
      %v2069 = vpack.c.b16 %v2038, %v2037
      %v2070 = vpack.c.b16 %v2040, %v2039
      %v2071 = vpack.c.b16 %v2042, %v2041
      %v2072 = vpack.c.b16 %v2044, %v2043
      %v2073 = vpack.c.b16 %v2046, %v2045
      %v2074 = vpack.c.b16 %v2048, %v2047
      %v2075 = vpack.c.b16 %v2050, %v2049
      %v2076 = vpack.c.b16 %v2052, %v2051
      %v2077 = vpack.c.b16 %v2054, %v2053
      %v2078 = vpack.c.b16 %v2056, %v2055
      %v2079 = vpack.c.b16 %v2058, %v2057
      %v2080 = vpack.c.b16 %v2060, %v2059
      %v2081 = vpack.c.b16 %v2062, %v2061
      %v2082 = vpack.c.b16 %v2064, %v2063
      %v2083 = vpack.c.b16 %v2066, %v2065
      %v2084 = vpack.c.b16 %v2068, %v2067
      %v2086 = vsel %vm410, %v2069, 0
      %v2089 = vsel %vm410, %v2070, 0
      %v2092 = vsel %vm410, %v2071, 0
      %v2095 = vsel %vm410, %v2072, 0
      %v2098 = vsel %vm410, %v2073, 0
      %v2101 = vsel %vm410, %v2074, 0
      %v2104 = vsel %vm410, %v2075, 0
      %v2107 = vsel %vm410, %v2076, 0
      %v2110 = vsel %vm410, %v2077, 0
      %v2113 = vsel %vm410, %v2078, 0
      %v2116 = vsel %vm410, %v2079, 0
      %v2119 = vsel %vm410, %v2080, 0
      %v2122 = vsel %vm410, %v2081, 0
      %v2125 = vsel %vm410, %v2082, 0
      %v2128 = vsel %vm410, %v2083, 0
      %v2131 = vsel %vm410, %v2084, 0
      %v2134 = vsel %vm459, %v2004, 0
      %2136 = vmatprep.subr.bf16.mxu0 0
      %2137 = vmatpush1.bf16.msra.mxu0 %v2134
      %2138 = vmatprep.subr.bf16.mxu0 0
      %2139 = vmatpush1.bf16.msra.mxu0 0
      %2140 = vmatprep.subr.bf16.mxu0 0
      %2141 = vmatpush1.bf16.msra.mxu0 0
      %2142 = vmatprep.subr.bf16.mxu0 0
      %2143 = vmatpush1.bf16.msra.mxu0 0
      %2144 = vmatprep.subr.bf16.mxu0 0
      %2145 = vmatpush1.bf16.msra.mxu0 0
      %2146 = vmatprep.subr.bf16.mxu0 0
      %2147 = vmatpush1.bf16.msra.mxu0 0
      %2148 = vmatprep.subr.bf16.mxu0 0
      %2149 = vmatpush1.bf16.msra.mxu0 0
      %2150 = vmatprep.subr.bf16.mxu0 0
      %2151 = vmatpush1.bf16.msra.mxu0 0
      %2152 = vmatprep.subr.bf16.mxu0 0
      %2153 = vmatpush1.bf16.msra.mxu0 0
      %2154 = vmatprep.subr.bf16.mxu0 0
      %2155 = vmatpush1.bf16.msra.mxu0 0
      %2156 = vmatprep.subr.bf16.mxu0 0
      %2157 = vmatpush1.bf16.msra.mxu0 0
      %2158 = vmatprep.subr.bf16.mxu0 0
      %2159 = vmatpush1.bf16.msra.mxu0 0
      %2160 = vmatprep.subr.bf16.mxu0 0
      %2161 = vmatpush1.bf16.msra.mxu0 0
      %2162 = vmatprep.subr.bf16.mxu0 0
      %2163 = vmatpush1.bf16.msra.mxu0 0
      %2164 = vmatprep.subr.bf16.mxu0 0
      %2165 = vmatpush1.bf16.msra.mxu0 0
      %2166 = vmatprep.subr.bf16.mxu0 0
      %2167 = vmatpush1.bf16.msra.mxu0 0
      %2168 = vmatprep.mubr.bf16.mxu0 0
      %2169 = vmatmul.mubr.bf16.gmra.mrb[0].mxu0 %v2086
      %v2170 = vpop.f32.mrb[0].mxu0
      %v2171 = vadd.f32 0.0, %v2170
      %v2172 = vpop.f32.mrb[0].mxu0
      %v2173 = vpop.f32.mrb[0].mxu0
      %v2174 = vadd.f32 0.0, %v2173
      %v2175 = vpop.f32.mrb[0].mxu0
      %2176 = vmatprep.mubr.bf16.mxu0 0
      %2177 = vmatmul.mubr.bf16.gmra.mrb[0].mxu0 %v2089
      %v2178 = vpop.f32.mrb[0].mxu0
      %v2179 = vadd.f32 0.0, %v2178
      %v2180 = vpop.f32.mrb[0].mxu0
      %v2181 = vpop.f32.mrb[0].mxu0
      %v2182 = vadd.f32 0.0, %v2181
      %v2183 = vpop.f32.mrb[0].mxu0
      %2184 = vmatprep.mubr.bf16.mxu0 0
      %2185 = vmatmul.mubr.bf16.gmra.mrb[0].mxu0 %v2092
      %v2186 = vpop.f32.mrb[0].mxu0
      %v2187 = vadd.f32 0.0, %v2186
      %v2188 = vpop.f32.mrb[0].mxu0
      %v2189 = vpop.f32.mrb[0].mxu0
      %v2190 = vadd.f32 0.0, %v2189
      %v2191 = vpop.f32.mrb[0].mxu0
      %2192 = vmatprep.mubr.bf16.mxu0 0
      %2193 = vmatmul.mubr.bf16.gmra.mrb[0].mxu0 %v2095
      %v2194 = vpop.f32.mrb[0].mxu0
      %v2195 = vadd.f32 0.0, %v2194
      %v2196 = vpop.f32.mrb[0].mxu0
      %v2197 = vpop.f32.mrb[0].mxu0
      %v2198 = vadd.f32 0.0, %v2197
      %v2199 = vpop.f32.mrb[0].mxu0
      %2200 = vmatprep.mubr.bf16.mxu0 0
      %2201 = vmatmul.mubr.bf16.gmra.mrb[0].mxu0 %v2098
      %v2202 = vpop.f32.mrb[0].mxu0
      %v2203 = vadd.f32 0.0, %v2202
      %v2204 = vpop.f32.mrb[0].mxu0
      %v2205 = vpop.f32.mrb[0].mxu0
      %v2206 = vadd.f32 0.0, %v2205
      %v2207 = vpop.f32.mrb[0].mxu0
      %2208 = vmatprep.mubr.bf16.mxu0 0
      %2209 = vmatmul.mubr.bf16.gmra.mrb[0].mxu0 %v2101
      %v2210 = vpop.f32.mrb[0].mxu0
      %v2211 = vadd.f32 0.0, %v2210
      %v2212 = vpop.f32.mrb[0].mxu0
      %v2213 = vpop.f32.mrb[0].mxu0
      %v2214 = vadd.f32 0.0, %v2213
      %v2215 = vpop.f32.mrb[0].mxu0
      %2216 = vmatprep.mubr.bf16.mxu0 0
      %2217 = vmatmul.mubr.bf16.gmra.mrb[0].mxu0 %v2104
      %v2218 = vpop.f32.mrb[0].mxu0
      %v2219 = vadd.f32 0.0, %v2218
      %v2220 = vpop.f32.mrb[0].mxu0
      %v2221 = vpop.f32.mrb[0].mxu0
      %v2222 = vadd.f32 0.0, %v2221
      %v2223 = vpop.f32.mrb[0].mxu0
      %2224 = vmatprep.mubr.bf16.mxu0 0
      %2225 = vmatmul.mubr.bf16.gmra.mrb[0].mxu0 %v2107
      %v2226 = vpop.f32.mrb[0].mxu0
      %v2227 = vadd.f32 0.0, %v2226
      %v2228 = vpop.f32.mrb[0].mxu0
      %v2229 = vpop.f32.mrb[0].mxu0
      %v2230 = vadd.f32 0.0, %v2229
      %v2231 = vpop.f32.mrb[0].mxu0
      %2232 = vmatprep.mubr.bf16.mxu0 0
      %2233 = vmatmul.mubr.bf16.gmra.mrb[0].mxu0 %v2110
      %v2234 = vpop.f32.mrb[0].mxu0
      %v2235 = vadd.f32 0.0, %v2234
      %v2236 = vpop.f32.mrb[0].mxu0
      %v2237 = vpop.f32.mrb[0].mxu0
      %v2238 = vadd.f32 0.0, %v2237
      %v2239 = vpop.f32.mrb[0].mxu0
      %2240 = vmatprep.mubr.bf16.mxu0 0
      %2241 = vmatmul.mubr.bf16.gmra.mrb[0].mxu0 %v2113
      %v2242 = vpop.f32.mrb[0].mxu0
      %v2243 = vadd.f32 0.0, %v2242
      %v2244 = vpop.f32.mrb[0].mxu0
      %v2245 = vpop.f32.mrb[0].mxu0
      %v2246 = vadd.f32 0.0, %v2245
      %v2247 = vpop.f32.mrb[0].mxu0
      %2248 = vmatprep.mubr.bf16.mxu0 0
      %2249 = vmatmul.mubr.bf16.gmra.mrb[0].mxu0 %v2116
      %v2250 = vpop.f32.mrb[0].mxu0
      %v2251 = vadd.f32 0.0, %v2250
      %v2252 = vpop.f32.mrb[0].mxu0
      %v2253 = vpop.f32.mrb[0].mxu0
      %v2254 = vadd.f32 0.0, %v2253
      %v2255 = vpop.f32.mrb[0].mxu0
      %2256 = vmatprep.mubr.bf16.mxu0 0
      %2257 = vmatmul.mubr.bf16.gmra.mrb[0].mxu0 %v2119
      %v2258 = vpop.f32.mrb[0].mxu0
      %v2259 = vadd.f32 0.0, %v2258
      %v2260 = vpop.f32.mrb[0].mxu0
      %v2261 = vpop.f32.mrb[0].mxu0
      %v2262 = vadd.f32 0.0, %v2261
      %v2263 = vpop.f32.mrb[0].mxu0
      %2264 = vmatprep.mubr.bf16.mxu0 0
      %2265 = vmatmul.mubr.bf16.gmra.mrb[0].mxu0 %v2122
      %v2266 = vpop.f32.mrb[0].mxu0
      %v2267 = vadd.f32 0.0, %v2266
      %v2268 = vpop.f32.mrb[0].mxu0
      %v2269 = vpop.f32.mrb[0].mxu0
      %v2270 = vadd.f32 0.0, %v2269
      %v2271 = vpop.f32.mrb[0].mxu0
      %2272 = vmatprep.mubr.bf16.mxu0 0
      %2273 = vmatmul.mubr.bf16.gmra.mrb[0].mxu0 %v2125
      %v2274 = vpop.f32.mrb[0].mxu0
      %v2275 = vadd.f32 0.0, %v2274
      %v2276 = vpop.f32.mrb[0].mxu0
      %v2277 = vpop.f32.mrb[0].mxu0
      %v2278 = vadd.f32 0.0, %v2277
      %v2279 = vpop.f32.mrb[0].mxu0
      %2280 = vmatprep.mubr.bf16.mxu0 0
      %2281 = vmatmul.mubr.bf16.gmra.mrb[0].mxu0 %v2128
      %v2282 = vpop.f32.mrb[0].mxu0
      %v2283 = vadd.f32 0.0, %v2282
      %v2284 = vpop.f32.mrb[0].mxu0
      %v2285 = vpop.f32.mrb[0].mxu0
      %v2286 = vadd.f32 0.0, %v2285
      %v2287 = vpop.f32.mrb[0].mxu0
      %2288 = vmatprep.mubr.bf16.mxu0 0
      %2289 = vmatmul.mubr.bf16.gmra.mrb[0].mxu0 %v2131
      %v2290 = vpop.f32.mrb[0].mxu0
      %v2291 = vadd.f32 0.0, %v2290
      %v2292 = vpop.f32.mrb[0].mxu0
      %v2293 = vpop.f32.mrb[0].mxu0
      %v2294 = vadd.f32 0.0, %v2293
      %v2295 = vpop.f32.mrb[0].mxu0
      %2296 = vdwg.mxu0
      %v2297 = vadd.f32 %v1971, %v2171
      %v2298 = vadd.f32 %v1972, %v2174
      %v2299 = vadd.f32 %v1973, %v2179
      %v2300 = vadd.f32 %v1974, %v2182
      %v2301 = vadd.f32 %v1975, %v2187
      %v2302 = vadd.f32 %v1976, %v2190
      %v2303 = vadd.f32 %v1977, %v2195
      %v2304 = vadd.f32 %v1978, %v2198
      %v2305 = vadd.f32 %v1979, %v2203
      %v2306 = vadd.f32 %v1980, %v2206
      %v2307 = vadd.f32 %v1981, %v2211
      %v2308 = vadd.f32 %v1982, %v2214
      %v2309 = vadd.f32 %v1983, %v2219
      %v2310 = vadd.f32 %v1984, %v2222
      %v2311 = vadd.f32 %v1985, %v2227
      %v2312 = vadd.f32 %v1986, %v2230
      %v2313 = vadd.f32 %v1987, %v2235
      %v2314 = vadd.f32 %v1988, %v2238
      %v2315 = vadd.f32 %v1989, %v2243
      %v2316 = vadd.f32 %v1990, %v2246
      %v2317 = vadd.f32 %v1991, %v2251
      %v2318 = vadd.f32 %v1992, %v2254
      %v2319 = vadd.f32 %v1993, %v2259
      %v2320 = vadd.f32 %v1994, %v2262
      %v2321 = vadd.f32 %v1995, %v2267
      %v2322 = vadd.f32 %v1996, %v2270
      %v2323 = vadd.f32 %v1997, %v2275
      %v2324 = vadd.f32 %v1998, %v2278
      %v2325 = vadd.f32 %v1999, %v2283
      %v2326 = vadd.f32 %v2000, %v2286
      %v2327 = vadd.f32 %v2001, %v2291
      %v2328 = vadd.f32 %v2002, %v2294
      %2329 = vst.msk [vmem:[#allocation2] sm:$0xff] %vm216, %v2297
      %2330 = vst.msk [vmem:[#allocation2 + $0x8] sm:$0xff] %vm216, %v2298
      %2331 = vst.msk [vmem:[#allocation2 + $0x10] sm:$0xff] %vm216, %v2299
      %2332 = vst.msk [vmem:[#allocation2 + $0x18] sm:$0xff] %vm216, %v2300
      %2333 = vst.msk [vmem:[#allocation2 + $0x20] sm:$0xff] %vm216, %v2301
      %2334 = vst.msk [vmem:[#allocation2 + $0x28] sm:$0xff] %vm216, %v2302
      %2335 = vst.msk [vmem:[#allocation2 + $0x30] sm:$0xff] %vm216, %v2303
      %2336 = vst.msk [vmem:[#allocation2 + $0x38] sm:$0xff] %vm216, %v2304
      %2337 = vst.msk [vmem:[#allocation2 + $0x40] sm:$0xff] %vm216, %v2305
      %2338 = vst.msk [vmem:[#allocation2 + $0x48] sm:$0xff] %vm216, %v2306
      %2339 = vst.msk [vmem:[#allocation2 + $0x50] sm:$0xff] %vm216, %v2307
      %2340 = vst.msk [vmem:[#allocation2 + $0x58] sm:$0xff] %vm216, %v2308
      %2341 = vst.msk [vmem:[#allocation2 + $0x60] sm:$0xff] %vm216, %v2309
      %2342 = vst.msk [vmem:[#allocation2 + $0x68] sm:$0xff] %vm216, %v2310
      %2343 = vst.msk [vmem:[#allocation2 + $0x70] sm:$0xff] %vm216, %v2311
      %2344 = vst.msk [vmem:[#allocation2 + $0x78] sm:$0xff] %vm216, %v2312
      %2345 = vst.msk [vmem:[#allocation2 + $0x80] sm:$0xff] %vm216, %v2313
      %2346 = vst.msk [vmem:[#allocation2 + $0x88] sm:$0xff] %vm216, %v2314
      %2347 = vst.msk [vmem:[#allocation2 + $0x90] sm:$0xff] %vm216, %v2315
      %2348 = vst.msk [vmem:[#allocation2 + $0x98] sm:$0xff] %vm216, %v2316
      %2349 = vst.msk [vmem:[#allocation2 + $0xa0] sm:$0xff] %vm216, %v2317
      %2350 = vst.msk [vmem:[#allocation2 + $0xa8] sm:$0xff] %vm216, %v2318
      %2351 = vst.msk [vmem:[#allocation2 + $0xb0] sm:$0xff] %vm216, %v2319
      %2352 = vst.msk [vmem:[#allocation2 + $0xb8] sm:$0xff] %vm216, %v2320
      %2353 = vst.msk [vmem:[#allocation2 + $0xc0] sm:$0xff] %vm216, %v2321
      %2354 = vst.msk [vmem:[#allocation2 + $0xc8] sm:$0xff] %vm216, %v2322
      %2355 = vst.msk [vmem:[#allocation2 + $0xd0] sm:$0xff] %vm216, %v2323
      %2356 = vst.msk [vmem:[#allocation2 + $0xd8] sm:$0xff] %vm216, %v2324
      %2357 = vst.msk [vmem:[#allocation2 + $0xe0] sm:$0xff] %vm216, %v2325
      %2358 = vst.msk [vmem:[#allocation2 + $0xe8] sm:$0xff] %vm216, %v2326
      %2359 = vst.msk [vmem:[#allocation2 + $0xf0] sm:$0xff] %vm216, %v2327
      %2360 = vst.msk [vmem:[#allocation2 + $0xf8] sm:$0xff] %vm216, %v2328
      %v2361 = vld [vmem:[#allocation2] sm:$0xff]
      %v2362 = vld [vmem:[#allocation2 + $0x8] sm:$0xff]
      %v2363 = vld [vmem:[#allocation2 + $0x10] sm:$0xff]
      %v2364 = vld [vmem:[#allocation2 + $0x18] sm:$0xff]
      %v2365 = vld [vmem:[#allocation2 + $0x20] sm:$0xff]
      %v2366 = vld [vmem:[#allocation2 + $0x28] sm:$0xff]
      %v2367 = vld [vmem:[#allocation2 + $0x30] sm:$0xff]
      %v2368 = vld [vmem:[#allocation2 + $0x38] sm:$0xff]
      %v2369 = vld [vmem:[#allocation2 + $0x40] sm:$0xff]
      %v2370 = vld [vmem:[#allocation2 + $0x48] sm:$0xff]
      %v2371 = vld [vmem:[#allocation2 + $0x50] sm:$0xff]
      %v2372 = vld [vmem:[#allocation2 + $0x58] sm:$0xff]
      %v2373 = vld [vmem:[#allocation2 + $0x60] sm:$0xff]
      %v2374 = vld [vmem:[#allocation2 + $0x68] sm:$0xff]
      %v2375 = vld [vmem:[#allocation2 + $0x70] sm:$0xff]
      %v2376 = vld [vmem:[#allocation2 + $0x78] sm:$0xff]
      %v2377 = vld [vmem:[#allocation2 + $0x80] sm:$0xff]
      %v2378 = vld [vmem:[#allocation2 + $0x88] sm:$0xff]
      %v2379 = vld [vmem:[#allocation2 + $0x90] sm:$0xff]
      %v2380 = vld [vmem:[#allocation2 + $0x98] sm:$0xff]
      %v2381 = vld [vmem:[#allocation2 + $0xa0] sm:$0xff]
      %v2382 = vld [vmem:[#allocation2 + $0xa8] sm:$0xff]
      %v2383 = vld [vmem:[#allocation2 + $0xb0] sm:$0xff]
      %v2384 = vld [vmem:[#allocation2 + $0xb8] sm:$0xff]
      %v2385 = vld [vmem:[#allocation2 + $0xc0] sm:$0xff]
      %v2386 = vld [vmem:[#allocation2 + $0xc8] sm:$0xff]
      %v2387 = vld [vmem:[#allocation2 + $0xd0] sm:$0xff]
      %v2388 = vld [vmem:[#allocation2 + $0xd8] sm:$0xff]
      %v2389 = vld [vmem:[#allocation2 + $0xe0] sm:$0xff]
      %v2390 = vld [vmem:[#allocation2 + $0xe8] sm:$0xff]
      %v2391 = vld [vmem:[#allocation2 + $0xf0] sm:$0xff]
      %v2392 = vld [vmem:[#allocation2 + $0xf8] sm:$0xff]
      %v2394 = vshrl.u32 %v1923, 16
      %v2396 = vrot.slane %v2394, 4
      %v2397 = vshll.u32 %v1923, 16
      %v2399 = vrot.slane %v2397, 5
      %v2400 = vor.u32 %v2396, %v2399
      %v2401 = vrot.slane %v2400, 4
      %v2403 = vshll.u32 %v1924, 16
      %v2405 = vrot.slane %v2403, 5
      %v2406 = vsel %vm722, %v2401, %v2405
      %v2407 = vshrl.u32 %v1924, 16
      %v2409 = vrot.slane %v2407, 4
      %v2410 = vor.u32 %v2409, %v2405
      %v2411 = vrot.slane %v2410, 4
      %v2413 = vshll.u32 %v1925, 16
      %v2415 = vrot.slane %v2413, 5
      %v2416 = vsel %vm722, %v2411, %v2415
      %v2418 = vshrl.u32 %v1926, 16
      %v2420 = vrot.slane %v2418, 4
      %v2421 = vshll.u32 %v1926, 16
      %v2423 = vrot.slane %v2421, 5
      %v2424 = vor.u32 %v2420, %v2423
      %v2425 = vrot.slane %v2424, 4
      %v2427 = vshll.u32 %v1927, 16
      %v2429 = vrot.slane %v2427, 5
      %v2430 = vsel %vm722, %v2425, %v2429
      %v2431 = vshrl.u32 %v1927, 16
      %v2433 = vrot.slane %v2431, 4
      %v2434 = vor.u32 %v2433, %v2429
      %v2435 = vrot.slane %v2434, 4
      %v2437 = vshll.u32 %v1928, 16
      %v2439 = vrot.slane %v2437, 5
      %v2440 = vsel %vm722, %v2435, %v2439
      %v2442 = vshrl.u32 %v1929, 16
      %v2444 = vrot.slane %v2442, 4
      %v2445 = vshll.u32 %v1929, 16
      %v2447 = vrot.slane %v2445, 5
      %v2448 = vor.u32 %v2444, %v2447
      %v2449 = vrot.slane %v2448, 4
      %v2451 = vshll.u32 %v1930, 16
      %v2453 = vrot.slane %v2451, 5
      %v2454 = vsel %vm722, %v2449, %v2453
      %v2455 = vshrl.u32 %v1930, 16
      %v2457 = vrot.slane %v2455, 4
      %v2458 = vor.u32 %v2457, %v2453
      %v2459 = vrot.slane %v2458, 4
      %v2461 = vshll.u32 %v1931, 16
      %v2463 = vrot.slane %v2461, 5
      %v2464 = vsel %vm722, %v2459, %v2463
      %v2466 = vshrl.u32 %v1932, 16
      %v2468 = vrot.slane %v2466, 4
      %v2469 = vshll.u32 %v1932, 16
      %v2471 = vrot.slane %v2469, 5
      %v2472 = vor.u32 %v2468, %v2471
      %v2473 = vrot.slane %v2472, 4
      %v2475 = vshll.u32 %v1933, 16
      %v2477 = vrot.slane %v2475, 5
      %v2478 = vsel %vm722, %v2473, %v2477
      %v2479 = vshrl.u32 %v1933, 16
      %v2481 = vrot.slane %v2479, 4
      %v2482 = vor.u32 %v2481, %v2477
      %v2483 = vrot.slane %v2482, 4
      %v2485 = vshll.u32 %v1934, 16
      %v2487 = vrot.slane %v2485, 5
      %v2488 = vsel %vm722, %v2483, %v2487
      %v2490 = vshrl.u32 %v1935, 16
      %v2492 = vrot.slane %v2490, 4
      %v2493 = vshll.u32 %v1935, 16
      %v2495 = vrot.slane %v2493, 5
      %v2496 = vor.u32 %v2492, %v2495
      %v2497 = vrot.slane %v2496, 4
      %v2499 = vshll.u32 %v1936, 16
      %v2501 = vrot.slane %v2499, 5
      %v2502 = vsel %vm722, %v2497, %v2501
      %v2503 = vshrl.u32 %v1936, 16
      %v2505 = vrot.slane %v2503, 4
      %v2506 = vor.u32 %v2505, %v2501
      %v2507 = vrot.slane %v2506, 4
      %v2509 = vshll.u32 %v1937, 16
      %v2511 = vrot.slane %v2509, 5
      %v2512 = vsel %vm722, %v2507, %v2511
      %v2514 = vshrl.u32 %v1938, 16
      %v2516 = vrot.slane %v2514, 4
      %v2517 = vshll.u32 %v1938, 16
      %v2519 = vrot.slane %v2517, 5
      %v2520 = vor.u32 %v2516, %v2519
      %v2521 = vrot.slane %v2520, 4
      %v2523 = vshll.u32 %v1939, 16
      %v2525 = vrot.slane %v2523, 5
      %v2526 = vsel %vm722, %v2521, %v2525
      %v2527 = vshrl.u32 %v1939, 16
      %v2529 = vrot.slane %v2527, 4
      %v2530 = vor.u32 %v2529, %v2525
      %v2531 = vrot.slane %v2530, 4
      %v2533 = vshll.u32 %v1940, 16
      %v2535 = vrot.slane %v2533, 5
      %v2536 = vsel %vm722, %v2531, %v2535
      %v2538 = vshrl.u32 %v1941, 16
      %v2540 = vrot.slane %v2538, 4
      %v2541 = vshll.u32 %v1941, 16
      %v2543 = vrot.slane %v2541, 5
      %v2544 = vor.u32 %v2540, %v2543
      %v2545 = vrot.slane %v2544, 4
      %v2547 = vshll.u32 %v1942, 16
      %v2549 = vrot.slane %v2547, 5
      %v2550 = vsel %vm722, %v2545, %v2549
      %v2551 = vshrl.u32 %v1942, 16
      %v2553 = vrot.slane %v2551, 4
      %v2554 = vor.u32 %v2553, %v2549
      %v2555 = vrot.slane %v2554, 4
      %v2557 = vshll.u32 %v1943, 16
      %v2559 = vrot.slane %v2557, 5
      %v2560 = vsel %vm722, %v2555, %v2559
      %v2562 = vshrl.u32 %v1944, 16
      %v2564 = vrot.slane %v2562, 4
      %v2565 = vshll.u32 %v1944, 16
      %v2567 = vrot.slane %v2565, 5
      %v2568 = vor.u32 %v2564, %v2567
      %v2569 = vrot.slane %v2568, 4
      %v2571 = vshll.u32 %v1945, 16
      %v2573 = vrot.slane %v2571, 5
      %v2574 = vsel %vm722, %v2569, %v2573
      %v2575 = vshrl.u32 %v1945, 16
      %v2577 = vrot.slane %v2575, 4
      %v2578 = vor.u32 %v2577, %v2573
      %v2579 = vrot.slane %v2578, 4
      %v2581 = vshll.u32 %v1946, 16
      %v2583 = vrot.slane %v2581, 5
      %v2584 = vsel %vm722, %v2579, %v2583
      %v2586 = vshrl.u32 %v1947, 16
      %v2588 = vrot.slane %v2586, 4
      %v2589 = vshll.u32 %v1947, 16
      %v2591 = vrot.slane %v2589, 5
      %v2592 = vor.u32 %v2588, %v2591
      %v2593 = vrot.slane %v2592, 4
      %v2595 = vshll.u32 %v1948, 16
      %v2597 = vrot.slane %v2595, 5
      %v2598 = vsel %vm722, %v2593, %v2597
      %v2599 = vshrl.u32 %v1948, 16
      %v2601 = vrot.slane %v2599, 4
      %v2602 = vor.u32 %v2601, %v2597
      %v2603 = vrot.slane %v2602, 4
      %v2605 = vshll.u32 %v1949, 16
      %v2607 = vrot.slane %v2605, 5
      %v2608 = vsel %vm722, %v2603, %v2607
      %v2610 = vshrl.u32 %v1950, 16
      %v2612 = vrot.slane %v2610, 4
      %v2613 = vshll.u32 %v1950, 16
      %v2615 = vrot.slane %v2613, 5
      %v2616 = vor.u32 %v2612, %v2615
      %v2617 = vrot.slane %v2616, 4
      %v2619 = vshll.u32 %v1951, 16
      %v2621 = vrot.slane %v2619, 5
      %v2622 = vsel %vm722, %v2617, %v2621
      %v2623 = vshrl.u32 %v1951, 16
      %v2625 = vrot.slane %v2623, 4
      %v2626 = vor.u32 %v2625, %v2621
      %v2627 = vrot.slane %v2626, 4
      %v2629 = vshll.u32 %v1952, 16
      %v2631 = vrot.slane %v2629, 5
      %v2632 = vsel %vm722, %v2627, %v2631
      %v2634 = vshrl.u32 %v1953, 16
      %v2636 = vrot.slane %v2634, 4
      %v2637 = vshll.u32 %v1953, 16
      %v2639 = vrot.slane %v2637, 5
      %v2640 = vor.u32 %v2636, %v2639
      %v2641 = vrot.slane %v2640, 4
      %v2643 = vshll.u32 %v1954, 16
      %v2645 = vrot.slane %v2643, 5
      %v2646 = vsel %vm722, %v2641, %v2645
      %v2647 = vshrl.u32 %v1954, 16
      %v2649 = vrot.slane %v2647, 4
      %v2650 = vor.u32 %v2649, %v2645
      %v2651 = vrot.slane %v2650, 4
      %v2653 = vshll.u32 %v1955, 16
      %v2655 = vrot.slane %v2653, 5
      %v2656 = vsel %vm722, %v2651, %v2655
      %v2658 = vshrl.u32 %v1956, 16
      %v2660 = vrot.slane %v2658, 4
      %v2661 = vshll.u32 %v1956, 16
      %v2663 = vrot.slane %v2661, 5
      %v2664 = vor.u32 %v2660, %v2663
      %v2665 = vrot.slane %v2664, 4
      %v2667 = vshll.u32 %v1957, 16
      %v2669 = vrot.slane %v2667, 5
      %v2670 = vsel %vm722, %v2665, %v2669
      %v2671 = vshrl.u32 %v1957, 16
      %v2673 = vrot.slane %v2671, 4
      %v2674 = vor.u32 %v2673, %v2669
      %v2675 = vrot.slane %v2674, 4
      %v2677 = vshll.u32 %v1958, 16
      %v2679 = vrot.slane %v2677, 5
      %v2680 = vsel %vm722, %v2675, %v2679
      %v2682 = vshrl.u32 %v1959, 16
      %v2684 = vrot.slane %v2682, 4
      %v2685 = vshll.u32 %v1959, 16
      %v2687 = vrot.slane %v2685, 5
      %v2688 = vor.u32 %v2684, %v2687
      %v2689 = vrot.slane %v2688, 4
      %v2691 = vshll.u32 %v1960, 16
      %v2693 = vrot.slane %v2691, 5
      %v2694 = vsel %vm722, %v2689, %v2693
      %v2695 = vshrl.u32 %v1960, 16
      %v2697 = vrot.slane %v2695, 4
      %v2698 = vor.u32 %v2697, %v2693
      %v2699 = vrot.slane %v2698, 4
      %v2701 = vshll.u32 %v1961, 16
      %v2703 = vrot.slane %v2701, 5
      %v2704 = vsel %vm722, %v2699, %v2703
      %v2706 = vshrl.u32 %v1962, 16
      %v2708 = vrot.slane %v2706, 4
      %v2709 = vshll.u32 %v1962, 16
      %v2711 = vrot.slane %v2709, 5
      %v2712 = vor.u32 %v2708, %v2711
      %v2713 = vrot.slane %v2712, 4
      %v2715 = vshll.u32 %v1963, 16
      %v2717 = vrot.slane %v2715, 5
      %v2718 = vsel %vm722, %v2713, %v2717
      %v2719 = vshrl.u32 %v1963, 16
      %v2721 = vrot.slane %v2719, 4
      %v2722 = vor.u32 %v2721, %v2717
      %v2723 = vrot.slane %v2722, 4
      %v2725 = vshll.u32 %v1964, 16
      %v2727 = vrot.slane %v2725, 5
      %v2728 = vsel %vm722, %v2723, %v2727
      %v2730 = vshrl.u32 %v1965, 16
      %v2732 = vrot.slane %v2730, 4
      %v2733 = vshll.u32 %v1965, 16
      %v2735 = vrot.slane %v2733, 5
      %v2736 = vor.u32 %v2732, %v2735
      %v2737 = vrot.slane %v2736, 4
      %v2739 = vshll.u32 %v1966, 16
      %v2741 = vrot.slane %v2739, 5
      %v2742 = vsel %vm722, %v2737, %v2741
      %v2743 = vshrl.u32 %v1966, 16
      %v2745 = vrot.slane %v2743, 4
      %v2746 = vor.u32 %v2745, %v2741
      %v2747 = vrot.slane %v2746, 4
      %v2749 = vshll.u32 %v1967, 16
      %v2751 = vrot.slane %v2749, 5
      %v2752 = vsel %vm722, %v2747, %v2751
      %v2754 = vshrl.u32 %v1968, 16
      %v2756 = vrot.slane %v2754, 4
      %v2757 = vshll.u32 %v1968, 16
      %v2759 = vrot.slane %v2757, 5
      %v2760 = vor.u32 %v2756, %v2759
      %v2761 = vrot.slane %v2760, 4
      %v2763 = vshll.u32 %v1969, 16
      %v2765 = vrot.slane %v2763, 5
      %v2766 = vsel %vm722, %v2761, %v2765
      %v2767 = vshrl.u32 %v1969, 16
      %v2769 = vrot.slane %v2767, 4
      %v2770 = vor.u32 %v2769, %v2765
      %v2771 = vrot.slane %v2770, 4
      %v2773 = vshll.u32 %v1970, 16
      %v2775 = vrot.slane %v2773, 5
      %v2776 = vsel %vm722, %v2771, %v2775
      %s2777 = scalar_lea.vmem %s1, 8
      %v2778 = vld [vmem:[%s2777] sm:$0x3]
      %v2779 = vunpack.c.l.b16 %v2406
      %v2780 = vunpack.c.l.b16 %v2416
      %v2781 = vunpack.c.l.b16 %v2430
      %v2782 = vunpack.c.l.b16 %v2440
      %v2783 = vunpack.c.l.b16 %v2454
      %v2784 = vunpack.c.l.b16 %v2464
      %v2785 = vunpack.c.l.b16 %v2478
      %v2786 = vunpack.c.l.b16 %v2488
      %v2787 = vunpack.c.l.b16 %v2502
      %v2788 = vunpack.c.l.b16 %v2512
      %v2789 = vunpack.c.l.b16 %v2526
      %v2790 = vunpack.c.l.b16 %v2536
      %v2791 = vunpack.c.l.b16 %v2550
      %v2792 = vunpack.c.l.b16 %v2560
      %v2793 = vunpack.c.l.b16 %v2574
      %v2794 = vunpack.c.l.b16 %v2584
      %v2795 = vunpack.c.l.b16 %v2598
      %v2796 = vunpack.c.l.b16 %v2608
      %v2797 = vunpack.c.l.b16 %v2622
      %v2798 = vunpack.c.l.b16 %v2632
      %v2799 = vunpack.c.l.b16 %v2646
      %v2800 = vunpack.c.l.b16 %v2656
      %v2801 = vunpack.c.l.b16 %v2670
      %v2802 = vunpack.c.l.b16 %v2680
      %v2803 = vunpack.c.l.b16 %v2694
      %v2804 = vunpack.c.l.b16 %v2704
      %v2805 = vunpack.c.l.b16 %v2718
      %v2806 = vunpack.c.l.b16 %v2728
      %v2807 = vunpack.c.l.b16 %v2742
      %v2808 = vunpack.c.l.b16 %v2752
      %v2809 = vunpack.c.l.b16 %v2766
      %v2810 = vunpack.c.l.b16 %v2776
      %v2811 = vpack.c.b16 %v2780, %v2779
      %v2812 = vpack.c.b16 %v2782, %v2781
      %v2813 = vpack.c.b16 %v2784, %v2783
      %v2814 = vpack.c.b16 %v2786, %v2785
      %v2815 = vpack.c.b16 %v2788, %v2787
      %v2816 = vpack.c.b16 %v2790, %v2789
      %v2817 = vpack.c.b16 %v2792, %v2791
      %v2818 = vpack.c.b16 %v2794, %v2793
      %v2819 = vpack.c.b16 %v2796, %v2795
      %v2820 = vpack.c.b16 %v2798, %v2797
      %v2821 = vpack.c.b16 %v2800, %v2799
      %v2822 = vpack.c.b16 %v2802, %v2801
      %v2823 = vpack.c.b16 %v2804, %v2803
      %v2824 = vpack.c.b16 %v2806, %v2805
      %v2825 = vpack.c.b16 %v2808, %v2807
      %v2826 = vpack.c.b16 %v2810, %v2809
      %v2828 = vsel %vm410, %v2811, 0
      %v2831 = vsel %vm410, %v2812, 0
      %v2834 = vsel %vm410, %v2813, 0
      %v2837 = vsel %vm410, %v2814, 0
      %v2840 = vsel %vm410, %v2815, 0
      %v2843 = vsel %vm410, %v2816, 0
      %v2846 = vsel %vm410, %v2817, 0
      %v2849 = vsel %vm410, %v2818, 0
      %v2852 = vsel %vm410, %v2819, 0
      %v2855 = vsel %vm410, %v2820, 0
      %v2858 = vsel %vm410, %v2821, 0
      %v2861 = vsel %vm410, %v2822, 0
      %v2864 = vsel %vm410, %v2823, 0
      %v2867 = vsel %vm410, %v2824, 0
      %v2870 = vsel %vm410, %v2825, 0
      %v2873 = vsel %vm410, %v2826, 0
      %v2876 = vsel %vm459, %v2778, 0
      %2878 = vmatprep.subr.bf16.mxu0 0
      %2879 = vmatpush1.bf16.msra.mxu0 %v2876
      %2880 = vmatprep.subr.bf16.mxu0 0
      %2881 = vmatpush1.bf16.msra.mxu0 0
      %2882 = vmatprep.subr.bf16.mxu0 0
      %2883 = vmatpush1.bf16.msra.mxu0 0
      %2884 = vmatprep.subr.bf16.mxu0 0
      %2885 = vmatpush1.bf16.msra.mxu0 0
      %2886 = vmatprep.subr.bf16.mxu0 0
      %2887 = vmatpush1.bf16.msra.mxu0 0
      %2888 = vmatprep.subr.bf16.mxu0 0
      %2889 = vmatpush1.bf16.msra.mxu0 0
      %2890 = vmatprep.subr.bf16.mxu0 0
      %2891 = vmatpush1.bf16.msra.mxu0 0
      %2892 = vmatprep.subr.bf16.mxu0 0
      %2893 = vmatpush1.bf16.msra.mxu0 0
      %2894 = vmatprep.subr.bf16.mxu0 0
      %2895 = vmatpush1.bf16.msra.mxu0 0
      %2896 = vmatprep.subr.bf16.mxu0 0
      %2897 = vmatpush1.bf16.msra.mxu0 0
      %2898 = vmatprep.subr.bf16.mxu0 0
      %2899 = vmatpush1.bf16.msra.mxu0 0
      %2900 = vmatprep.subr.bf16.mxu0 0
      %2901 = vmatpush1.bf16.msra.mxu0 0
      %2902 = vmatprep.subr.bf16.mxu0 0
      %2903 = vmatpush1.bf16.msra.mxu0 0
      %2904 = vmatprep.subr.bf16.mxu0 0
      %2905 = vmatpush1.bf16.msra.mxu0 0
      %2906 = vmatprep.subr.bf16.mxu0 0
      %2907 = vmatpush1.bf16.msra.mxu0 0
      %2908 = vmatprep.subr.bf16.mxu0 0
      %2909 = vmatpush1.bf16.msra.mxu0 0
      %2910 = vmatprep.mubr.bf16.mxu0 0
      %2911 = vmatmul.mubr.bf16.gmra.mrb[0].mxu0 %v2828
      %v2912 = vpop.f32.mrb[0].mxu0
      %v2913 = vadd.f32 0.0, %v2912
      %v2914 = vpop.f32.mrb[0].mxu0
      %v2915 = vpop.f32.mrb[0].mxu0
      %v2916 = vadd.f32 0.0, %v2915
      %v2917 = vpop.f32.mrb[0].mxu0
      %2918 = vmatprep.mubr.bf16.mxu0 0
      %2919 = vmatmul.mubr.bf16.gmra.mrb[0].mxu0 %v2831
      %v2920 = vpop.f32.mrb[0].mxu0
      %v2921 = vadd.f32 0.0, %v2920
      %v2922 = vpop.f32.mrb[0].mxu0
      %v2923 = vpop.f32.mrb[0].mxu0
      %v2924 = vadd.f32 0.0, %v2923
      %v2925 = vpop.f32.mrb[0].mxu0
      %2926 = vmatprep.mubr.bf16.mxu0 0
      %2927 = vmatmul.mubr.bf16.gmra.mrb[0].mxu0 %v2834
      %v2928 = vpop.f32.mrb[0].mxu0
      %v2929 = vadd.f32 0.0, %v2928
      %v2930 = vpop.f32.mrb[0].mxu0
      %v2931 = vpop.f32.mrb[0].mxu0
      %v2932 = vadd.f32 0.0, %v2931
      %v2933 = vpop.f32.mrb[0].mxu0
      %2934 = vmatprep.mubr.bf16.mxu0 0
      %2935 = vmatmul.mubr.bf16.gmra.mrb[0].mxu0 %v2837
      %v2936 = vpop.f32.mrb[0].mxu0
      %v2937 = vadd.f32 0.0, %v2936
      %v2938 = vpop.f32.mrb[0].mxu0
      %v2939 = vpop.f32.mrb[0].mxu0
      %v2940 = vadd.f32 0.0, %v2939
      %v2941 = vpop.f32.mrb[0].mxu0
      %2942 = vmatprep.mubr.bf16.mxu0 0
      %2943 = vmatmul.mubr.bf16.gmra.mrb[0].mxu0 %v2840
      %v2944 = vpop.f32.mrb[0].mxu0
      %v2945 = vadd.f32 0.0, %v2944
      %v2946 = vpop.f32.mrb[0].mxu0
      %v2947 = vpop.f32.mrb[0].mxu0
      %v2948 = vadd.f32 0.0, %v2947
      %v2949 = vpop.f32.mrb[0].mxu0
      %2950 = vmatprep.mubr.bf16.mxu0 0
      %2951 = vmatmul.mubr.bf16.gmra.mrb[0].mxu0 %v2843
      %v2952 = vpop.f32.mrb[0].mxu0
      %v2953 = vadd.f32 0.0, %v2952
      %v2954 = vpop.f32.mrb[0].mxu0
      %v2955 = vpop.f32.mrb[0].mxu0
      %v2956 = vadd.f32 0.0, %v2955
      %v2957 = vpop.f32.mrb[0].mxu0
      %2958 = vmatprep.mubr.bf16.mxu0 0
      %2959 = vmatmul.mubr.bf16.gmra.mrb[0].mxu0 %v2846
      %v2960 = vpop.f32.mrb[0].mxu0
      %v2961 = vadd.f32 0.0, %v2960
      %v2962 = vpop.f32.mrb[0].mxu0
      %v2963 = vpop.f32.mrb[0].mxu0
      %v2964 = vadd.f32 0.0, %v2963
      %v2965 = vpop.f32.mrb[0].mxu0
      %2966 = vmatprep.mubr.bf16.mxu0 0
      %2967 = vmatmul.mubr.bf16.gmra.mrb[0].mxu0 %v2849
      %v2968 = vpop.f32.mrb[0].mxu0
      %v2969 = vadd.f32 0.0, %v2968
      %v2970 = vpop.f32.mrb[0].mxu0
      %v2971 = vpop.f32.mrb[0].mxu0
      %v2972 = vadd.f32 0.0, %v2971
      %v2973 = vpop.f32.mrb[0].mxu0
      %2974 = vmatprep.mubr.bf16.mxu0 0
      %2975 = vmatmul.mubr.bf16.gmra.mrb[0].mxu0 %v2852
      %v2976 = vpop.f32.mrb[0].mxu0
      %v2977 = vadd.f32 0.0, %v2976
      %v2978 = vpop.f32.mrb[0].mxu0
      %v2979 = vpop.f32.mrb[0].mxu0
      %v2980 = vadd.f32 0.0, %v2979
      %v2981 = vpop.f32.mrb[0].mxu0
      %2982 = vmatprep.mubr.bf16.mxu0 0
      %2983 = vmatmul.mubr.bf16.gmra.mrb[0].mxu0 %v2855
      %v2984 = vpop.f32.mrb[0].mxu0
      %v2985 = vadd.f32 0.0, %v2984
      %v2986 = vpop.f32.mrb[0].mxu0
      %v2987 = vpop.f32.mrb[0].mxu0
      %v2988 = vadd.f32 0.0, %v2987
      %v2989 = vpop.f32.mrb[0].mxu0
      %2990 = vmatprep.mubr.bf16.mxu0 0
      %2991 = vmatmul.mubr.bf16.gmra.mrb[0].mxu0 %v2858
      %v2992 = vpop.f32.mrb[0].mxu0
      %v2993 = vadd.f32 0.0, %v2992
      %v2994 = vpop.f32.mrb[0].mxu0
      %v2995 = vpop.f32.mrb[0].mxu0
      %v2996 = vadd.f32 0.0, %v2995
      %v2997 = vpop.f32.mrb[0].mxu0
      %2998 = vmatprep.mubr.bf16.mxu0 0
      %2999 = vmatmul.mubr.bf16.gmra.mrb[0].mxu0 %v2861
      %v3000 = vpop.f32.mrb[0].mxu0
      %v3001 = vadd.f32 0.0, %v3000
      %v3002 = vpop.f32.mrb[0].mxu0
      %v3003 = vpop.f32.mrb[0].mxu0
      %v3004 = vadd.f32 0.0, %v3003
      %v3005 = vpop.f32.mrb[0].mxu0
      %3006 = vmatprep.mubr.bf16.mxu0 0
      %3007 = vmatmul.mubr.bf16.gmra.mrb[0].mxu0 %v2864
      %v3008 = vpop.f32.mrb[0].mxu0
      %v3009 = vadd.f32 0.0, %v3008
      %v3010 = vpop.f32.mrb[0].mxu0
      %v3011 = vpop.f32.mrb[0].mxu0
      %v3012 = vadd.f32 0.0, %v3011
      %v3013 = vpop.f32.mrb[0].mxu0
      %3014 = vmatprep.mubr.bf16.mxu0 0
      %3015 = vmatmul.mubr.bf16.gmra.mrb[0].mxu0 %v2867
      %v3016 = vpop.f32.mrb[0].mxu0
      %v3017 = vadd.f32 0.0, %v3016
      %v3018 = vpop.f32.mrb[0].mxu0
      %v3019 = vpop.f32.mrb[0].mxu0
      %v3020 = vadd.f32 0.0, %v3019
      %v3021 = vpop.f32.mrb[0].mxu0
      %3022 = vmatprep.mubr.bf16.mxu0 0
      %3023 = vmatmul.mubr.bf16.gmra.mrb[0].mxu0 %v2870
      %v3024 = vpop.f32.mrb[0].mxu0
      %v3025 = vadd.f32 0.0, %v3024
      %v3026 = vpop.f32.mrb[0].mxu0
      %v3027 = vpop.f32.mrb[0].mxu0
      %v3028 = vadd.f32 0.0, %v3027
      %v3029 = vpop.f32.mrb[0].mxu0
      %3030 = vmatprep.mubr.bf16.mxu0 0
      %3031 = vmatmul.mubr.bf16.gmra.mrb[0].mxu0 %v2873
      %v3032 = vpop.f32.mrb[0].mxu0
      %v3033 = vadd.f32 0.0, %v3032
      %v3034 = vpop.f32.mrb[0].mxu0
      %v3035 = vpop.f32.mrb[0].mxu0
      %v3036 = vadd.f32 0.0, %v3035
      %v3037 = vpop.f32.mrb[0].mxu0
      %3038 = vdwg.mxu0
      %v3039 = vadd.f32 %v2361, %v2913
      %v3040 = vadd.f32 %v2362, %v2916
      %v3041 = vadd.f32 %v2363, %v2921
      %v3042 = vadd.f32 %v2364, %v2924
      %v3043 = vadd.f32 %v2365, %v2929
      %v3044 = vadd.f32 %v2366, %v2932
      %v3045 = vadd.f32 %v2367, %v2937
      %v3046 = vadd.f32 %v2368, %v2940
      %v3047 = vadd.f32 %v2369, %v2945
      %v3048 = vadd.f32 %v2370, %v2948
      %v3049 = vadd.f32 %v2371, %v2953
      %v3050 = vadd.f32 %v2372, %v2956
      %v3051 = vadd.f32 %v2373, %v2961
      %v3052 = vadd.f32 %v2374, %v2964
      %v3053 = vadd.f32 %v2375, %v2969
      %v3054 = vadd.f32 %v2376, %v2972
      %v3055 = vadd.f32 %v2377, %v2977
      %v3056 = vadd.f32 %v2378, %v2980
      %v3057 = vadd.f32 %v2379, %v2985
      %v3058 = vadd.f32 %v2380, %v2988
      %v3059 = vadd.f32 %v2381, %v2993
      %v3060 = vadd.f32 %v2382, %v2996
      %v3061 = vadd.f32 %v2383, %v3001
      %v3062 = vadd.f32 %v2384, %v3004
      %v3063 = vadd.f32 %v2385, %v3009
      %v3064 = vadd.f32 %v2386, %v3012
      %v3065 = vadd.f32 %v2387, %v3017
      %v3066 = vadd.f32 %v2388, %v3020
      %v3067 = vadd.f32 %v2389, %v3025
      %v3068 = vadd.f32 %v2390, %v3028
      %v3069 = vadd.f32 %v2391, %v3033
      %v3070 = vadd.f32 %v2392, %v3036
      %3071 = vst.msk [vmem:[#allocation2] sm:$0xff] %vm216, %v3039
      %3072 = vst.msk [vmem:[#allocation2 + $0x8] sm:$0xff] %vm216, %v3040
      %3073 = vst.msk [vmem:[#allocation2 + $0x10] sm:$0xff] %vm216, %v3041
      %3074 = vst.msk [vmem:[#allocation2 + $0x18] sm:$0xff] %vm216, %v3042
      %3075 = vst.msk [vmem:[#allocation2 + $0x20] sm:$0xff] %vm216, %v3043
      %3076 = vst.msk [vmem:[#allocation2 + $0x28] sm:$0xff] %vm216, %v3044
      %3077 = vst.msk [vmem:[#allocation2 + $0x30] sm:$0xff] %vm216, %v3045
      %3078 = vst.msk [vmem:[#allocation2 + $0x38] sm:$0xff] %vm216, %v3046
      %3079 = vst.msk [vmem:[#allocation2 + $0x40] sm:$0xff] %vm216, %v3047
      %3080 = vst.msk [vmem:[#allocation2 + $0x48] sm:$0xff] %vm216, %v3048
      %3081 = vst.msk [vmem:[#allocation2 + $0x50] sm:$0xff] %vm216, %v3049
      %3082 = vst.msk [vmem:[#allocation2 + $0x58] sm:$0xff] %vm216, %v3050
      %3083 = vst.msk [vmem:[#allocation2 + $0x60] sm:$0xff] %vm216, %v3051
      %3084 = vst.msk [vmem:[#allocation2 + $0x68] sm:$0xff] %vm216, %v3052
      %3085 = vst.msk [vmem:[#allocation2 + $0x70] sm:$0xff] %vm216, %v3053
      %3086 = vst.msk [vmem:[#allocation2 + $0x78] sm:$0xff] %vm216, %v3054
      %3087 = vst.msk [vmem:[#allocation2 + $0x80] sm:$0xff] %vm216, %v3055
      %3088 = vst.msk [vmem:[#allocation2 + $0x88] sm:$0xff] %vm216, %v3056
      %3089 = vst.msk [vmem:[#allocation2 + $0x90] sm:$0xff] %vm216, %v3057
      %3090 = vst.msk [vmem:[#allocation2 + $0x98] sm:$0xff] %vm216, %v3058
      %3091 = vst.msk [vmem:[#allocation2 + $0xa0] sm:$0xff] %vm216, %v3059
      %3092 = vst.msk [vmem:[#allocation2 + $0xa8] sm:$0xff] %vm216, %v3060
      %3093 = vst.msk [vmem:[#allocation2 + $0xb0] sm:$0xff] %vm216, %v3061
      %3094 = vst.msk [vmem:[#allocation2 + $0xb8] sm:$0xff] %vm216, %v3062
      %3095 = vst.msk [vmem:[#allocation2 + $0xc0] sm:$0xff] %vm216, %v3063
      %3096 = vst.msk [vmem:[#allocation2 + $0xc8] sm:$0xff] %vm216, %v3064
      %3097 = vst.msk [vmem:[#allocation2 + $0xd0] sm:$0xff] %vm216, %v3065
      %3098 = vst.msk [vmem:[#allocation2 + $0xd8] sm:$0xff] %vm216, %v3066
      %3099 = vst.msk [vmem:[#allocation2 + $0xe0] sm:$0xff] %vm216, %v3067
      %3100 = vst.msk [vmem:[#allocation2 + $0xe8] sm:$0xff] %vm216, %v3068
      %3101 = vst.msk [vmem:[#allocation2 + $0xf0] sm:$0xff] %vm216, %v3069
      %3102 = vst.msk [vmem:[#allocation2 + $0xf8] sm:$0xff] %vm216, %v3070
      %v3103 = vld [vmem:[#allocation2] sm:$0xff]
      %v3104 = vld [vmem:[#allocation2 + $0x8] sm:$0xff]
      %v3105 = vld [vmem:[#allocation2 + $0x10] sm:$0xff]
      %v3106 = vld [vmem:[#allocation2 + $0x18] sm:$0xff]
      %v3107 = vld [vmem:[#allocation2 + $0x20] sm:$0xff]
      %v3108 = vld [vmem:[#allocation2 + $0x28] sm:$0xff]
      %v3109 = vld [vmem:[#allocation2 + $0x30] sm:$0xff]
      %v3110 = vld [vmem:[#allocation2 + $0x38] sm:$0xff]
      %v3111 = vld [vmem:[#allocation2 + $0x40] sm:$0xff]
      %v3112 = vld [vmem:[#allocation2 + $0x48] sm:$0xff]
      %v3113 = vld [vmem:[#allocation2 + $0x50] sm:$0xff]
      %v3114 = vld [vmem:[#allocation2 + $0x58] sm:$0xff]
      %v3115 = vld [vmem:[#allocation2 + $0x60] sm:$0xff]
      %v3116 = vld [vmem:[#allocation2 + $0x68] sm:$0xff]
      %v3117 = vld [vmem:[#allocation2 + $0x70] sm:$0xff]
      %v3118 = vld [vmem:[#allocation2 + $0x78] sm:$0xff]
      %v3119 = vld [vmem:[#allocation2 + $0x80] sm:$0xff]
      %v3120 = vld [vmem:[#allocation2 + $0x88] sm:$0xff]
      %v3121 = vld [vmem:[#allocation2 + $0x90] sm:$0xff]
      %v3122 = vld [vmem:[#allocation2 + $0x98] sm:$0xff]
      %v3123 = vld [vmem:[#allocation2 + $0xa0] sm:$0xff]
      %v3124 = vld [vmem:[#allocation2 + $0xa8] sm:$0xff]
      %v3125 = vld [vmem:[#allocation2 + $0xb0] sm:$0xff]
      %v3126 = vld [vmem:[#allocation2 + $0xb8] sm:$0xff]
      %v3127 = vld [vmem:[#allocation2 + $0xc0] sm:$0xff]
      %v3128 = vld [vmem:[#allocation2 + $0xc8] sm:$0xff]
      %v3129 = vld [vmem:[#allocation2 + $0xd0] sm:$0xff]
      %v3130 = vld [vmem:[#allocation2 + $0xd8] sm:$0xff]
      %v3131 = vld [vmem:[#allocation2 + $0xe0] sm:$0xff]
      %v3132 = vld [vmem:[#allocation2 + $0xe8] sm:$0xff]
      %v3133 = vld [vmem:[#allocation2 + $0xf0] sm:$0xff]
      %v3134 = vld [vmem:[#allocation2 + $0xf8] sm:$0xff]
      %v3151 = vrot.slane %v1923, 5
      %v3152 = vrot.slane %v3151, 4
      %v3153 = vrot.slane %v1924, 5
      %v3154 = vsel %vm1483, %v3152, %v3153
      %v3155 = vrot.slane %v3153, 4
      %v3156 = vrot.slane %v1925, 5
      %v3157 = vsel %vm1483, %v3155, %v3156
      %v3158 = vrot.slane %v1926, 5
      %v3159 = vrot.slane %v3158, 4
      %v3160 = vrot.slane %v1927, 5
      %v3161 = vsel %vm1483, %v3159, %v3160
      %v3162 = vrot.slane %v3160, 4
      %v3163 = vrot.slane %v1928, 5
      %v3164 = vsel %vm1483, %v3162, %v3163
      %v3165 = vrot.slane %v1929, 5
      %v3166 = vrot.slane %v3165, 4
      %v3167 = vrot.slane %v1930, 5
      %v3168 = vsel %vm1483, %v3166, %v3167
      %v3169 = vrot.slane %v3167, 4
      %v3170 = vrot.slane %v1931, 5
      %v3171 = vsel %vm1483, %v3169, %v3170
      %v3172 = vrot.slane %v1932, 5
      %v3173 = vrot.slane %v3172, 4
      %v3174 = vrot.slane %v1933, 5
      %v3175 = vsel %vm1483, %v3173, %v3174
      %v3176 = vrot.slane %v3174, 4
      %v3177 = vrot.slane %v1934, 5
      %v3178 = vsel %vm1483, %v3176, %v3177
      %v3179 = vrot.slane %v1935, 5
      %v3180 = vrot.slane %v3179, 4
      %v3181 = vrot.slane %v1936, 5
      %v3182 = vsel %vm1483, %v3180, %v3181
      %v3183 = vrot.slane %v3181, 4
      %v3184 = vrot.slane %v1937, 5
      %v3185 = vsel %vm1483, %v3183, %v3184
      %v3186 = vrot.slane %v1938, 5
      %v3187 = vrot.slane %v3186, 4
      %v3188 = vrot.slane %v1939, 5
      %v3189 = vsel %vm1483, %v3187, %v3188
      %v3190 = vrot.slane %v3188, 4
      %v3191 = vrot.slane %v1940, 5
      %v3192 = vsel %vm1483, %v3190, %v3191
      %v3193 = vrot.slane %v1941, 5
      %v3194 = vrot.slane %v3193, 4
      %v3195 = vrot.slane %v1942, 5
      %v3196 = vsel %vm1483, %v3194, %v3195
      %v3197 = vrot.slane %v3195, 4
      %v3198 = vrot.slane %v1943, 5
      %v3199 = vsel %vm1483, %v3197, %v3198
      %v3200 = vrot.slane %v1944, 5
      %v3201 = vrot.slane %v3200, 4
      %v3202 = vrot.slane %v1945, 5
      %v3203 = vsel %vm1483, %v3201, %v3202
      %v3204 = vrot.slane %v3202, 4
      %v3205 = vrot.slane %v1946, 5
      %v3206 = vsel %vm1483, %v3204, %v3205
      %v3207 = vrot.slane %v1947, 5
      %v3208 = vrot.slane %v3207, 4
      %v3209 = vrot.slane %v1948, 5
      %v3210 = vsel %vm1483, %v3208, %v3209
      %v3211 = vrot.slane %v3209, 4
      %v3212 = vrot.slane %v1949, 5
      %v3213 = vsel %vm1483, %v3211, %v3212
      %v3214 = vrot.slane %v1950, 5
      %v3215 = vrot.slane %v3214, 4
      %v3216 = vrot.slane %v1951, 5
      %v3217 = vsel %vm1483, %v3215, %v3216
      %v3218 = vrot.slane %v3216, 4
      %v3219 = vrot.slane %v1952, 5
      %v3220 = vsel %vm1483, %v3218, %v3219
      %v3221 = vrot.slane %v1953, 5
      %v3222 = vrot.slane %v3221, 4
      %v3223 = vrot.slane %v1954, 5
      %v3224 = vsel %vm1483, %v3222, %v3223
      %v3225 = vrot.slane %v3223, 4
      %v3226 = vrot.slane %v1955, 5
      %v3227 = vsel %vm1483, %v3225, %v3226
      %v3228 = vrot.slane %v1956, 5
      %v3229 = vrot.slane %v3228, 4
      %v3230 = vrot.slane %v1957, 5
      %v3231 = vsel %vm1483, %v3229, %v3230
      %v3232 = vrot.slane %v3230, 4
      %v3233 = vrot.slane %v1958, 5
      %v3234 = vsel %vm1483, %v3232, %v3233
      %v3235 = vrot.slane %v1959, 5
      %v3236 = vrot.slane %v3235, 4
      %v3237 = vrot.slane %v1960, 5
      %v3238 = vsel %vm1483, %v3236, %v3237
      %v3239 = vrot.slane %v3237, 4
      %v3240 = vrot.slane %v1961, 5
      %v3241 = vsel %vm1483, %v3239, %v3240
      %v3242 = vrot.slane %v1962, 5
      %v3243 = vrot.slane %v3242, 4
      %v3244 = vrot.slane %v1963, 5
      %v3245 = vsel %vm1483, %v3243, %v3244
      %v3246 = vrot.slane %v3244, 4
      %v3247 = vrot.slane %v1964, 5
      %v3248 = vsel %vm1483, %v3246, %v3247
      %v3249 = vrot.slane %v1965, 5
      %v3250 = vrot.slane %v3249, 4
      %v3251 = vrot.slane %v1966, 5
      %v3252 = vsel %vm1483, %v3250, %v3251
      %v3253 = vrot.slane %v3251, 4
      %v3254 = vrot.slane %v1967, 5
      %v3255 = vsel %vm1483, %v3253, %v3254
      %v3256 = vrot.slane %v1968, 5
      %v3257 = vrot.slane %v3256, 4
      %v3258 = vrot.slane %v1969, 5
      %v3259 = vsel %vm1483, %v3257, %v3258
      %v3260 = vrot.slane %v3258, 4
      %v3261 = vrot.slane %v1970, 5
      %v3262 = vsel %vm1483, %v3260, %v3261
      %s3263 = scalar_lea.vmem %s1, 10
      %v3264 = vld [vmem:[%s3263] sm:$0x3]
      %v3265 = vunpack.c.l.b16 %v3154
      %v3266 = vunpack.c.l.b16 %v3157
      %v3267 = vunpack.c.l.b16 %v3161
      %v3268 = vunpack.c.l.b16 %v3164
      %v3269 = vunpack.c.l.b16 %v3168
      %v3270 = vunpack.c.l.b16 %v3171
      %v3271 = vunpack.c.l.b16 %v3175
      %v3272 = vunpack.c.l.b16 %v3178
      %v3273 = vunpack.c.l.b16 %v3182
      %v3274 = vunpack.c.l.b16 %v3185
      %v3275 = vunpack.c.l.b16 %v3189
      %v3276 = vunpack.c.l.b16 %v3192
      %v3277 = vunpack.c.l.b16 %v3196
      %v3278 = vunpack.c.l.b16 %v3199
      %v3279 = vunpack.c.l.b16 %v3203
      %v3280 = vunpack.c.l.b16 %v3206
      %v3281 = vunpack.c.l.b16 %v3210
      %v3282 = vunpack.c.l.b16 %v3213
      %v3283 = vunpack.c.l.b16 %v3217
      %v3284 = vunpack.c.l.b16 %v3220
      %v3285 = vunpack.c.l.b16 %v3224
      %v3286 = vunpack.c.l.b16 %v3227
      %v3287 = vunpack.c.l.b16 %v3231
      %v3288 = vunpack.c.l.b16 %v3234
      %v3289 = vunpack.c.l.b16 %v3238
      %v3290 = vunpack.c.l.b16 %v3241
      %v3291 = vunpack.c.l.b16 %v3245
      %v3292 = vunpack.c.l.b16 %v3248
      %v3293 = vunpack.c.l.b16 %v3252
      %v3294 = vunpack.c.l.b16 %v3255
      %v3295 = vunpack.c.l.b16 %v3259
      %v3296 = vunpack.c.l.b16 %v3262
      %v3297 = vpack.c.b16 %v3266, %v3265
      %v3298 = vpack.c.b16 %v3268, %v3267
      %v3299 = vpack.c.b16 %v3270, %v3269
      %v3300 = vpack.c.b16 %v3272, %v3271
      %v3301 = vpack.c.b16 %v3274, %v3273
      %v3302 = vpack.c.b16 %v3276, %v3275
      %v3303 = vpack.c.b16 %v3278, %v3277
      %v3304 = vpack.c.b16 %v3280, %v3279
      %v3305 = vpack.c.b16 %v3282, %v3281
      %v3306 = vpack.c.b16 %v3284, %v3283
      %v3307 = vpack.c.b16 %v3286, %v3285
      %v3308 = vpack.c.b16 %v3288, %v3287
      %v3309 = vpack.c.b16 %v3290, %v3289
      %v3310 = vpack.c.b16 %v3292, %v3291
      %v3311 = vpack.c.b16 %v3294, %v3293
      %v3312 = vpack.c.b16 %v3296, %v3295
      %v3314 = vsel %vm410, %v3297, 0
      %v3317 = vsel %vm410, %v3298, 0
      %v3320 = vsel %vm410, %v3299, 0
      %v3323 = vsel %vm410, %v3300, 0
      %v3326 = vsel %vm410, %v3301, 0
      %v3329 = vsel %vm410, %v3302, 0
      %v3332 = vsel %vm410, %v3303, 0
      %v3335 = vsel %vm410, %v3304, 0
      %v3338 = vsel %vm410, %v3305, 0
      %v3341 = vsel %vm410, %v3306, 0
      %v3344 = vsel %vm410, %v3307, 0
      %v3347 = vsel %vm410, %v3308, 0
      %v3350 = vsel %vm410, %v3309, 0
      %v3353 = vsel %vm410, %v3310, 0
      %v3356 = vsel %vm410, %v3311, 0
      %v3359 = vsel %vm410, %v3312, 0
      %v3362 = vsel %vm459, %v3264, 0
      %3364 = vmatprep.subr.bf16.mxu0 0
      %3365 = vmatpush1.bf16.msra.mxu0 %v3362
      %3366 = vmatprep.subr.bf16.mxu0 0
      %3367 = vmatpush1.bf16.msra.mxu0 0
      %3368 = vmatprep.subr.bf16.mxu0 0
      %3369 = vmatpush1.bf16.msra.mxu0 0
      %3370 = vmatprep.subr.bf16.mxu0 0
      %3371 = vmatpush1.bf16.msra.mxu0 0
      %3372 = vmatprep.subr.bf16.mxu0 0
      %3373 = vmatpush1.bf16.msra.mxu0 0
      %3374 = vmatprep.subr.bf16.mxu0 0
      %3375 = vmatpush1.bf16.msra.mxu0 0
      %3376 = vmatprep.subr.bf16.mxu0 0
      %3377 = vmatpush1.bf16.msra.mxu0 0
      %3378 = vmatprep.subr.bf16.mxu0 0
      %3379 = vmatpush1.bf16.msra.mxu0 0
      %3380 = vmatprep.subr.bf16.mxu0 0
      %3381 = vmatpush1.bf16.msra.mxu0 0
      %3382 = vmatprep.subr.bf16.mxu0 0
      %3383 = vmatpush1.bf16.msra.mxu0 0
      %3384 = vmatprep.subr.bf16.mxu0 0
      %3385 = vmatpush1.bf16.msra.mxu0 0
      %3386 = vmatprep.subr.bf16.mxu0 0
      %3387 = vmatpush1.bf16.msra.mxu0 0
      %3388 = vmatprep.subr.bf16.mxu0 0
      %3389 = vmatpush1.bf16.msra.mxu0 0
      %3390 = vmatprep.subr.bf16.mxu0 0
      %3391 = vmatpush1.bf16.msra.mxu0 0
      %3392 = vmatprep.subr.bf16.mxu0 0
      %3393 = vmatpush1.bf16.msra.mxu0 0
      %3394 = vmatprep.subr.bf16.mxu0 0
      %3395 = vmatpush1.bf16.msra.mxu0 0
      %3396 = vmatprep.mubr.bf16.mxu0 0
      %3397 = vmatmul.mubr.bf16.gmra.mrb[0].mxu0 %v3314
      %v3398 = vpop.f32.mrb[0].mxu0
      %v3399 = vadd.f32 0.0, %v3398
      %v3400 = vpop.f32.mrb[0].mxu0
      %v3401 = vpop.f32.mrb[0].mxu0
      %v3402 = vadd.f32 0.0, %v3401
      %v3403 = vpop.f32.mrb[0].mxu0
      %3404 = vmatprep.mubr.bf16.mxu0 0
      %3405 = vmatmul.mubr.bf16.gmra.mrb[0].mxu0 %v3317
      %v3406 = vpop.f32.mrb[0].mxu0
      %v3407 = vadd.f32 0.0, %v3406
      %v3408 = vpop.f32.mrb[0].mxu0
      %v3409 = vpop.f32.mrb[0].mxu0
      %v3410 = vadd.f32 0.0, %v3409
      %v3411 = vpop.f32.mrb[0].mxu0
      %3412 = vmatprep.mubr.bf16.mxu0 0
      %3413 = vmatmul.mubr.bf16.gmra.mrb[0].mxu0 %v3320
      %v3414 = vpop.f32.mrb[0].mxu0
      %v3415 = vadd.f32 0.0, %v3414
      %v3416 = vpop.f32.mrb[0].mxu0
      %v3417 = vpop.f32.mrb[0].mxu0
      %v3418 = vadd.f32 0.0, %v3417
      %v3419 = vpop.f32.mrb[0].mxu0
      %3420 = vmatprep.mubr.bf16.mxu0 0
      %3421 = vmatmul.mubr.bf16.gmra.mrb[0].mxu0 %v3323
      %v3422 = vpop.f32.mrb[0].mxu0
      %v3423 = vadd.f32 0.0, %v3422
      %v3424 = vpop.f32.mrb[0].mxu0
      %v3425 = vpop.f32.mrb[0].mxu0
      %v3426 = vadd.f32 0.0, %v3425
      %v3427 = vpop.f32.mrb[0].mxu0
      %3428 = vmatprep.mubr.bf16.mxu0 0
      %3429 = vmatmul.mubr.bf16.gmra.mrb[0].mxu0 %v3326
      %v3430 = vpop.f32.mrb[0].mxu0
      %v3431 = vadd.f32 0.0, %v3430
      %v3432 = vpop.f32.mrb[0].mxu0
      %v3433 = vpop.f32.mrb[0].mxu0
      %v3434 = vadd.f32 0.0, %v3433
      %v3435 = vpop.f32.mrb[0].mxu0
      %3436 = vmatprep.mubr.bf16.mxu0 0
      %3437 = vmatmul.mubr.bf16.gmra.mrb[0].mxu0 %v3329
      %v3438 = vpop.f32.mrb[0].mxu0
      %v3439 = vadd.f32 0.0, %v3438
      %v3440 = vpop.f32.mrb[0].mxu0
      %v3441 = vpop.f32.mrb[0].mxu0
      %v3442 = vadd.f32 0.0, %v3441
      %v3443 = vpop.f32.mrb[0].mxu0
      %3444 = vmatprep.mubr.bf16.mxu0 0
      %3445 = vmatmul.mubr.bf16.gmra.mrb[0].mxu0 %v3332
      %v3446 = vpop.f32.mrb[0].mxu0
      %v3447 = vadd.f32 0.0, %v3446
      %v3448 = vpop.f32.mrb[0].mxu0
      %v3449 = vpop.f32.mrb[0].mxu0
      %v3450 = vadd.f32 0.0, %v3449
      %v3451 = vpop.f32.mrb[0].mxu0
      %3452 = vmatprep.mubr.bf16.mxu0 0
      %3453 = vmatmul.mubr.bf16.gmra.mrb[0].mxu0 %v3335
      %v3454 = vpop.f32.mrb[0].mxu0
      %v3455 = vadd.f32 0.0, %v3454
      %v3456 = vpop.f32.mrb[0].mxu0
      %v3457 = vpop.f32.mrb[0].mxu0
      %v3458 = vadd.f32 0.0, %v3457
      %v3459 = vpop.f32.mrb[0].mxu0
      %3460 = vmatprep.mubr.bf16.mxu0 0
      %3461 = vmatmul.mubr.bf16.gmra.mrb[0].mxu0 %v3338
      %v3462 = vpop.f32.mrb[0].mxu0
      %v3463 = vadd.f32 0.0, %v3462
      %v3464 = vpop.f32.mrb[0].mxu0
      %v3465 = vpop.f32.mrb[0].mxu0
      %v3466 = vadd.f32 0.0, %v3465
      %v3467 = vpop.f32.mrb[0].mxu0
      %3468 = vmatprep.mubr.bf16.mxu0 0
      %3469 = vmatmul.mubr.bf16.gmra.mrb[0].mxu0 %v3341
      %v3470 = vpop.f32.mrb[0].mxu0
      %v3471 = vadd.f32 0.0, %v3470
      %v3472 = vpop.f32.mrb[0].mxu0
      %v3473 = vpop.f32.mrb[0].mxu0
      %v3474 = vadd.f32 0.0, %v3473
      %v3475 = vpop.f32.mrb[0].mxu0
      %3476 = vmatprep.mubr.bf16.mxu0 0
      %3477 = vmatmul.mubr.bf16.gmra.mrb[0].mxu0 %v3344
      %v3478 = vpop.f32.mrb[0].mxu0
      %v3479 = vadd.f32 0.0, %v3478
      %v3480 = vpop.f32.mrb[0].mxu0
      %v3481 = vpop.f32.mrb[0].mxu0
      %v3482 = vadd.f32 0.0, %v3481
      %v3483 = vpop.f32.mrb[0].mxu0
      %3484 = vmatprep.mubr.bf16.mxu0 0
      %3485 = vmatmul.mubr.bf16.gmra.mrb[0].mxu0 %v3347
      %v3486 = vpop.f32.mrb[0].mxu0
      %v3487 = vadd.f32 0.0, %v3486
      %v3488 = vpop.f32.mrb[0].mxu0
      %v3489 = vpop.f32.mrb[0].mxu0
      %v3490 = vadd.f32 0.0, %v3489
      %v3491 = vpop.f32.mrb[0].mxu0
      %3492 = vmatprep.mubr.bf16.mxu0 0
      %3493 = vmatmul.mubr.bf16.gmra.mrb[0].mxu0 %v3350
      %v3494 = vpop.f32.mrb[0].mxu0
      %v3495 = vadd.f32 0.0, %v3494
      %v3496 = vpop.f32.mrb[0].mxu0
      %v3497 = vpop.f32.mrb[0].mxu0
      %v3498 = vadd.f32 0.0, %v3497
      %v3499 = vpop.f32.mrb[0].mxu0
      %3500 = vmatprep.mubr.bf16.mxu0 0
      %3501 = vmatmul.mubr.bf16.gmra.mrb[0].mxu0 %v3353
      %v3502 = vpop.f32.mrb[0].mxu0
      %v3503 = vadd.f32 0.0, %v3502
      %v3504 = vpop.f32.mrb[0].mxu0
      %v3505 = vpop.f32.mrb[0].mxu0
      %v3506 = vadd.f32 0.0, %v3505
      %v3507 = vpop.f32.mrb[0].mxu0
      %3508 = vmatprep.mubr.bf16.mxu0 0
      %3509 = vmatmul.mubr.bf16.gmra.mrb[0].mxu0 %v3356
      %v3510 = vpop.f32.mrb[0].mxu0
      %v3511 = vadd.f32 0.0, %v3510
      %v3512 = vpop.f32.mrb[0].mxu0
      %v3513 = vpop.f32.mrb[0].mxu0
      %v3514 = vadd.f32 0.0, %v3513
      %v3515 = vpop.f32.mrb[0].mxu0
      %3516 = vmatprep.mubr.bf16.mxu0 0
      %3517 = vmatmul.mubr.bf16.gmra.mrb[0].mxu0 %v3359
      %v3518 = vpop.f32.mrb[0].mxu0
      %v3519 = vadd.f32 0.0, %v3518
      %v3520 = vpop.f32.mrb[0].mxu0
      %v3521 = vpop.f32.mrb[0].mxu0
      %v3522 = vadd.f32 0.0, %v3521
      %v3523 = vpop.f32.mrb[0].mxu0
      %3524 = vdwg.mxu0
      %v3525 = vadd.f32 %v3103, %v3399
      %v3526 = vadd.f32 %v3104, %v3402
      %v3527 = vadd.f32 %v3105, %v3407
      %v3528 = vadd.f32 %v3106, %v3410
      %v3529 = vadd.f32 %v3107, %v3415
      %v3530 = vadd.f32 %v3108, %v3418
      %v3531 = vadd.f32 %v3109, %v3423
      %v3532 = vadd.f32 %v3110, %v3426
      %v3533 = vadd.f32 %v3111, %v3431
      %v3534 = vadd.f32 %v3112, %v3434
      %v3535 = vadd.f32 %v3113, %v3439
      %v3536 = vadd.f32 %v3114, %v3442
      %v3537 = vadd.f32 %v3115, %v3447
      %v3538 = vadd.f32 %v3116, %v3450
      %v3539 = vadd.f32 %v3117, %v3455
      %v3540 = vadd.f32 %v3118, %v3458
      %v3541 = vadd.f32 %v3119, %v3463
      %v3542 = vadd.f32 %v3120, %v3466
      %v3543 = vadd.f32 %v3121, %v3471
      %v3544 = vadd.f32 %v3122, %v3474
      %v3545 = vadd.f32 %v3123, %v3479
      %v3546 = vadd.f32 %v3124, %v3482
      %v3547 = vadd.f32 %v3125, %v3487
      %v3548 = vadd.f32 %v3126, %v3490
      %v3549 = vadd.f32 %v3127, %v3495
      %v3550 = vadd.f32 %v3128, %v3498
      %v3551 = vadd.f32 %v3129, %v3503
      %v3552 = vadd.f32 %v3130, %v3506
      %v3553 = vadd.f32 %v3131, %v3511
      %v3554 = vadd.f32 %v3132, %v3514
      %v3555 = vadd.f32 %v3133, %v3519
      %v3556 = vadd.f32 %v3134, %v3522
      %3557 = vst.msk [vmem:[#allocation2] sm:$0xff] %vm216, %v3525
      %3558 = vst.msk [vmem:[#allocation2 + $0x8] sm:$0xff] %vm216, %v3526
      %3559 = vst.msk [vmem:[#allocation2 + $0x10] sm:$0xff] %vm216, %v3527
      %3560 = vst.msk [vmem:[#allocation2 + $0x18] sm:$0xff] %vm216, %v3528
      %3561 = vst.msk [vmem:[#allocation2 + $0x20] sm:$0xff] %vm216, %v3529
      %3562 = vst.msk [vmem:[#allocation2 + $0x28] sm:$0xff] %vm216, %v3530
      %3563 = vst.msk [vmem:[#allocation2 + $0x30] sm:$0xff] %vm216, %v3531
      %3564 = vst.msk [vmem:[#allocation2 + $0x38] sm:$0xff] %vm216, %v3532
      %3565 = vst.msk [vmem:[#allocation2 + $0x40] sm:$0xff] %vm216, %v3533
      %3566 = vst.msk [vmem:[#allocation2 + $0x48] sm:$0xff] %vm216, %v3534
      %3567 = vst.msk [vmem:[#allocation2 + $0x50] sm:$0xff] %vm216, %v3535
      %3568 = vst.msk [vmem:[#allocation2 + $0x58] sm:$0xff] %vm216, %v3536
      %3569 = vst.msk [vmem:[#allocation2 + $0x60] sm:$0xff] %vm216, %v3537
      %3570 = vst.msk [vmem:[#allocation2 + $0x68] sm:$0xff] %vm216, %v3538
      %3571 = vst.msk [vmem:[#allocation2 + $0x70] sm:$0xff] %vm216, %v3539
      %3572 = vst.msk [vmem:[#allocation2 + $0x78] sm:$0xff] %vm216, %v3540
      %3573 = vst.msk [vmem:[#allocation2 + $0x80] sm:$0xff] %vm216, %v3541
      %3574 = vst.msk [vmem:[#allocation2 + $0x88] sm:$0xff] %vm216, %v3542
      %3575 = vst.msk [vmem:[#allocation2 + $0x90] sm:$0xff] %vm216, %v3543
      %3576 = vst.msk [vmem:[#allocation2 + $0x98] sm:$0xff] %vm216, %v3544
      %3577 = vst.msk [vmem:[#allocation2 + $0xa0] sm:$0xff] %vm216, %v3545
      %3578 = vst.msk [vmem:[#allocation2 + $0xa8] sm:$0xff] %vm216, %v3546
      %3579 = vst.msk [vmem:[#allocation2 + $0xb0] sm:$0xff] %vm216, %v3547
      %3580 = vst.msk [vmem:[#allocation2 + $0xb8] sm:$0xff] %vm216, %v3548
      %3581 = vst.msk [vmem:[#allocation2 + $0xc0] sm:$0xff] %vm216, %v3549
      %3582 = vst.msk [vmem:[#allocation2 + $0xc8] sm:$0xff] %vm216, %v3550
      %3583 = vst.msk [vmem:[#allocation2 + $0xd0] sm:$0xff] %vm216, %v3551
      %3584 = vst.msk [vmem:[#allocation2 + $0xd8] sm:$0xff] %vm216, %v3552
      %3585 = vst.msk [vmem:[#allocation2 + $0xe0] sm:$0xff] %vm216, %v3553
      %3586 = vst.msk [vmem:[#allocation2 + $0xe8] sm:$0xff] %vm216, %v3554
      %3587 = vst.msk [vmem:[#allocation2 + $0xf0] sm:$0xff] %vm216, %v3555
      %3588 = vst.msk [vmem:[#allocation2 + $0xf8] sm:$0xff] %vm216, %v3556
      %s3589 = scalar_lea.vmem %s197, 24
      %v3590 = vld [vmem:[%s3589] sm:$0xf]
      %v3591 = vld [vmem:[%s3589 + $0x4] sm:$0xf]
      %v3592 = vld [vmem:[%s3589 + $0x8] sm:$0x1]
      %v3593 = vld [vmem:[%s3589 + $0xc] sm:$0xf]
      %v3594 = vld [vmem:[%s3589 + $0x10] sm:$0xf]
      %v3595 = vld [vmem:[%s3589 + $0x14] sm:$0x1]
      %v3596 = vld [vmem:[%s3589 + $0x18] sm:$0xf]
      %v3597 = vld [vmem:[%s3589 + $0x1c] sm:$0xf]
      %v3598 = vld [vmem:[%s3589 + $0x20] sm:$0x1]
      %v3599 = vld [vmem:[%s3589 + $0x24] sm:$0xf]
      %v3600 = vld [vmem:[%s3589 + $0x28] sm:$0xf]
      %v3601 = vld [vmem:[%s3589 + $0x2c] sm:$0x1]
      %v3602 = vld [vmem:[%s3589 + $0x30] sm:$0xf]
      %v3603 = vld [vmem:[%s3589 + $0x34] sm:$0xf]
      %v3604 = vld [vmem:[%s3589 + $0x38] sm:$0x1]
      %v3605 = vld [vmem:[%s3589 + $0x3c] sm:$0xf]
      %v3606 = vld [vmem:[%s3589 + $0x40] sm:$0xf]
      %v3607 = vld [vmem:[%s3589 + $0x44] sm:$0x1]
      %v3608 = vld [vmem:[%s3589 + $0x48] sm:$0xf]
      %v3609 = vld [vmem:[%s3589 + $0x4c] sm:$0xf]
      %v3610 = vld [vmem:[%s3589 + $0x50] sm:$0x1]
      %v3611 = vld [vmem:[%s3589 + $0x54] sm:$0xf]
      %v3612 = vld [vmem:[%s3589 + $0x58] sm:$0xf]
      %v3613 = vld [vmem:[%s3589 + $0x5c] sm:$0x1]
      %v3614 = vld [vmem:[%s3589 + $0x60] sm:$0xf]
      %v3615 = vld [vmem:[%s3589 + $0x64] sm:$0xf]
      %v3616 = vld [vmem:[%s3589 + $0x68] sm:$0x1]
      %v3617 = vld [vmem:[%s3589 + $0x6c] sm:$0xf]
      %v3618 = vld [vmem:[%s3589 + $0x70] sm:$0xf]
      %v3619 = vld [vmem:[%s3589 + $0x74] sm:$0x1]
      %v3620 = vld [vmem:[%s3589 + $0x78] sm:$0xf]
      %v3621 = vld [vmem:[%s3589 + $0x7c] sm:$0xf]
      %v3622 = vld [vmem:[%s3589 + $0x80] sm:$0x1]
      %v3623 = vld [vmem:[%s3589 + $0x84] sm:$0xf]
      %v3624 = vld [vmem:[%s3589 + $0x88] sm:$0xf]
      %v3625 = vld [vmem:[%s3589 + $0x8c] sm:$0x1]
      %v3626 = vld [vmem:[%s3589 + $0x90] sm:$0xf]
      %v3627 = vld [vmem:[%s3589 + $0x94] sm:$0xf]
      %v3628 = vld [vmem:[%s3589 + $0x98] sm:$0x1]
      %v3629 = vld [vmem:[%s3589 + $0x9c] sm:$0xf]
      %v3630 = vld [vmem:[%s3589 + $0xa0] sm:$0xf]
      %v3631 = vld [vmem:[%s3589 + $0xa4] sm:$0x1]
      %v3632 = vld [vmem:[%s3589 + $0xa8] sm:$0xf]
      %v3633 = vld [vmem:[%s3589 + $0xac] sm:$0xf]
      %v3634 = vld [vmem:[%s3589 + $0xb0] sm:$0x1]
      %v3635 = vld [vmem:[%s3589 + $0xb4] sm:$0xf]
      %v3636 = vld [vmem:[%s3589 + $0xb8] sm:$0xf]
      %v3637 = vld [vmem:[%s3589 + $0xbc] sm:$0x1]
      %v3638 = vld [vmem:[#allocation2] sm:$0xff]
      %v3639 = vld [vmem:[#allocation2 + $0x8] sm:$0xff]
      %v3640 = vld [vmem:[#allocation2 + $0x10] sm:$0xff]
      %v3641 = vld [vmem:[#allocation2 + $0x18] sm:$0xff]
      %v3642 = vld [vmem:[#allocation2 + $0x20] sm:$0xff]
      %v3643 = vld [vmem:[#allocation2 + $0x28] sm:$0xff]
      %v3644 = vld [vmem:[#allocation2 + $0x30] sm:$0xff]
      %v3645 = vld [vmem:[#allocation2 + $0x38] sm:$0xff]
      %v3646 = vld [vmem:[#allocation2 + $0x40] sm:$0xff]
      %v3647 = vld [vmem:[#allocation2 + $0x48] sm:$0xff]
      %v3648 = vld [vmem:[#allocation2 + $0x50] sm:$0xff]
      %v3649 = vld [vmem:[#allocation2 + $0x58] sm:$0xff]
      %v3650 = vld [vmem:[#allocation2 + $0x60] sm:$0xff]
      %v3651 = vld [vmem:[#allocation2 + $0x68] sm:$0xff]
      %v3652 = vld [vmem:[#allocation2 + $0x70] sm:$0xff]
      %v3653 = vld [vmem:[#allocation2 + $0x78] sm:$0xff]
      %v3654 = vld [vmem:[#allocation2 + $0x80] sm:$0xff]
      %v3655 = vld [vmem:[#allocation2 + $0x88] sm:$0xff]
      %v3656 = vld [vmem:[#allocation2 + $0x90] sm:$0xff]
      %v3657 = vld [vmem:[#allocation2 + $0x98] sm:$0xff]
      %v3658 = vld [vmem:[#allocation2 + $0xa0] sm:$0xff]
      %v3659 = vld [vmem:[#allocation2 + $0xa8] sm:$0xff]
      %v3660 = vld [vmem:[#allocation2 + $0xb0] sm:$0xff]
      %v3661 = vld [vmem:[#allocation2 + $0xb8] sm:$0xff]
      %v3662 = vld [vmem:[#allocation2 + $0xc0] sm:$0xff]
      %v3663 = vld [vmem:[#allocation2 + $0xc8] sm:$0xff]
      %v3664 = vld [vmem:[#allocation2 + $0xd0] sm:$0xff]
      %v3665 = vld [vmem:[#allocation2 + $0xd8] sm:$0xff]
      %v3666 = vld [vmem:[#allocation2 + $0xe0] sm:$0xff]
      %v3667 = vld [vmem:[#allocation2 + $0xe8] sm:$0xff]
      %v3668 = vld [vmem:[#allocation2 + $0xf0] sm:$0xff]
      %v3669 = vld [vmem:[#allocation2 + $0xf8] sm:$0xff]
      %s3670 = scalar_lea.vmem %s1, 12
      %v3671 = vld [vmem:[%s3670] sm:$0x3]
      %v3704 = vunpack.c.l.b16 %v3590
      %v3705 = vunpack.c.l.b16 %v3591
      %v3706 = vunpack.c.l.b16 %v3593
      %v3707 = vunpack.c.l.b16 %v3594
      %v3708 = vunpack.c.l.b16 %v3596
      %v3709 = vunpack.c.l.b16 %v3597
      %v3710 = vunpack.c.l.b16 %v3599
      %v3711 = vunpack.c.l.b16 %v3600
      %v3712 = vunpack.c.l.b16 %v3602
      %v3713 = vunpack.c.l.b16 %v3603
      %v3714 = vunpack.c.l.b16 %v3605
      %v3715 = vunpack.c.l.b16 %v3606
      %v3716 = vunpack.c.l.b16 %v3608
      %v3717 = vunpack.c.l.b16 %v3609
      %v3718 = vunpack.c.l.b16 %v3611
      %v3719 = vunpack.c.l.b16 %v3612
      %v3720 = vunpack.c.l.b16 %v3614
      %v3721 = vunpack.c.l.b16 %v3615
      %v3722 = vunpack.c.l.b16 %v3617
      %v3723 = vunpack.c.l.b16 %v3618
      %v3724 = vunpack.c.l.b16 %v3620
      %v3725 = vunpack.c.l.b16 %v3621
      %v3726 = vunpack.c.l.b16 %v3623
      %v3727 = vunpack.c.l.b16 %v3624
      %v3728 = vunpack.c.l.b16 %v3626
      %v3729 = vunpack.c.l.b16 %v3627
      %v3730 = vunpack.c.l.b16 %v3629
      %v3731 = vunpack.c.l.b16 %v3630
      %v3732 = vunpack.c.l.b16 %v3632
      %v3733 = vunpack.c.l.b16 %v3633
      %v3734 = vunpack.c.l.b16 %v3635
      %v3735 = vunpack.c.l.b16 %v3636
      %v3736 = vpack.c.b16 %v3705, %v3704
      %v3737 = vpack.c.b16 %v3707, %v3706
      %v3738 = vpack.c.b16 %v3709, %v3708
      %v3739 = vpack.c.b16 %v3711, %v3710
      %v3740 = vpack.c.b16 %v3713, %v3712
      %v3741 = vpack.c.b16 %v3715, %v3714
      %v3742 = vpack.c.b16 %v3717, %v3716
      %v3743 = vpack.c.b16 %v3719, %v3718
      %v3744 = vpack.c.b16 %v3721, %v3720
      %v3745 = vpack.c.b16 %v3723, %v3722
      %v3746 = vpack.c.b16 %v3725, %v3724
      %v3747 = vpack.c.b16 %v3727, %v3726
      %v3748 = vpack.c.b16 %v3729, %v3728
      %v3749 = vpack.c.b16 %v3731, %v3730
      %v3750 = vpack.c.b16 %v3733, %v3732
      %v3751 = vpack.c.b16 %v3735, %v3734
      %v3753 = vsel %vm410, %v3736, 0
      %v3756 = vsel %vm410, %v3737, 0
      %v3759 = vsel %vm410, %v3738, 0
      %v3762 = vsel %vm410, %v3739, 0
      %v3765 = vsel %vm410, %v3740, 0
      %v3768 = vsel %vm410, %v3741, 0
      %v3771 = vsel %vm410, %v3742, 0
      %v3774 = vsel %vm410, %v3743, 0
      %v3777 = vsel %vm410, %v3744, 0
      %v3780 = vsel %vm410, %v3745, 0
      %v3783 = vsel %vm410, %v3746, 0
      %v3786 = vsel %vm410, %v3747, 0
      %v3789 = vsel %vm410, %v3748, 0
      %v3792 = vsel %vm410, %v3749, 0
      %v3795 = vsel %vm410, %v3750, 0
      %v3798 = vsel %vm410, %v3751, 0
      %v3801 = vsel %vm459, %v3671, 0
      %3803 = vmatprep.subr.bf16.mxu0 0
      %3804 = vmatpush1.bf16.msra.mxu0 %v3801
      %3805 = vmatprep.subr.bf16.mxu0 0
      %3806 = vmatpush1.bf16.msra.mxu0 0
      %3807 = vmatprep.subr.bf16.mxu0 0
      %3808 = vmatpush1.bf16.msra.mxu0 0
      %3809 = vmatprep.subr.bf16.mxu0 0
      %3810 = vmatpush1.bf16.msra.mxu0 0
      %3811 = vmatprep.subr.bf16.mxu0 0
      %3812 = vmatpush1.bf16.msra.mxu0 0
      %3813 = vmatprep.subr.bf16.mxu0 0
      %3814 = vmatpush1.bf16.msra.mxu0 0
      %3815 = vmatprep.subr.bf16.mxu0 0
      %3816 = vmatpush1.bf16.msra.mxu0 0
      %3817 = vmatprep.subr.bf16.mxu0 0
      %3818 = vmatpush1.bf16.msra.mxu0 0
      %3819 = vmatprep.subr.bf16.mxu0 0
      %3820 = vmatpush1.bf16.msra.mxu0 0
      %3821 = vmatprep.subr.bf16.mxu0 0
      %3822 = vmatpush1.bf16.msra.mxu0 0
      %3823 = vmatprep.subr.bf16.mxu0 0
      %3824 = vmatpush1.bf16.msra.mxu0 0
      %3825 = vmatprep.subr.bf16.mxu0 0
      %3826 = vmatpush1.bf16.msra.mxu0 0
      %3827 = vmatprep.subr.bf16.mxu0 0
      %3828 = vmatpush1.bf16.msra.mxu0 0
      %3829 = vmatprep.subr.bf16.mxu0 0
      %3830 = vmatpush1.bf16.msra.mxu0 0
      %3831 = vmatprep.subr.bf16.mxu0 0
      %3832 = vmatpush1.bf16.msra.mxu0 0
      %3833 = vmatprep.subr.bf16.mxu0 0
      %3834 = vmatpush1.bf16.msra.mxu0 0
      %3835 = vmatprep.mubr.bf16.mxu0 0
      %3836 = vmatmul.mubr.bf16.gmra.mrb[0].mxu0 %v3753
      %v3837 = vpop.f32.mrb[0].mxu0
      %v3838 = vadd.f32 0.0, %v3837
      %v3839 = vpop.f32.mrb[0].mxu0
      %v3840 = vpop.f32.mrb[0].mxu0
      %v3841 = vadd.f32 0.0, %v3840
      %v3842 = vpop.f32.mrb[0].mxu0
      %3843 = vmatprep.mubr.bf16.mxu0 0
      %3844 = vmatmul.mubr.bf16.gmra.mrb[0].mxu0 %v3756
      %v3845 = vpop.f32.mrb[0].mxu0
      %v3846 = vadd.f32 0.0, %v3845
      %v3847 = vpop.f32.mrb[0].mxu0
      %v3848 = vpop.f32.mrb[0].mxu0
      %v3849 = vadd.f32 0.0, %v3848
      %v3850 = vpop.f32.mrb[0].mxu0
      %3851 = vmatprep.mubr.bf16.mxu0 0
      %3852 = vmatmul.mubr.bf16.gmra.mrb[0].mxu0 %v3759
      %v3853 = vpop.f32.mrb[0].mxu0
      %v3854 = vadd.f32 0.0, %v3853
      %v3855 = vpop.f32.mrb[0].mxu0
      %v3856 = vpop.f32.mrb[0].mxu0
      %v3857 = vadd.f32 0.0, %v3856
      %v3858 = vpop.f32.mrb[0].mxu0
      %3859 = vmatprep.mubr.bf16.mxu0 0
      %3860 = vmatmul.mubr.bf16.gmra.mrb[0].mxu0 %v3762
      %v3861 = vpop.f32.mrb[0].mxu0
      %v3862 = vadd.f32 0.0, %v3861
      %v3863 = vpop.f32.mrb[0].mxu0
      %v3864 = vpop.f32.mrb[0].mxu0
      %v3865 = vadd.f32 0.0, %v3864
      %v3866 = vpop.f32.mrb[0].mxu0
      %3867 = vmatprep.mubr.bf16.mxu0 0
      %3868 = vmatmul.mubr.bf16.gmra.mrb[0].mxu0 %v3765
      %v3869 = vpop.f32.mrb[0].mxu0
      %v3870 = vadd.f32 0.0, %v3869
      %v3871 = vpop.f32.mrb[0].mxu0
      %v3872 = vpop.f32.mrb[0].mxu0
      %v3873 = vadd.f32 0.0, %v3872
      %v3874 = vpop.f32.mrb[0].mxu0
      %3875 = vmatprep.mubr.bf16.mxu0 0
      %3876 = vmatmul.mubr.bf16.gmra.mrb[0].mxu0 %v3768
      %v3877 = vpop.f32.mrb[0].mxu0
      %v3878 = vadd.f32 0.0, %v3877
      %v3879 = vpop.f32.mrb[0].mxu0
      %v3880 = vpop.f32.mrb[0].mxu0
      %v3881 = vadd.f32 0.0, %v3880
      %v3882 = vpop.f32.mrb[0].mxu0
      %3883 = vmatprep.mubr.bf16.mxu0 0
      %3884 = vmatmul.mubr.bf16.gmra.mrb[0].mxu0 %v3771
      %v3885 = vpop.f32.mrb[0].mxu0
      %v3886 = vadd.f32 0.0, %v3885
      %v3887 = vpop.f32.mrb[0].mxu0
      %v3888 = vpop.f32.mrb[0].mxu0
      %v3889 = vadd.f32 0.0, %v3888
      %v3890 = vpop.f32.mrb[0].mxu0
      %3891 = vmatprep.mubr.bf16.mxu0 0
      %3892 = vmatmul.mubr.bf16.gmra.mrb[0].mxu0 %v3774
      %v3893 = vpop.f32.mrb[0].mxu0
      %v3894 = vadd.f32 0.0, %v3893
      %v3895 = vpop.f32.mrb[0].mxu0
      %v3896 = vpop.f32.mrb[0].mxu0
      %v3897 = vadd.f32 0.0, %v3896
      %v3898 = vpop.f32.mrb[0].mxu0
      %3899 = vmatprep.mubr.bf16.mxu0 0
      %3900 = vmatmul.mubr.bf16.gmra.mrb[0].mxu0 %v3777
      %v3901 = vpop.f32.mrb[0].mxu0
      %v3902 = vadd.f32 0.0, %v3901
      %v3903 = vpop.f32.mrb[0].mxu0
      %v3904 = vpop.f32.mrb[0].mxu0
      %v3905 = vadd.f32 0.0, %v3904
      %v3906 = vpop.f32.mrb[0].mxu0
      %3907 = vmatprep.mubr.bf16.mxu0 0
      %3908 = vmatmul.mubr.bf16.gmra.mrb[0].mxu0 %v3780
      %v3909 = vpop.f32.mrb[0].mxu0
      %v3910 = vadd.f32 0.0, %v3909
      %v3911 = vpop.f32.mrb[0].mxu0
      %v3912 = vpop.f32.mrb[0].mxu0
      %v3913 = vadd.f32 0.0, %v3912
      %v3914 = vpop.f32.mrb[0].mxu0
      %3915 = vmatprep.mubr.bf16.mxu0 0
      %3916 = vmatmul.mubr.bf16.gmra.mrb[0].mxu0 %v3783
      %v3917 = vpop.f32.mrb[0].mxu0
      %v3918 = vadd.f32 0.0, %v3917
      %v3919 = vpop.f32.mrb[0].mxu0
      %v3920 = vpop.f32.mrb[0].mxu0
      %v3921 = vadd.f32 0.0, %v3920
      %v3922 = vpop.f32.mrb[0].mxu0
      %3923 = vmatprep.mubr.bf16.mxu0 0
      %3924 = vmatmul.mubr.bf16.gmra.mrb[0].mxu0 %v3786
      %v3925 = vpop.f32.mrb[0].mxu0
      %v3926 = vadd.f32 0.0, %v3925
      %v3927 = vpop.f32.mrb[0].mxu0
      %v3928 = vpop.f32.mrb[0].mxu0
      %v3929 = vadd.f32 0.0, %v3928
      %v3930 = vpop.f32.mrb[0].mxu0
      %3931 = vmatprep.mubr.bf16.mxu0 0
      %3932 = vmatmul.mubr.bf16.gmra.mrb[0].mxu0 %v3789
      %v3933 = vpop.f32.mrb[0].mxu0
      %v3934 = vadd.f32 0.0, %v3933
      %v3935 = vpop.f32.mrb[0].mxu0
      %v3936 = vpop.f32.mrb[0].mxu0
      %v3937 = vadd.f32 0.0, %v3936
      %v3938 = vpop.f32.mrb[0].mxu0
      %3939 = vmatprep.mubr.bf16.mxu0 0
      %3940 = vmatmul.mubr.bf16.gmra.mrb[0].mxu0 %v3792
      %v3941 = vpop.f32.mrb[0].mxu0
      %v3942 = vadd.f32 0.0, %v3941
      %v3943 = vpop.f32.mrb[0].mxu0
      %v3944 = vpop.f32.mrb[0].mxu0
      %v3945 = vadd.f32 0.0, %v3944
      %v3946 = vpop.f32.mrb[0].mxu0
      %3947 = vmatprep.mubr.bf16.mxu0 0
      %3948 = vmatmul.mubr.bf16.gmra.mrb[0].mxu0 %v3795
      %v3949 = vpop.f32.mrb[0].mxu0
      %v3950 = vadd.f32 0.0, %v3949
      %v3951 = vpop.f32.mrb[0].mxu0
      %v3952 = vpop.f32.mrb[0].mxu0
      %v3953 = vadd.f32 0.0, %v3952
      %v3954 = vpop.f32.mrb[0].mxu0
      %3955 = vmatprep.mubr.bf16.mxu0 0
      %3956 = vmatmul.mubr.bf16.gmra.mrb[0].mxu0 %v3798
      %v3957 = vpop.f32.mrb[0].mxu0
      %v3958 = vadd.f32 0.0, %v3957
      %v3959 = vpop.f32.mrb[0].mxu0
      %v3960 = vpop.f32.mrb[0].mxu0
      %v3961 = vadd.f32 0.0, %v3960
      %v3962 = vpop.f32.mrb[0].mxu0
      %3963 = vdwg.mxu0
      %v3964 = vadd.f32 %v3638, %v3838
      %v3965 = vadd.f32 %v3639, %v3841
      %v3966 = vadd.f32 %v3640, %v3846
      %v3967 = vadd.f32 %v3641, %v3849
      %v3968 = vadd.f32 %v3642, %v3854
      %v3969 = vadd.f32 %v3643, %v3857
      %v3970 = vadd.f32 %v3644, %v3862
      %v3971 = vadd.f32 %v3645, %v3865
      %v3972 = vadd.f32 %v3646, %v3870
      %v3973 = vadd.f32 %v3647, %v3873
      %v3974 = vadd.f32 %v3648, %v3878
      %v3975 = vadd.f32 %v3649, %v3881
      %v3976 = vadd.f32 %v3650, %v3886
      %v3977 = vadd.f32 %v3651, %v3889
      %v3978 = vadd.f32 %v3652, %v3894
      %v3979 = vadd.f32 %v3653, %v3897
      %v3980 = vadd.f32 %v3654, %v3902
      %v3981 = vadd.f32 %v3655, %v3905
      %v3982 = vadd.f32 %v3656, %v3910
      %v3983 = vadd.f32 %v3657, %v3913
      %v3984 = vadd.f32 %v3658, %v3918
      %v3985 = vadd.f32 %v3659, %v3921
      %v3986 = vadd.f32 %v3660, %v3926
      %v3987 = vadd.f32 %v3661, %v3929
      %v3988 = vadd.f32 %v3662, %v3934
      %v3989 = vadd.f32 %v3663, %v3937
      %v3990 = vadd.f32 %v3664, %v3942
      %v3991 = vadd.f32 %v3665, %v3945
      %v3992 = vadd.f32 %v3666, %v3950
      %v3993 = vadd.f32 %v3667, %v3953
      %v3994 = vadd.f32 %v3668, %v3958
      %v3995 = vadd.f32 %v3669, %v3961
      %3996 = vst.msk [vmem:[#allocation2] sm:$0xff] %vm216, %v3964
      %3997 = vst.msk [vmem:[#allocation2 + $0x8] sm:$0xff] %vm216, %v3965
      %3998 = vst.msk [vmem:[#allocation2 + $0x10] sm:$0xff] %vm216, %v3966
      %3999 = vst.msk [vmem:[#allocation2 + $0x18] sm:$0xff] %vm216, %v3967
      %4000 = vst.msk [vmem:[#allocation2 + $0x20] sm:$0xff] %vm216, %v3968
      %4001 = vst.msk [vmem:[#allocation2 + $0x28] sm:$0xff] %vm216, %v3969
      %4002 = vst.msk [vmem:[#allocation2 + $0x30] sm:$0xff] %vm216, %v3970
      %4003 = vst.msk [vmem:[#allocation2 + $0x38] sm:$0xff] %vm216, %v3971
      %4004 = vst.msk [vmem:[#allocation2 + $0x40] sm:$0xff] %vm216, %v3972
      %4005 = vst.msk [vmem:[#allocation2 + $0x48] sm:$0xff] %vm216, %v3973
      %4006 = vst.msk [vmem:[#allocation2 + $0x50] sm:$0xff] %vm216, %v3974
      %4007 = vst.msk [vmem:[#allocation2 + $0x58] sm:$0xff] %vm216, %v3975
      %4008 = vst.msk [vmem:[#allocation2 + $0x60] sm:$0xff] %vm216, %v3976
      %4009 = vst.msk [vmem:[#allocation2 + $0x68] sm:$0xff] %vm216, %v3977
      %4010 = vst.msk [vmem:[#allocation2 + $0x70] sm:$0xff] %vm216, %v3978
      %4011 = vst.msk [vmem:[#allocation2 + $0x78] sm:$0xff] %vm216, %v3979
      %4012 = vst.msk [vmem:[#allocation2 + $0x80] sm:$0xff] %vm216, %v3980
      %4013 = vst.msk [vmem:[#allocation2 + $0x88] sm:$0xff] %vm216, %v3981
      %4014 = vst.msk [vmem:[#allocation2 + $0x90] sm:$0xff] %vm216, %v3982
      %4015 = vst.msk [vmem:[#allocation2 + $0x98] sm:$0xff] %vm216, %v3983
      %4016 = vst.msk [vmem:[#allocation2 + $0xa0] sm:$0xff] %vm216, %v3984
      %4017 = vst.msk [vmem:[#allocation2 + $0xa8] sm:$0xff] %vm216, %v3985
      %4018 = vst.msk [vmem:[#allocation2 + $0xb0] sm:$0xff] %vm216, %v3986
      %4019 = vst.msk [vmem:[#allocation2 + $0xb8] sm:$0xff] %vm216, %v3987
      %4020 = vst.msk [vmem:[#allocation2 + $0xc0] sm:$0xff] %vm216, %v3988
      %4021 = vst.msk [vmem:[#allocation2 + $0xc8] sm:$0xff] %vm216, %v3989
      %4022 = vst.msk [vmem:[#allocation2 + $0xd0] sm:$0xff] %vm216, %v3990
      %4023 = vst.msk [vmem:[#allocation2 + $0xd8] sm:$0xff] %vm216, %v3991
      %4024 = vst.msk [vmem:[#allocation2 + $0xe0] sm:$0xff] %vm216, %v3992
      %4025 = vst.msk [vmem:[#allocation2 + $0xe8] sm:$0xff] %vm216, %v3993
      %4026 = vst.msk [vmem:[#allocation2 + $0xf0] sm:$0xff] %vm216, %v3994
      %4027 = vst.msk [vmem:[#allocation2 + $0xf8] sm:$0xff] %vm216, %v3995
      %v4028 = vld [vmem:[#allocation2] sm:$0xff]
      %v4029 = vld [vmem:[#allocation2 + $0x8] sm:$0xff]
      %v4030 = vld [vmem:[#allocation2 + $0x10] sm:$0xff]
      %v4031 = vld [vmem:[#allocation2 + $0x18] sm:$0xff]
      %v4032 = vld [vmem:[#allocation2 + $0x20] sm:$0xff]
      %v4033 = vld [vmem:[#allocation2 + $0x28] sm:$0xff]
      %v4034 = vld [vmem:[#allocation2 + $0x30] sm:$0xff]
      %v4035 = vld [vmem:[#allocation2 + $0x38] sm:$0xff]
      %v4036 = vld [vmem:[#allocation2 + $0x40] sm:$0xff]
      %v4037 = vld [vmem:[#allocation2 + $0x48] sm:$0xff]
      %v4038 = vld [vmem:[#allocation2 + $0x50] sm:$0xff]
      %v4039 = vld [vmem:[#allocation2 + $0x58] sm:$0xff]
      %v4040 = vld [vmem:[#allocation2 + $0x60] sm:$0xff]
      %v4041 = vld [vmem:[#allocation2 + $0x68] sm:$0xff]
      %v4042 = vld [vmem:[#allocation2 + $0x70] sm:$0xff]
      %v4043 = vld [vmem:[#allocation2 + $0x78] sm:$0xff]
      %v4044 = vld [vmem:[#allocation2 + $0x80] sm:$0xff]
      %v4045 = vld [vmem:[#allocation2 + $0x88] sm:$0xff]
      %v4046 = vld [vmem:[#allocation2 + $0x90] sm:$0xff]
      %v4047 = vld [vmem:[#allocation2 + $0x98] sm:$0xff]
      %v4048 = vld [vmem:[#allocation2 + $0xa0] sm:$0xff]
      %v4049 = vld [vmem:[#allocation2 + $0xa8] sm:$0xff]
      %v4050 = vld [vmem:[#allocation2 + $0xb0] sm:$0xff]
      %v4051 = vld [vmem:[#allocation2 + $0xb8] sm:$0xff]
      %v4052 = vld [vmem:[#allocation2 + $0xc0] sm:$0xff]
      %v4053 = vld [vmem:[#allocation2 + $0xc8] sm:$0xff]
      %v4054 = vld [vmem:[#allocation2 + $0xd0] sm:$0xff]
      %v4055 = vld [vmem:[#allocation2 + $0xd8] sm:$0xff]
      %v4056 = vld [vmem:[#allocation2 + $0xe0] sm:$0xff]
      %v4057 = vld [vmem:[#allocation2 + $0xe8] sm:$0xff]
      %v4058 = vld [vmem:[#allocation2 + $0xf0] sm:$0xff]
      %v4059 = vld [vmem:[#allocation2 + $0xf8] sm:$0xff]
      %v4061 = vshrl.u32 %v3590, 16
      %v4063 = vrot.slane %v4061, 4
      %v4064 = vshll.u32 %v3590, 16
      %v4066 = vrot.slane %v4064, 5
      %v4067 = vor.u32 %v4063, %v4066
      %v4068 = vrot.slane %v4067, 4
      %v4070 = vshll.u32 %v3591, 16
      %v4072 = vrot.slane %v4070, 5
      %v4073 = vsel %vm722, %v4068, %v4072
      %v4074 = vshrl.u32 %v3591, 16
      %v4076 = vrot.slane %v4074, 4
      %v4077 = vor.u32 %v4076, %v4072
      %v4078 = vrot.slane %v4077, 4
      %v4080 = vshll.u32 %v3592, 16
      %v4082 = vrot.slane %v4080, 5
      %v4083 = vsel %vm722, %v4078, %v4082
      %v4085 = vshrl.u32 %v3593, 16
      %v4087 = vrot.slane %v4085, 4
      %v4088 = vshll.u32 %v3593, 16
      %v4090 = vrot.slane %v4088, 5
      %v4091 = vor.u32 %v4087, %v4090
      %v4092 = vrot.slane %v4091, 4
      %v4094 = vshll.u32 %v3594, 16
      %v4096 = vrot.slane %v4094, 5
      %v4097 = vsel %vm722, %v4092, %v4096
      %v4098 = vshrl.u32 %v3594, 16
      %v4100 = vrot.slane %v4098, 4
      %v4101 = vor.u32 %v4100, %v4096
      %v4102 = vrot.slane %v4101, 4
      %v4104 = vshll.u32 %v3595, 16
      %v4106 = vrot.slane %v4104, 5
      %v4107 = vsel %vm722, %v4102, %v4106
      %v4109 = vshrl.u32 %v3596, 16
      %v4111 = vrot.slane %v4109, 4
      %v4112 = vshll.u32 %v3596, 16
      %v4114 = vrot.slane %v4112, 5
      %v4115 = vor.u32 %v4111, %v4114
      %v4116 = vrot.slane %v4115, 4
      %v4118 = vshll.u32 %v3597, 16
      %v4120 = vrot.slane %v4118, 5
      %v4121 = vsel %vm722, %v4116, %v4120
      %v4122 = vshrl.u32 %v3597, 16
      %v4124 = vrot.slane %v4122, 4
      %v4125 = vor.u32 %v4124, %v4120
      %v4126 = vrot.slane %v4125, 4
      %v4128 = vshll.u32 %v3598, 16
      %v4130 = vrot.slane %v4128, 5
      %v4131 = vsel %vm722, %v4126, %v4130
      %v4133 = vshrl.u32 %v3599, 16
      %v4135 = vrot.slane %v4133, 4
      %v4136 = vshll.u32 %v3599, 16
      %v4138 = vrot.slane %v4136, 5
      %v4139 = vor.u32 %v4135, %v4138
      %v4140 = vrot.slane %v4139, 4
      %v4142 = vshll.u32 %v3600, 16
      %v4144 = vrot.slane %v4142, 5
      %v4145 = vsel %vm722, %v4140, %v4144
      %v4146 = vshrl.u32 %v3600, 16
      %v4148 = vrot.slane %v4146, 4
      %v4149 = vor.u32 %v4148, %v4144
      %v4150 = vrot.slane %v4149, 4
      %v4152 = vshll.u32 %v3601, 16
      %v4154 = vrot.slane %v4152, 5
      %v4155 = vsel %vm722, %v4150, %v4154
      %v4157 = vshrl.u32 %v3602, 16
      %v4159 = vrot.slane %v4157, 4
      %v4160 = vshll.u32 %v3602, 16
      %v4162 = vrot.slane %v4160, 5
      %v4163 = vor.u32 %v4159, %v4162
      %v4164 = vrot.slane %v4163, 4
      %v4166 = vshll.u32 %v3603, 16
      %v4168 = vrot.slane %v4166, 5
      %v4169 = vsel %vm722, %v4164, %v4168
      %v4170 = vshrl.u32 %v3603, 16
      %v4172 = vrot.slane %v4170, 4
      %v4173 = vor.u32 %v4172, %v4168
      %v4174 = vrot.slane %v4173, 4
      %v4176 = vshll.u32 %v3604, 16
      %v4178 = vrot.slane %v4176, 5
      %v4179 = vsel %vm722, %v4174, %v4178
      %v4181 = vshrl.u32 %v3605, 16
      %v4183 = vrot.slane %v4181, 4
      %v4184 = vshll.u32 %v3605, 16
      %v4186 = vrot.slane %v4184, 5
      %v4187 = vor.u32 %v4183, %v4186
      %v4188 = vrot.slane %v4187, 4
      %v4190 = vshll.u32 %v3606, 16
      %v4192 = vrot.slane %v4190, 5
      %v4193 = vsel %vm722, %v4188, %v4192
      %v4194 = vshrl.u32 %v3606, 16
      %v4196 = vrot.slane %v4194, 4
      %v4197 = vor.u32 %v4196, %v4192
      %v4198 = vrot.slane %v4197, 4
      %v4200 = vshll.u32 %v3607, 16
      %v4202 = vrot.slane %v4200, 5
      %v4203 = vsel %vm722, %v4198, %v4202
      %v4205 = vshrl.u32 %v3608, 16
      %v4207 = vrot.slane %v4205, 4
      %v4208 = vshll.u32 %v3608, 16
      %v4210 = vrot.slane %v4208, 5
      %v4211 = vor.u32 %v4207, %v4210
      %v4212 = vrot.slane %v4211, 4
      %v4214 = vshll.u32 %v3609, 16
      %v4216 = vrot.slane %v4214, 5
      %v4217 = vsel %vm722, %v4212, %v4216
      %v4218 = vshrl.u32 %v3609, 16
      %v4220 = vrot.slane %v4218, 4
      %v4221 = vor.u32 %v4220, %v4216
      %v4222 = vrot.slane %v4221, 4
      %v4224 = vshll.u32 %v3610, 16
      %v4226 = vrot.slane %v4224, 5
      %v4227 = vsel %vm722, %v4222, %v4226
      %v4229 = vshrl.u32 %v3611, 16
      %v4231 = vrot.slane %v4229, 4
      %v4232 = vshll.u32 %v3611, 16
      %v4234 = vrot.slane %v4232, 5
      %v4235 = vor.u32 %v4231, %v4234
      %v4236 = vrot.slane %v4235, 4
      %v4238 = vshll.u32 %v3612, 16
      %v4240 = vrot.slane %v4238, 5
      %v4241 = vsel %vm722, %v4236, %v4240
      %v4242 = vshrl.u32 %v3612, 16
      %v4244 = vrot.slane %v4242, 4
      %v4245 = vor.u32 %v4244, %v4240
      %v4246 = vrot.slane %v4245, 4
      %v4248 = vshll.u32 %v3613, 16
      %v4250 = vrot.slane %v4248, 5
      %v4251 = vsel %vm722, %v4246, %v4250
      %v4253 = vshrl.u32 %v3614, 16
      %v4255 = vrot.slane %v4253, 4
      %v4256 = vshll.u32 %v3614, 16
      %v4258 = vrot.slane %v4256, 5
      %v4259 = vor.u32 %v4255, %v4258
      %v4260 = vrot.slane %v4259, 4
      %v4262 = vshll.u32 %v3615, 16
      %v4264 = vrot.slane %v4262, 5
      %v4265 = vsel %vm722, %v4260, %v4264
      %v4266 = vshrl.u32 %v3615, 16
      %v4268 = vrot.slane %v4266, 4
      %v4269 = vor.u32 %v4268, %v4264
      %v4270 = vrot.slane %v4269, 4
      %v4272 = vshll.u32 %v3616, 16
      %v4274 = vrot.slane %v4272, 5
      %v4275 = vsel %vm722, %v4270, %v4274
      %v4277 = vshrl.u32 %v3617, 16
      %v4279 = vrot.slane %v4277, 4
      %v4280 = vshll.u32 %v3617, 16
      %v4282 = vrot.slane %v4280, 5
      %v4283 = vor.u32 %v4279, %v4282
      %v4284 = vrot.slane %v4283, 4
      %v4286 = vshll.u32 %v3618, 16
      %v4288 = vrot.slane %v4286, 5
      %v4289 = vsel %vm722, %v4284, %v4288
      %v4290 = vshrl.u32 %v3618, 16
      %v4292 = vrot.slane %v4290, 4
      %v4293 = vor.u32 %v4292, %v4288
      %v4294 = vrot.slane %v4293, 4
      %v4296 = vshll.u32 %v3619, 16
      %v4298 = vrot.slane %v4296, 5
      %v4299 = vsel %vm722, %v4294, %v4298
      %v4301 = vshrl.u32 %v3620, 16
      %v4303 = vrot.slane %v4301, 4
      %v4304 = vshll.u32 %v3620, 16
      %v4306 = vrot.slane %v4304, 5
      %v4307 = vor.u32 %v4303, %v4306
      %v4308 = vrot.slane %v4307, 4
      %v4310 = vshll.u32 %v3621, 16
      %v4312 = vrot.slane %v4310, 5
      %v4313 = vsel %vm722, %v4308, %v4312
      %v4314 = vshrl.u32 %v3621, 16
      %v4316 = vrot.slane %v4314, 4
      %v4317 = vor.u32 %v4316, %v4312
      %v4318 = vrot.slane %v4317, 4
      %v4320 = vshll.u32 %v3622, 16
      %v4322 = vrot.slane %v4320, 5
      %v4323 = vsel %vm722, %v4318, %v4322
      %v4325 = vshrl.u32 %v3623, 16
      %v4327 = vrot.slane %v4325, 4
      %v4328 = vshll.u32 %v3623, 16
      %v4330 = vrot.slane %v4328, 5
      %v4331 = vor.u32 %v4327, %v4330
      %v4332 = vrot.slane %v4331, 4
      %v4334 = vshll.u32 %v3624, 16
      %v4336 = vrot.slane %v4334, 5
      %v4337 = vsel %vm722, %v4332, %v4336
      %v4338 = vshrl.u32 %v3624, 16
      %v4340 = vrot.slane %v4338, 4
      %v4341 = vor.u32 %v4340, %v4336
      %v4342 = vrot.slane %v4341, 4
      %v4344 = vshll.u32 %v3625, 16
      %v4346 = vrot.slane %v4344, 5
      %v4347 = vsel %vm722, %v4342, %v4346
      %v4349 = vshrl.u32 %v3626, 16
      %v4351 = vrot.slane %v4349, 4
      %v4352 = vshll.u32 %v3626, 16
      %v4354 = vrot.slane %v4352, 5
      %v4355 = vor.u32 %v4351, %v4354
      %v4356 = vrot.slane %v4355, 4
      %v4358 = vshll.u32 %v3627, 16
      %v4360 = vrot.slane %v4358, 5
      %v4361 = vsel %vm722, %v4356, %v4360
      %v4362 = vshrl.u32 %v3627, 16
      %v4364 = vrot.slane %v4362, 4
      %v4365 = vor.u32 %v4364, %v4360
      %v4366 = vrot.slane %v4365, 4
      %v4368 = vshll.u32 %v3628, 16
      %v4370 = vrot.slane %v4368, 5
      %v4371 = vsel %vm722, %v4366, %v4370
      %v4373 = vshrl.u32 %v3629, 16
      %v4375 = vrot.slane %v4373, 4
      %v4376 = vshll.u32 %v3629, 16
      %v4378 = vrot.slane %v4376, 5
      %v4379 = vor.u32 %v4375, %v4378
      %v4380 = vrot.slane %v4379, 4
      %v4382 = vshll.u32 %v3630, 16
      %v4384 = vrot.slane %v4382, 5
      %v4385 = vsel %vm722, %v4380, %v4384
      %v4386 = vshrl.u32 %v3630, 16
      %v4388 = vrot.slane %v4386, 4
      %v4389 = vor.u32 %v4388, %v4384
      %v4390 = vrot.slane %v4389, 4
      %v4392 = vshll.u32 %v3631, 16
      %v4394 = vrot.slane %v4392, 5
      %v4395 = vsel %vm722, %v4390, %v4394
      %v4397 = vshrl.u32 %v3632, 16
      %v4399 = vrot.slane %v4397, 4
      %v4400 = vshll.u32 %v3632, 16
      %v4402 = vrot.slane %v4400, 5
      %v4403 = vor.u32 %v4399, %v4402
      %v4404 = vrot.slane %v4403, 4
      %v4406 = vshll.u32 %v3633, 16
      %v4408 = vrot.slane %v4406, 5
      %v4409 = vsel %vm722, %v4404, %v4408
      %v4410 = vshrl.u32 %v3633, 16
      %v4412 = vrot.slane %v4410, 4
      %v4413 = vor.u32 %v4412, %v4408
      %v4414 = vrot.slane %v4413, 4
      %v4416 = vshll.u32 %v3634, 16
      %v4418 = vrot.slane %v4416, 5
      %v4419 = vsel %vm722, %v4414, %v4418
      %v4421 = vshrl.u32 %v3635, 16
      %v4423 = vrot.slane %v4421, 4
      %v4424 = vshll.u32 %v3635, 16
      %v4426 = vrot.slane %v4424, 5
      %v4427 = vor.u32 %v4423, %v4426
      %v4428 = vrot.slane %v4427, 4
      %v4430 = vshll.u32 %v3636, 16
      %v4432 = vrot.slane %v4430, 5
      %v4433 = vsel %vm722, %v4428, %v4432
      %v4434 = vshrl.u32 %v3636, 16
      %v4436 = vrot.slane %v4434, 4
      %v4437 = vor.u32 %v4436, %v4432
      %v4438 = vrot.slane %v4437, 4
      %v4440 = vshll.u32 %v3637, 16
      %v4442 = vrot.slane %v4440, 5
      %v4443 = vsel %vm722, %v4438, %v4442
      %s4444 = scalar_lea.vmem %s1, 14
      %v4445 = vld [vmem:[%s4444] sm:$0x3]
      %v4446 = vunpack.c.l.b16 %v4073
      %v4447 = vunpack.c.l.b16 %v4083
      %v4448 = vunpack.c.l.b16 %v4097
      %v4449 = vunpack.c.l.b16 %v4107
      %v4450 = vunpack.c.l.b16 %v4121
      %v4451 = vunpack.c.l.b16 %v4131
      %v4452 = vunpack.c.l.b16 %v4145
      %v4453 = vunpack.c.l.b16 %v4155
      %v4454 = vunpack.c.l.b16 %v4169
      %v4455 = vunpack.c.l.b16 %v4179
      %v4456 = vunpack.c.l.b16 %v4193
      %v4457 = vunpack.c.l.b16 %v4203
      %v4458 = vunpack.c.l.b16 %v4217
      %v4459 = vunpack.c.l.b16 %v4227
      %v4460 = vunpack.c.l.b16 %v4241
      %v4461 = vunpack.c.l.b16 %v4251
      %v4462 = vunpack.c.l.b16 %v4265
      %v4463 = vunpack.c.l.b16 %v4275
      %v4464 = vunpack.c.l.b16 %v4289
      %v4465 = vunpack.c.l.b16 %v4299
      %v4466 = vunpack.c.l.b16 %v4313
      %v4467 = vunpack.c.l.b16 %v4323
      %v4468 = vunpack.c.l.b16 %v4337
      %v4469 = vunpack.c.l.b16 %v4347
      %v4470 = vunpack.c.l.b16 %v4361
      %v4471 = vunpack.c.l.b16 %v4371
      %v4472 = vunpack.c.l.b16 %v4385
      %v4473 = vunpack.c.l.b16 %v4395
      %v4474 = vunpack.c.l.b16 %v4409
      %v4475 = vunpack.c.l.b16 %v4419
      %v4476 = vunpack.c.l.b16 %v4433
      %v4477 = vunpack.c.l.b16 %v4443
      %v4478 = vpack.c.b16 %v4447, %v4446
      %v4479 = vpack.c.b16 %v4449, %v4448
      %v4480 = vpack.c.b16 %v4451, %v4450
      %v4481 = vpack.c.b16 %v4453, %v4452
      %v4482 = vpack.c.b16 %v4455, %v4454
      %v4483 = vpack.c.b16 %v4457, %v4456
      %v4484 = vpack.c.b16 %v4459, %v4458
      %v4485 = vpack.c.b16 %v4461, %v4460
      %v4486 = vpack.c.b16 %v4463, %v4462
      %v4487 = vpack.c.b16 %v4465, %v4464
      %v4488 = vpack.c.b16 %v4467, %v4466
      %v4489 = vpack.c.b16 %v4469, %v4468
      %v4490 = vpack.c.b16 %v4471, %v4470
      %v4491 = vpack.c.b16 %v4473, %v4472
      %v4492 = vpack.c.b16 %v4475, %v4474
      %v4493 = vpack.c.b16 %v4477, %v4476
      %v4495 = vsel %vm410, %v4478, 0
      %v4498 = vsel %vm410, %v4479, 0
      %v4501 = vsel %vm410, %v4480, 0
      %v4504 = vsel %vm410, %v4481, 0
      %v4507 = vsel %vm410, %v4482, 0
      %v4510 = vsel %vm410, %v4483, 0
      %v4513 = vsel %vm410, %v4484, 0
      %v4516 = vsel %vm410, %v4485, 0
      %v4519 = vsel %vm410, %v4486, 0
      %v4522 = vsel %vm410, %v4487, 0
      %v4525 = vsel %vm410, %v4488, 0
      %v4528 = vsel %vm410, %v4489, 0
      %v4531 = vsel %vm410, %v4490, 0
      %v4534 = vsel %vm410, %v4491, 0
      %v4537 = vsel %vm410, %v4492, 0
      %v4540 = vsel %vm410, %v4493, 0
      %v4543 = vsel %vm459, %v4445, 0
      %4545 = vmatprep.subr.bf16.mxu0 0
      %4546 = vmatpush1.bf16.msra.mxu0 %v4543
      %4547 = vmatprep.subr.bf16.mxu0 0
      %4548 = vmatpush1.bf16.msra.mxu0 0
      %4549 = vmatprep.subr.bf16.mxu0 0
      %4550 = vmatpush1.bf16.msra.mxu0 0
      %4551 = vmatprep.subr.bf16.mxu0 0
      %4552 = vmatpush1.bf16.msra.mxu0 0
      %4553 = vmatprep.subr.bf16.mxu0 0
      %4554 = vmatpush1.bf16.msra.mxu0 0
      %4555 = vmatprep.subr.bf16.mxu0 0
      %4556 = vmatpush1.bf16.msra.mxu0 0
      %4557 = vmatprep.subr.bf16.mxu0 0
      %4558 = vmatpush1.bf16.msra.mxu0 0
      %4559 = vmatprep.subr.bf16.mxu0 0
      %4560 = vmatpush1.bf16.msra.mxu0 0
      %4561 = vmatprep.subr.bf16.mxu0 0
      %4562 = vmatpush1.bf16.msra.mxu0 0
      %4563 = vmatprep.subr.bf16.mxu0 0
      %4564 = vmatpush1.bf16.msra.mxu0 0
      %4565 = vmatprep.subr.bf16.mxu0 0
      %4566 = vmatpush1.bf16.msra.mxu0 0
      %4567 = vmatprep.subr.bf16.mxu0 0
      %4568 = vmatpush1.bf16.msra.mxu0 0
      %4569 = vmatprep.subr.bf16.mxu0 0
      %4570 = vmatpush1.bf16.msra.mxu0 0
      %4571 = vmatprep.subr.bf16.mxu0 0
      %4572 = vmatpush1.bf16.msra.mxu0 0
      %4573 = vmatprep.subr.bf16.mxu0 0
      %4574 = vmatpush1.bf16.msra.mxu0 0
      %4575 = vmatprep.subr.bf16.mxu0 0
      %4576 = vmatpush1.bf16.msra.mxu0 0
      %4577 = vmatprep.mubr.bf16.mxu0 0
      %4578 = vmatmul.mubr.bf16.gmra.mrb[0].mxu0 %v4495
      %v4579 = vpop.f32.mrb[0].mxu0
      %v4580 = vadd.f32 0.0, %v4579
      %v4581 = vpop.f32.mrb[0].mxu0
      %v4582 = vpop.f32.mrb[0].mxu0
      %v4583 = vadd.f32 0.0, %v4582
      %v4584 = vpop.f32.mrb[0].mxu0
      %4585 = vmatprep.mubr.bf16.mxu0 0
      %4586 = vmatmul.mubr.bf16.gmra.mrb[0].mxu0 %v4498
      %v4587 = vpop.f32.mrb[0].mxu0
      %v4588 = vadd.f32 0.0, %v4587
      %v4589 = vpop.f32.mrb[0].mxu0
      %v4590 = vpop.f32.mrb[0].mxu0
      %v4591 = vadd.f32 0.0, %v4590
      %v4592 = vpop.f32.mrb[0].mxu0
      %4593 = vmatprep.mubr.bf16.mxu0 0
      %4594 = vmatmul.mubr.bf16.gmra.mrb[0].mxu0 %v4501
      %v4595 = vpop.f32.mrb[0].mxu0
      %v4596 = vadd.f32 0.0, %v4595
      %v4597 = vpop.f32.mrb[0].mxu0
      %v4598 = vpop.f32.mrb[0].mxu0
      %v4599 = vadd.f32 0.0, %v4598
      %v4600 = vpop.f32.mrb[0].mxu0
      %4601 = vmatprep.mubr.bf16.mxu0 0
      %4602 = vmatmul.mubr.bf16.gmra.mrb[0].mxu0 %v4504
      %v4603 = vpop.f32.mrb[0].mxu0
      %v4604 = vadd.f32 0.0, %v4603
      %v4605 = vpop.f32.mrb[0].mxu0
      %v4606 = vpop.f32.mrb[0].mxu0
      %v4607 = vadd.f32 0.0, %v4606
      %v4608 = vpop.f32.mrb[0].mxu0
      %4609 = vmatprep.mubr.bf16.mxu0 0
      %4610 = vmatmul.mubr.bf16.gmra.mrb[0].mxu0 %v4507
      %v4611 = vpop.f32.mrb[0].mxu0
      %v4612 = vadd.f32 0.0, %v4611
      %v4613 = vpop.f32.mrb[0].mxu0
      %v4614 = vpop.f32.mrb[0].mxu0
      %v4615 = vadd.f32 0.0, %v4614
      %v4616 = vpop.f32.mrb[0].mxu0
      %4617 = vmatprep.mubr.bf16.mxu0 0
      %4618 = vmatmul.mubr.bf16.gmra.mrb[0].mxu0 %v4510
      %v4619 = vpop.f32.mrb[0].mxu0
      %v4620 = vadd.f32 0.0, %v4619
      %v4621 = vpop.f32.mrb[0].mxu0
      %v4622 = vpop.f32.mrb[0].mxu0
      %v4623 = vadd.f32 0.0, %v4622
      %v4624 = vpop.f32.mrb[0].mxu0
      %4625 = vmatprep.mubr.bf16.mxu0 0
      %4626 = vmatmul.mubr.bf16.gmra.mrb[0].mxu0 %v4513
      %v4627 = vpop.f32.mrb[0].mxu0
      %v4628 = vadd.f32 0.0, %v4627
      %v4629 = vpop.f32.mrb[0].mxu0
      %v4630 = vpop.f32.mrb[0].mxu0
      %v4631 = vadd.f32 0.0, %v4630
      %v4632 = vpop.f32.mrb[0].mxu0
      %4633 = vmatprep.mubr.bf16.mxu0 0
      %4634 = vmatmul.mubr.bf16.gmra.mrb[0].mxu0 %v4516
      %v4635 = vpop.f32.mrb[0].mxu0
      %v4636 = vadd.f32 0.0, %v4635
      %v4637 = vpop.f32.mrb[0].mxu0
      %v4638 = vpop.f32.mrb[0].mxu0
      %v4639 = vadd.f32 0.0, %v4638
      %v4640 = vpop.f32.mrb[0].mxu0
      %4641 = vmatprep.mubr.bf16.mxu0 0
      %4642 = vmatmul.mubr.bf16.gmra.mrb[0].mxu0 %v4519
      %v4643 = vpop.f32.mrb[0].mxu0
      %v4644 = vadd.f32 0.0, %v4643
      %v4645 = vpop.f32.mrb[0].mxu0
      %v4646 = vpop.f32.mrb[0].mxu0
      %v4647 = vadd.f32 0.0, %v4646
      %v4648 = vpop.f32.mrb[0].mxu0
      %4649 = vmatprep.mubr.bf16.mxu0 0
      %4650 = vmatmul.mubr.bf16.gmra.mrb[0].mxu0 %v4522
      %v4651 = vpop.f32.mrb[0].mxu0
      %v4652 = vadd.f32 0.0, %v4651
      %v4653 = vpop.f32.mrb[0].mxu0
      %v4654 = vpop.f32.mrb[0].mxu0
      %v4655 = vadd.f32 0.0, %v4654
      %v4656 = vpop.f32.mrb[0].mxu0
      %4657 = vmatprep.mubr.bf16.mxu0 0
      %4658 = vmatmul.mubr.bf16.gmra.mrb[0].mxu0 %v4525
      %v4659 = vpop.f32.mrb[0].mxu0
      %v4660 = vadd.f32 0.0, %v4659
      %v4661 = vpop.f32.mrb[0].mxu0
      %v4662 = vpop.f32.mrb[0].mxu0
      %v4663 = vadd.f32 0.0, %v4662
      %v4664 = vpop.f32.mrb[0].mxu0
      %4665 = vmatprep.mubr.bf16.mxu0 0
      %4666 = vmatmul.mubr.bf16.gmra.mrb[0].mxu0 %v4528
      %v4667 = vpop.f32.mrb[0].mxu0
      %v4668 = vadd.f32 0.0, %v4667
      %v4669 = vpop.f32.mrb[0].mxu0
      %v4670 = vpop.f32.mrb[0].mxu0
      %v4671 = vadd.f32 0.0, %v4670
      %v4672 = vpop.f32.mrb[0].mxu0
      %4673 = vmatprep.mubr.bf16.mxu0 0
      %4674 = vmatmul.mubr.bf16.gmra.mrb[0].mxu0 %v4531
      %v4675 = vpop.f32.mrb[0].mxu0
      %v4676 = vadd.f32 0.0, %v4675
      %v4677 = vpop.f32.mrb[0].mxu0
      %v4678 = vpop.f32.mrb[0].mxu0
      %v4679 = vadd.f32 0.0, %v4678
      %v4680 = vpop.f32.mrb[0].mxu0
      %4681 = vmatprep.mubr.bf16.mxu0 0
      %4682 = vmatmul.mubr.bf16.gmra.mrb[0].mxu0 %v4534
      %v4683 = vpop.f32.mrb[0].mxu0
      %v4684 = vadd.f32 0.0, %v4683
      %v4685 = vpop.f32.mrb[0].mxu0
      %v4686 = vpop.f32.mrb[0].mxu0
      %v4687 = vadd.f32 0.0, %v4686
      %v4688 = vpop.f32.mrb[0].mxu0
      %4689 = vmatprep.mubr.bf16.mxu0 0
      %4690 = vmatmul.mubr.bf16.gmra.mrb[0].mxu0 %v4537
      %v4691 = vpop.f32.mrb[0].mxu0
      %v4692 = vadd.f32 0.0, %v4691
      %v4693 = vpop.f32.mrb[0].mxu0
      %v4694 = vpop.f32.mrb[0].mxu0
      %v4695 = vadd.f32 0.0, %v4694
      %v4696 = vpop.f32.mrb[0].mxu0
      %4697 = vmatprep.mubr.bf16.mxu0 0
      %4698 = vmatmul.mubr.bf16.gmra.mrb[0].mxu0 %v4540
      %v4699 = vpop.f32.mrb[0].mxu0
      %v4700 = vadd.f32 0.0, %v4699
      %v4701 = vpop.f32.mrb[0].mxu0
      %v4702 = vpop.f32.mrb[0].mxu0
      %v4703 = vadd.f32 0.0, %v4702
      %v4704 = vpop.f32.mrb[0].mxu0
      %4705 = vdwg.mxu0
      %v4706 = vadd.f32 %v4028, %v4580
      %v4707 = vadd.f32 %v4029, %v4583
      %v4708 = vadd.f32 %v4030, %v4588
      %v4709 = vadd.f32 %v4031, %v4591
      %v4710 = vadd.f32 %v4032, %v4596
      %v4711 = vadd.f32 %v4033, %v4599
      %v4712 = vadd.f32 %v4034, %v4604
      %v4713 = vadd.f32 %v4035, %v4607
      %v4714 = vadd.f32 %v4036, %v4612
      %v4715 = vadd.f32 %v4037, %v4615
      %v4716 = vadd.f32 %v4038, %v4620
      %v4717 = vadd.f32 %v4039, %v4623
      %v4718 = vadd.f32 %v4040, %v4628
      %v4719 = vadd.f32 %v4041, %v4631
      %v4720 = vadd.f32 %v4042, %v4636
      %v4721 = vadd.f32 %v4043, %v4639
      %v4722 = vadd.f32 %v4044, %v4644
      %v4723 = vadd.f32 %v4045, %v4647
      %v4724 = vadd.f32 %v4046, %v4652
      %v4725 = vadd.f32 %v4047, %v4655
      %v4726 = vadd.f32 %v4048, %v4660
      %v4727 = vadd.f32 %v4049, %v4663
      %v4728 = vadd.f32 %v4050, %v4668
      %v4729 = vadd.f32 %v4051, %v4671
      %v4730 = vadd.f32 %v4052, %v4676
      %v4731 = vadd.f32 %v4053, %v4679
      %v4732 = vadd.f32 %v4054, %v4684
      %v4733 = vadd.f32 %v4055, %v4687
      %v4734 = vadd.f32 %v4056, %v4692
      %v4735 = vadd.f32 %v4057, %v4695
      %v4736 = vadd.f32 %v4058, %v4700
      %v4737 = vadd.f32 %v4059, %v4703
      %4738 = vst.msk [vmem:[#allocation2] sm:$0xff] %vm216, %v4706
      %4739 = vst.msk [vmem:[#allocation2 + $0x8] sm:$0xff] %vm216, %v4707
      %4740 = vst.msk [vmem:[#allocation2 + $0x10] sm:$0xff] %vm216, %v4708
      %4741 = vst.msk [vmem:[#allocation2 + $0x18] sm:$0xff] %vm216, %v4709
      %4742 = vst.msk [vmem:[#allocation2 + $0x20] sm:$0xff] %vm216, %v4710
      %4743 = vst.msk [vmem:[#allocation2 + $0x28] sm:$0xff] %vm216, %v4711
      %4744 = vst.msk [vmem:[#allocation2 + $0x30] sm:$0xff] %vm216, %v4712
      %4745 = vst.msk [vmem:[#allocation2 + $0x38] sm:$0xff] %vm216, %v4713
      %4746 = vst.msk [vmem:[#allocation2 + $0x40] sm:$0xff] %vm216, %v4714
      %4747 = vst.msk [vmem:[#allocation2 + $0x48] sm:$0xff] %vm216, %v4715
      %4748 = vst.msk [vmem:[#allocation2 + $0x50] sm:$0xff] %vm216, %v4716
      %4749 = vst.msk [vmem:[#allocation2 + $0x58] sm:$0xff] %vm216, %v4717
      %4750 = vst.msk [vmem:[#allocation2 + $0x60] sm:$0xff] %vm216, %v4718
      %4751 = vst.msk [vmem:[#allocation2 + $0x68] sm:$0xff] %vm216, %v4719
      %4752 = vst.msk [vmem:[#allocation2 + $0x70] sm:$0xff] %vm216, %v4720
      %4753 = vst.msk [vmem:[#allocation2 + $0x78] sm:$0xff] %vm216, %v4721
      %4754 = vst.msk [vmem:[#allocation2 + $0x80] sm:$0xff] %vm216, %v4722
      %4755 = vst.msk [vmem:[#allocation2 + $0x88] sm:$0xff] %vm216, %v4723
      %4756 = vst.msk [vmem:[#allocation2 + $0x90] sm:$0xff] %vm216, %v4724
      %4757 = vst.msk [vmem:[#allocation2 + $0x98] sm:$0xff] %vm216, %v4725
      %4758 = vst.msk [vmem:[#allocation2 + $0xa0] sm:$0xff] %vm216, %v4726
      %4759 = vst.msk [vmem:[#allocation2 + $0xa8] sm:$0xff] %vm216, %v4727
      %4760 = vst.msk [vmem:[#allocation2 + $0xb0] sm:$0xff] %vm216, %v4728
      %4761 = vst.msk [vmem:[#allocation2 + $0xb8] sm:$0xff] %vm216, %v4729
      %4762 = vst.msk [vmem:[#allocation2 + $0xc0] sm:$0xff] %vm216, %v4730
      %4763 = vst.msk [vmem:[#allocation2 + $0xc8] sm:$0xff] %vm216, %v4731
      %4764 = vst.msk [vmem:[#allocation2 + $0xd0] sm:$0xff] %vm216, %v4732
      %4765 = vst.msk [vmem:[#allocation2 + $0xd8] sm:$0xff] %vm216, %v4733
      %4766 = vst.msk [vmem:[#allocation2 + $0xe0] sm:$0xff] %vm216, %v4734
      %4767 = vst.msk [vmem:[#allocation2 + $0xe8] sm:$0xff] %vm216, %v4735
      %4768 = vst.msk [vmem:[#allocation2 + $0xf0] sm:$0xff] %vm216, %v4736
      %4769 = vst.msk [vmem:[#allocation2 + $0xf8] sm:$0xff] %vm216, %v4737
      %v4770 = vld [vmem:[#allocation2] sm:$0xff]
      %v4771 = vld [vmem:[#allocation2 + $0x8] sm:$0xff]
      %v4772 = vld [vmem:[#allocation2 + $0x10] sm:$0xff]
      %v4773 = vld [vmem:[#allocation2 + $0x18] sm:$0xff]
      %v4774 = vld [vmem:[#allocation2 + $0x20] sm:$0xff]
      %v4775 = vld [vmem:[#allocation2 + $0x28] sm:$0xff]
      %v4776 = vld [vmem:[#allocation2 + $0x30] sm:$0xff]
      %v4777 = vld [vmem:[#allocation2 + $0x38] sm:$0xff]
      %v4778 = vld [vmem:[#allocation2 + $0x40] sm:$0xff]
      %v4779 = vld [vmem:[#allocation2 + $0x48] sm:$0xff]
      %v4780 = vld [vmem:[#allocation2 + $0x50] sm:$0xff]
      %v4781 = vld [vmem:[#allocation2 + $0x58] sm:$0xff]
      %v4782 = vld [vmem:[#allocation2 + $0x60] sm:$0xff]
      %v4783 = vld [vmem:[#allocation2 + $0x68] sm:$0xff]
      %v4784 = vld [vmem:[#allocation2 + $0x70] sm:$0xff]
      %v4785 = vld [vmem:[#allocation2 + $0x78] sm:$0xff]
      %v4786 = vld [vmem:[#allocation2 + $0x80] sm:$0xff]
      %v4787 = vld [vmem:[#allocation2 + $0x88] sm:$0xff]
      %v4788 = vld [vmem:[#allocation2 + $0x90] sm:$0xff]
      %v4789 = vld [vmem:[#allocation2 + $0x98] sm:$0xff]
      %v4790 = vld [vmem:[#allocation2 + $0xa0] sm:$0xff]
      %v4791 = vld [vmem:[#allocation2 + $0xa8] sm:$0xff]
      %v4792 = vld [vmem:[#allocation2 + $0xb0] sm:$0xff]
      %v4793 = vld [vmem:[#allocation2 + $0xb8] sm:$0xff]
      %v4794 = vld [vmem:[#allocation2 + $0xc0] sm:$0xff]
      %v4795 = vld [vmem:[#allocation2 + $0xc8] sm:$0xff]
      %v4796 = vld [vmem:[#allocation2 + $0xd0] sm:$0xff]
      %v4797 = vld [vmem:[#allocation2 + $0xd8] sm:$0xff]
      %v4798 = vld [vmem:[#allocation2 + $0xe0] sm:$0xff]
      %v4799 = vld [vmem:[#allocation2 + $0xe8] sm:$0xff]
      %v4800 = vld [vmem:[#allocation2 + $0xf0] sm:$0xff]
      %v4801 = vld [vmem:[#allocation2 + $0xf8] sm:$0xff]
      %v4818 = vrot.slane %v3590, 5
      %v4819 = vrot.slane %v4818, 4
      %v4820 = vrot.slane %v3591, 5
      %v4821 = vsel %vm1483, %v4819, %v4820
      %v4822 = vrot.slane %v4820, 4
      %v4823 = vrot.slane %v3592, 5
      %v4824 = vsel %vm1483, %v4822, %v4823
      %v4825 = vrot.slane %v3593, 5
      %v4826 = vrot.slane %v4825, 4
      %v4827 = vrot.slane %v3594, 5
      %v4828 = vsel %vm1483, %v4826, %v4827
      %v4829 = vrot.slane %v4827, 4
      %v4830 = vrot.slane %v3595, 5
      %v4831 = vsel %vm1483, %v4829, %v4830
      %v4832 = vrot.slane %v3596, 5
      %v4833 = vrot.slane %v4832, 4
      %v4834 = vrot.slane %v3597, 5
      %v4835 = vsel %vm1483, %v4833, %v4834
      %v4836 = vrot.slane %v4834, 4
      %v4837 = vrot.slane %v3598, 5
      %v4838 = vsel %vm1483, %v4836, %v4837
      %v4839 = vrot.slane %v3599, 5
      %v4840 = vrot.slane %v4839, 4
      %v4841 = vrot.slane %v3600, 5
      %v4842 = vsel %vm1483, %v4840, %v4841
      %v4843 = vrot.slane %v4841, 4
      %v4844 = vrot.slane %v3601, 5
      %v4845 = vsel %vm1483, %v4843, %v4844
      %v4846 = vrot.slane %v3602, 5
      %v4847 = vrot.slane %v4846, 4
      %v4848 = vrot.slane %v3603, 5
      %v4849 = vsel %vm1483, %v4847, %v4848
      %v4850 = vrot.slane %v4848, 4
      %v4851 = vrot.slane %v3604, 5
      %v4852 = vsel %vm1483, %v4850, %v4851
      %v4853 = vrot.slane %v3605, 5
      %v4854 = vrot.slane %v4853, 4
      %v4855 = vrot.slane %v3606, 5
      %v4856 = vsel %vm1483, %v4854, %v4855
      %v4857 = vrot.slane %v4855, 4
      %v4858 = vrot.slane %v3607, 5
      %v4859 = vsel %vm1483, %v4857, %v4858
      %v4860 = vrot.slane %v3608, 5
      %v4861 = vrot.slane %v4860, 4
      %v4862 = vrot.slane %v3609, 5
      %v4863 = vsel %vm1483, %v4861, %v4862
      %v4864 = vrot.slane %v4862, 4
      %v4865 = vrot.slane %v3610, 5
      %v4866 = vsel %vm1483, %v4864, %v4865
      %v4867 = vrot.slane %v3611, 5
      %v4868 = vrot.slane %v4867, 4
      %v4869 = vrot.slane %v3612, 5
      %v4870 = vsel %vm1483, %v4868, %v4869
      %v4871 = vrot.slane %v4869, 4
      %v4872 = vrot.slane %v3613, 5
      %v4873 = vsel %vm1483, %v4871, %v4872
      %v4874 = vrot.slane %v3614, 5
      %v4875 = vrot.slane %v4874, 4
      %v4876 = vrot.slane %v3615, 5
      %v4877 = vsel %vm1483, %v4875, %v4876
      %v4878 = vrot.slane %v4876, 4
      %v4879 = vrot.slane %v3616, 5
      %v4880 = vsel %vm1483, %v4878, %v4879
      %v4881 = vrot.slane %v3617, 5
      %v4882 = vrot.slane %v4881, 4
      %v4883 = vrot.slane %v3618, 5
      %v4884 = vsel %vm1483, %v4882, %v4883
      %v4885 = vrot.slane %v4883, 4
      %v4886 = vrot.slane %v3619, 5
      %v4887 = vsel %vm1483, %v4885, %v4886
      %v4888 = vrot.slane %v3620, 5
      %v4889 = vrot.slane %v4888, 4
      %v4890 = vrot.slane %v3621, 5
      %v4891 = vsel %vm1483, %v4889, %v4890
      %v4892 = vrot.slane %v4890, 4
      %v4893 = vrot.slane %v3622, 5
      %v4894 = vsel %vm1483, %v4892, %v4893
      %v4895 = vrot.slane %v3623, 5
      %v4896 = vrot.slane %v4895, 4
      %v4897 = vrot.slane %v3624, 5
      %v4898 = vsel %vm1483, %v4896, %v4897
      %v4899 = vrot.slane %v4897, 4
      %v4900 = vrot.slane %v3625, 5
      %v4901 = vsel %vm1483, %v4899, %v4900
      %v4902 = vrot.slane %v3626, 5
      %v4903 = vrot.slane %v4902, 4
      %v4904 = vrot.slane %v3627, 5
      %v4905 = vsel %vm1483, %v4903, %v4904
      %v4906 = vrot.slane %v4904, 4
      %v4907 = vrot.slane %v3628, 5
      %v4908 = vsel %vm1483, %v4906, %v4907
      %v4909 = vrot.slane %v3629, 5
      %v4910 = vrot.slane %v4909, 4
      %v4911 = vrot.slane %v3630, 5
      %v4912 = vsel %vm1483, %v4910, %v4911
      %v4913 = vrot.slane %v4911, 4
      %v4914 = vrot.slane %v3631, 5
      %v4915 = vsel %vm1483, %v4913, %v4914
      %v4916 = vrot.slane %v3632, 5
      %v4917 = vrot.slane %v4916, 4
      %v4918 = vrot.slane %v3633, 5
      %v4919 = vsel %vm1483, %v4917, %v4918
      %v4920 = vrot.slane %v4918, 4
      %v4921 = vrot.slane %v3634, 5
      %v4922 = vsel %vm1483, %v4920, %v4921
      %v4923 = vrot.slane %v3635, 5
      %v4924 = vrot.slane %v4923, 4
      %v4925 = vrot.slane %v3636, 5
      %v4926 = vsel %vm1483, %v4924, %v4925
      %v4927 = vrot.slane %v4925, 4
      %v4928 = vrot.slane %v3637, 5
      %v4929 = vsel %vm1483, %v4927, %v4928
      %s4930 = scalar_lea.vmem %s1, 16
      %v4931 = vld [vmem:[%s4930] sm:$0x3]
      %v4932 = vunpack.c.l.b16 %v4821
      %v4933 = vunpack.c.l.b16 %v4824
      %v4934 = vunpack.c.l.b16 %v4828
      %v4935 = vunpack.c.l.b16 %v4831
      %v4936 = vunpack.c.l.b16 %v4835
      %v4937 = vunpack.c.l.b16 %v4838
      %v4938 = vunpack.c.l.b16 %v4842
      %v4939 = vunpack.c.l.b16 %v4845
      %v4940 = vunpack.c.l.b16 %v4849
      %v4941 = vunpack.c.l.b16 %v4852
      %v4942 = vunpack.c.l.b16 %v4856
      %v4943 = vunpack.c.l.b16 %v4859
      %v4944 = vunpack.c.l.b16 %v4863
      %v4945 = vunpack.c.l.b16 %v4866
      %v4946 = vunpack.c.l.b16 %v4870
      %v4947 = vunpack.c.l.b16 %v4873
      %v4948 = vunpack.c.l.b16 %v4877
      %v4949 = vunpack.c.l.b16 %v4880
      %v4950 = vunpack.c.l.b16 %v4884
      %v4951 = vunpack.c.l.b16 %v4887
      %v4952 = vunpack.c.l.b16 %v4891
      %v4953 = vunpack.c.l.b16 %v4894
      %v4954 = vunpack.c.l.b16 %v4898
      %v4955 = vunpack.c.l.b16 %v4901
      %v4956 = vunpack.c.l.b16 %v4905
      %v4957 = vunpack.c.l.b16 %v4908
      %v4958 = vunpack.c.l.b16 %v4912
      %v4959 = vunpack.c.l.b16 %v4915
      %v4960 = vunpack.c.l.b16 %v4919
      %v4961 = vunpack.c.l.b16 %v4922
      %v4962 = vunpack.c.l.b16 %v4926
      %v4963 = vunpack.c.l.b16 %v4929
      %v4964 = vpack.c.b16 %v4933, %v4932
      %v4965 = vpack.c.b16 %v4935, %v4934
      %v4966 = vpack.c.b16 %v4937, %v4936
      %v4967 = vpack.c.b16 %v4939, %v4938
      %v4968 = vpack.c.b16 %v4941, %v4940
      %v4969 = vpack.c.b16 %v4943, %v4942
      %v4970 = vpack.c.b16 %v4945, %v4944
      %v4971 = vpack.c.b16 %v4947, %v4946
      %v4972 = vpack.c.b16 %v4949, %v4948
      %v4973 = vpack.c.b16 %v4951, %v4950
      %v4974 = vpack.c.b16 %v4953, %v4952
      %v4975 = vpack.c.b16 %v4955, %v4954
      %v4976 = vpack.c.b16 %v4957, %v4956
      %v4977 = vpack.c.b16 %v4959, %v4958
      %v4978 = vpack.c.b16 %v4961, %v4960
      %v4979 = vpack.c.b16 %v4963, %v4962
      %v4981 = vsel %vm410, %v4964, 0
      %v4984 = vsel %vm410, %v4965, 0
      %v4987 = vsel %vm410, %v4966, 0
      %v4990 = vsel %vm410, %v4967, 0
      %v4993 = vsel %vm410, %v4968, 0
      %v4996 = vsel %vm410, %v4969, 0
      %v4999 = vsel %vm410, %v4970, 0
      %v5002 = vsel %vm410, %v4971, 0
      %v5005 = vsel %vm410, %v4972, 0
      %v5008 = vsel %vm410, %v4973, 0
      %v5011 = vsel %vm410, %v4974, 0
      %v5014 = vsel %vm410, %v4975, 0
      %v5017 = vsel %vm410, %v4976, 0
      %v5020 = vsel %vm410, %v4977, 0
      %v5023 = vsel %vm410, %v4978, 0
      %v5026 = vsel %vm410, %v4979, 0
      %v5029 = vsel %vm459, %v4931, 0
      %5031 = vmatprep.subr.bf16.mxu0 0
      %5032 = vmatpush1.bf16.msra.mxu0 %v5029
      %5033 = vmatprep.subr.bf16.mxu0 0
      %5034 = vmatpush1.bf16.msra.mxu0 0
      %5035 = vmatprep.subr.bf16.mxu0 0
      %5036 = vmatpush1.bf16.msra.mxu0 0
      %5037 = vmatprep.subr.bf16.mxu0 0
      %5038 = vmatpush1.bf16.msra.mxu0 0
      %5039 = vmatprep.subr.bf16.mxu0 0
      %5040 = vmatpush1.bf16.msra.mxu0 0
      %5041 = vmatprep.subr.bf16.mxu0 0
      %5042 = vmatpush1.bf16.msra.mxu0 0
      %5043 = vmatprep.subr.bf16.mxu0 0
      %5044 = vmatpush1.bf16.msra.mxu0 0
      %5045 = vmatprep.subr.bf16.mxu0 0
      %5046 = vmatpush1.bf16.msra.mxu0 0
      %5047 = vmatprep.subr.bf16.mxu0 0
      %5048 = vmatpush1.bf16.msra.mxu0 0
      %5049 = vmatprep.subr.bf16.mxu0 0
      %5050 = vmatpush1.bf16.msra.mxu0 0
      %5051 = vmatprep.subr.bf16.mxu0 0
      %5052 = vmatpush1.bf16.msra.mxu0 0
      %5053 = vmatprep.subr.bf16.mxu0 0
      %5054 = vmatpush1.bf16.msra.mxu0 0
      %5055 = vmatprep.subr.bf16.mxu0 0
      %5056 = vmatpush1.bf16.msra.mxu0 0
      %5057 = vmatprep.subr.bf16.mxu0 0
      %5058 = vmatpush1.bf16.msra.mxu0 0
      %5059 = vmatprep.subr.bf16.mxu0 0
      %5060 = vmatpush1.bf16.msra.mxu0 0
      %5061 = vmatprep.subr.bf16.mxu0 0
      %5062 = vmatpush1.bf16.msra.mxu0 0
      %5063 = vmatprep.mubr.bf16.mxu0 0
      %5064 = vmatmul.mubr.bf16.gmra.mrb[0].mxu0 %v4981
      %v5065 = vpop.f32.mrb[0].mxu0
      %v5066 = vadd.f32 0.0, %v5065
      %v5067 = vpop.f32.mrb[0].mxu0
      %v5068 = vpop.f32.mrb[0].mxu0
      %v5069 = vadd.f32 0.0, %v5068
      %v5070 = vpop.f32.mrb[0].mxu0
      %5071 = vmatprep.mubr.bf16.mxu0 0
      %5072 = vmatmul.mubr.bf16.gmra.mrb[0].mxu0 %v4984
      %v5073 = vpop.f32.mrb[0].mxu0
      %v5074 = vadd.f32 0.0, %v5073
      %v5075 = vpop.f32.mrb[0].mxu0
      %v5076 = vpop.f32.mrb[0].mxu0
      %v5077 = vadd.f32 0.0, %v5076
      %v5078 = vpop.f32.mrb[0].mxu0
      %5079 = vmatprep.mubr.bf16.mxu0 0
      %5080 = vmatmul.mubr.bf16.gmra.mrb[0].mxu0 %v4987
      %v5081 = vpop.f32.mrb[0].mxu0
      %v5082 = vadd.f32 0.0, %v5081
      %v5083 = vpop.f32.mrb[0].mxu0
      %v5084 = vpop.f32.mrb[0].mxu0
      %v5085 = vadd.f32 0.0, %v5084
      %v5086 = vpop.f32.mrb[0].mxu0
      %5087 = vmatprep.mubr.bf16.mxu0 0
      %5088 = vmatmul.mubr.bf16.gmra.mrb[0].mxu0 %v4990
      %v5089 = vpop.f32.mrb[0].mxu0
      %v5090 = vadd.f32 0.0, %v5089
      %v5091 = vpop.f32.mrb[0].mxu0
      %v5092 = vpop.f32.mrb[0].mxu0
      %v5093 = vadd.f32 0.0, %v5092
      %v5094 = vpop.f32.mrb[0].mxu0
      %5095 = vmatprep.mubr.bf16.mxu0 0
      %5096 = vmatmul.mubr.bf16.gmra.mrb[0].mxu0 %v4993
      %v5097 = vpop.f32.mrb[0].mxu0
      %v5098 = vadd.f32 0.0, %v5097
      %v5099 = vpop.f32.mrb[0].mxu0
      %v5100 = vpop.f32.mrb[0].mxu0
      %v5101 = vadd.f32 0.0, %v5100
      %v5102 = vpop.f32.mrb[0].mxu0
      %5103 = vmatprep.mubr.bf16.mxu0 0
      %5104 = vmatmul.mubr.bf16.gmra.mrb[0].mxu0 %v4996
      %v5105 = vpop.f32.mrb[0].mxu0
      %v5106 = vadd.f32 0.0, %v5105
      %v5107 = vpop.f32.mrb[0].mxu0
      %v5108 = vpop.f32.mrb[0].mxu0
      %v5109 = vadd.f32 0.0, %v5108
      %v5110 = vpop.f32.mrb[0].mxu0
      %5111 = vmatprep.mubr.bf16.mxu0 0
      %5112 = vmatmul.mubr.bf16.gmra.mrb[0].mxu0 %v4999
      %v5113 = vpop.f32.mrb[0].mxu0
      %v5114 = vadd.f32 0.0, %v5113
      %v5115 = vpop.f32.mrb[0].mxu0
      %v5116 = vpop.f32.mrb[0].mxu0
      %v5117 = vadd.f32 0.0, %v5116
      %v5118 = vpop.f32.mrb[0].mxu0
      %5119 = vmatprep.mubr.bf16.mxu0 0
      %5120 = vmatmul.mubr.bf16.gmra.mrb[0].mxu0 %v5002
      %v5121 = vpop.f32.mrb[0].mxu0
      %v5122 = vadd.f32 0.0, %v5121
      %v5123 = vpop.f32.mrb[0].mxu0
      %v5124 = vpop.f32.mrb[0].mxu0
      %v5125 = vadd.f32 0.0, %v5124
      %v5126 = vpop.f32.mrb[0].mxu0
      %5127 = vmatprep.mubr.bf16.mxu0 0
      %5128 = vmatmul.mubr.bf16.gmra.mrb[0].mxu0 %v5005
      %v5129 = vpop.f32.mrb[0].mxu0
      %v5130 = vadd.f32 0.0, %v5129
      %v5131 = vpop.f32.mrb[0].mxu0
      %v5132 = vpop.f32.mrb[0].mxu0
      %v5133 = vadd.f32 0.0, %v5132
      %v5134 = vpop.f32.mrb[0].mxu0
      %5135 = vmatprep.mubr.bf16.mxu0 0
      %5136 = vmatmul.mubr.bf16.gmra.mrb[0].mxu0 %v5008
      %v5137 = vpop.f32.mrb[0].mxu0
      %v5138 = vadd.f32 0.0, %v5137
      %v5139 = vpop.f32.mrb[0].mxu0
      %v5140 = vpop.f32.mrb[0].mxu0
      %v5141 = vadd.f32 0.0, %v5140
      %v5142 = vpop.f32.mrb[0].mxu0
      %5143 = vmatprep.mubr.bf16.mxu0 0
      %5144 = vmatmul.mubr.bf16.gmra.mrb[0].mxu0 %v5011
      %v5145 = vpop.f32.mrb[0].mxu0
      %v5146 = vadd.f32 0.0, %v5145
      %v5147 = vpop.f32.mrb[0].mxu0
      %v5148 = vpop.f32.mrb[0].mxu0
      %v5149 = vadd.f32 0.0, %v5148
      %v5150 = vpop.f32.mrb[0].mxu0
      %5151 = vmatprep.mubr.bf16.mxu0 0
      %5152 = vmatmul.mubr.bf16.gmra.mrb[0].mxu0 %v5014
      %v5153 = vpop.f32.mrb[0].mxu0
      %v5154 = vadd.f32 0.0, %v5153
      %v5155 = vpop.f32.mrb[0].mxu0
      %v5156 = vpop.f32.mrb[0].mxu0
      %v5157 = vadd.f32 0.0, %v5156
      %v5158 = vpop.f32.mrb[0].mxu0
      %5159 = vmatprep.mubr.bf16.mxu0 0
      %5160 = vmatmul.mubr.bf16.gmra.mrb[0].mxu0 %v5017
      %v5161 = vpop.f32.mrb[0].mxu0
      %v5162 = vadd.f32 0.0, %v5161
      %v5163 = vpop.f32.mrb[0].mxu0
      %v5164 = vpop.f32.mrb[0].mxu0
      %v5165 = vadd.f32 0.0, %v5164
      %v5166 = vpop.f32.mrb[0].mxu0
      %5167 = vmatprep.mubr.bf16.mxu0 0
      %5168 = vmatmul.mubr.bf16.gmra.mrb[0].mxu0 %v5020
      %v5169 = vpop.f32.mrb[0].mxu0
      %v5170 = vadd.f32 0.0, %v5169
      %v5171 = vpop.f32.mrb[0].mxu0
      %v5172 = vpop.f32.mrb[0].mxu0
      %v5173 = vadd.f32 0.0, %v5172
      %v5174 = vpop.f32.mrb[0].mxu0
      %5175 = vmatprep.mubr.bf16.mxu0 0
      %5176 = vmatmul.mubr.bf16.gmra.mrb[0].mxu0 %v5023
      %v5177 = vpop.f32.mrb[0].mxu0
      %v5178 = vadd.f32 0.0, %v5177
      %v5179 = vpop.f32.mrb[0].mxu0
      %v5180 = vpop.f32.mrb[0].mxu0
      %v5181 = vadd.f32 0.0, %v5180
      %v5182 = vpop.f32.mrb[0].mxu0
      %5183 = vmatprep.mubr.bf16.mxu0 0
      %5184 = vmatmul.mubr.bf16.gmra.mrb[0].mxu0 %v5026
      %v5185 = vpop.f32.mrb[0].mxu0
      %v5186 = vadd.f32 0.0, %v5185
      %v5187 = vpop.f32.mrb[0].mxu0
      %v5188 = vpop.f32.mrb[0].mxu0
      %v5189 = vadd.f32 0.0, %v5188
      %v5190 = vpop.f32.mrb[0].mxu0
      %5191 = vdwg.mxu0
      %v5192 = vadd.f32 %v4770, %v5066
      %v5193 = vadd.f32 %v4771, %v5069
      %v5194 = vadd.f32 %v4772, %v5074
      %v5195 = vadd.f32 %v4773, %v5077
      %v5196 = vadd.f32 %v4774, %v5082
      %v5197 = vadd.f32 %v4775, %v5085
      %v5198 = vadd.f32 %v4776, %v5090
      %v5199 = vadd.f32 %v4777, %v5093
      %v5200 = vadd.f32 %v4778, %v5098
      %v5201 = vadd.f32 %v4779, %v5101
      %v5202 = vadd.f32 %v4780, %v5106
      %v5203 = vadd.f32 %v4781, %v5109
      %v5204 = vadd.f32 %v4782, %v5114
      %v5205 = vadd.f32 %v4783, %v5117
      %v5206 = vadd.f32 %v4784, %v5122
      %v5207 = vadd.f32 %v4785, %v5125
      %v5208 = vadd.f32 %v4786, %v5130
      %v5209 = vadd.f32 %v4787, %v5133
      %v5210 = vadd.f32 %v4788, %v5138
      %v5211 = vadd.f32 %v4789, %v5141
      %v5212 = vadd.f32 %v4790, %v5146
      %v5213 = vadd.f32 %v4791, %v5149
      %v5214 = vadd.f32 %v4792, %v5154
      %v5215 = vadd.f32 %v4793, %v5157
      %v5216 = vadd.f32 %v4794, %v5162
      %v5217 = vadd.f32 %v4795, %v5165
      %v5218 = vadd.f32 %v4796, %v5170
      %v5219 = vadd.f32 %v4797, %v5173
      %v5220 = vadd.f32 %v4798, %v5178
      %v5221 = vadd.f32 %v4799, %v5181
      %v5222 = vadd.f32 %v4800, %v5186
      %v5223 = vadd.f32 %v4801, %v5189
      %5224 = vst.msk [vmem:[#allocation2] sm:$0xff] %vm216, %v5192
      %5225 = vst.msk [vmem:[#allocation2 + $0x8] sm:$0xff] %vm216, %v5193
      %5226 = vst.msk [vmem:[#allocation2 + $0x10] sm:$0xff] %vm216, %v5194
      %5227 = vst.msk [vmem:[#allocation2 + $0x18] sm:$0xff] %vm216, %v5195
      %5228 = vst.msk [vmem:[#allocation2 + $0x20] sm:$0xff] %vm216, %v5196
      %5229 = vst.msk [vmem:[#allocation2 + $0x28] sm:$0xff] %vm216, %v5197
      %5230 = vst.msk [vmem:[#allocation2 + $0x30] sm:$0xff] %vm216, %v5198
      %5231 = vst.msk [vmem:[#allocation2 + $0x38] sm:$0xff] %vm216, %v5199
      %5232 = vst.msk [vmem:[#allocation2 + $0x40] sm:$0xff] %vm216, %v5200
      %5233 = vst.msk [vmem:[#allocation2 + $0x48] sm:$0xff] %vm216, %v5201
      %5234 = vst.msk [vmem:[#allocation2 + $0x50] sm:$0xff] %vm216, %v5202
      %5235 = vst.msk [vmem:[#allocation2 + $0x58] sm:$0xff] %vm216, %v5203
      %5236 = vst.msk [vmem:[#allocation2 + $0x60] sm:$0xff] %vm216, %v5204
      %5237 = vst.msk [vmem:[#allocation2 + $0x68] sm:$0xff] %vm216, %v5205
      %5238 = vst.msk [vmem:[#allocation2 + $0x70] sm:$0xff] %vm216, %v5206
      %5239 = vst.msk [vmem:[#allocation2 + $0x78] sm:$0xff] %vm216, %v5207
      %5240 = vst.msk [vmem:[#allocation2 + $0x80] sm:$0xff] %vm216, %v5208
      %5241 = vst.msk [vmem:[#allocation2 + $0x88] sm:$0xff] %vm216, %v5209
      %5242 = vst.msk [vmem:[#allocation2 + $0x90] sm:$0xff] %vm216, %v5210
      %5243 = vst.msk [vmem:[#allocation2 + $0x98] sm:$0xff] %vm216, %v5211
      %5244 = vst.msk [vmem:[#allocation2 + $0xa0] sm:$0xff] %vm216, %v5212
      %5245 = vst.msk [vmem:[#allocation2 + $0xa8] sm:$0xff] %vm216, %v5213
      %5246 = vst.msk [vmem:[#allocation2 + $0xb0] sm:$0xff] %vm216, %v5214
      %5247 = vst.msk [vmem:[#allocation2 + $0xb8] sm:$0xff] %vm216, %v5215
      %5248 = vst.msk [vmem:[#allocation2 + $0xc0] sm:$0xff] %vm216, %v5216
      %5249 = vst.msk [vmem:[#allocation2 + $0xc8] sm:$0xff] %vm216, %v5217
      %5250 = vst.msk [vmem:[#allocation2 + $0xd0] sm:$0xff] %vm216, %v5218
      %5251 = vst.msk [vmem:[#allocation2 + $0xd8] sm:$0xff] %vm216, %v5219
      %5252 = vst.msk [vmem:[#allocation2 + $0xe0] sm:$0xff] %vm216, %v5220
      %5253 = vst.msk [vmem:[#allocation2 + $0xe8] sm:$0xff] %vm216, %v5221
      %5254 = vst.msk [vmem:[#allocation2 + $0xf0] sm:$0xff] %vm216, %v5222
      %5255 = vst.msk [vmem:[#allocation2 + $0xf8] sm:$0xff] %vm216, %v5223
      %v5256 = vld [vmem:[#allocation2] sm:$0xff]
      %v5257 = vld [vmem:[#allocation2 + $0x8] sm:$0xff]
      %v5258 = vld [vmem:[#allocation2 + $0x10] sm:$0xff]
      %v5259 = vld [vmem:[#allocation2 + $0x18] sm:$0xff]
      %v5260 = vld [vmem:[#allocation2 + $0x20] sm:$0xff]
      %v5261 = vld [vmem:[#allocation2 + $0x28] sm:$0xff]
      %v5262 = vld [vmem:[#allocation2 + $0x30] sm:$0xff]
      %v5263 = vld [vmem:[#allocation2 + $0x38] sm:$0xff]
      %v5264 = vld [vmem:[#allocation2 + $0x40] sm:$0xff]
      %v5265 = vld [vmem:[#allocation2 + $0x48] sm:$0xff]
      %v5266 = vld [vmem:[#allocation2 + $0x50] sm:$0xff]
      %v5267 = vld [vmem:[#allocation2 + $0x58] sm:$0xff]
      %v5268 = vld [vmem:[#allocation2 + $0x60] sm:$0xff]
      %v5269 = vld [vmem:[#allocation2 + $0x68] sm:$0xff]
      %v5270 = vld [vmem:[#allocation2 + $0x70] sm:$0xff]
      %v5271 = vld [vmem:[#allocation2 + $0x78] sm:$0xff]
      %v5272 = vld [vmem:[#allocation2 + $0x80] sm:$0xff]
      %v5273 = vld [vmem:[#allocation2 + $0x88] sm:$0xff]
      %v5274 = vld [vmem:[#allocation2 + $0x90] sm:$0xff]
      %v5275 = vld [vmem:[#allocation2 + $0x98] sm:$0xff]
      %v5276 = vld [vmem:[#allocation2 + $0xa0] sm:$0xff]
      %v5277 = vld [vmem:[#allocation2 + $0xa8] sm:$0xff]
      %v5278 = vld [vmem:[#allocation2 + $0xb0] sm:$0xff]
      %v5279 = vld [vmem:[#allocation2 + $0xb8] sm:$0xff]
      %v5280 = vld [vmem:[#allocation2 + $0xc0] sm:$0xff]
      %v5281 = vld [vmem:[#allocation2 + $0xc8] sm:$0xff]
      %v5282 = vld [vmem:[#allocation2 + $0xd0] sm:$0xff]
      %v5283 = vld [vmem:[#allocation2 + $0xd8] sm:$0xff]
      %v5284 = vld [vmem:[#allocation2 + $0xe0] sm:$0xff]
      %v5285 = vld [vmem:[#allocation2 + $0xe8] sm:$0xff]
      %v5286 = vld [vmem:[#allocation2 + $0xf0] sm:$0xff]
      %v5287 = vld [vmem:[#allocation2 + $0xf8] sm:$0xff]
      %5288 = vst.msk [vmem:[%s206] sm:$0xff] %vm216, %v5256
      %5289 = vst.msk [vmem:[%s206 + $0x8] sm:$0xff] %vm216, %v5257
      %5290 = vst.msk [vmem:[%s206 + $0x10] sm:$0xff] %vm216, %v5258
      %5291 = vst.msk [vmem:[%s206 + $0x18] sm:$0xff] %vm216, %v5259
      %5292 = vst.msk [vmem:[%s206 + $0x20] sm:$0xff] %vm216, %v5260
      %5293 = vst.msk [vmem:[%s206 + $0x28] sm:$0xff] %vm216, %v5261
      %5294 = vst.msk [vmem:[%s206 + $0x30] sm:$0xff] %vm216, %v5262
      %5295 = vst.msk [vmem:[%s206 + $0x38] sm:$0xff] %vm216, %v5263
      %5296 = vst.msk [vmem:[%s206 + $0x40] sm:$0xff] %vm216, %v5264
      %5297 = vst.msk [vmem:[%s206 + $0x48] sm:$0xff] %vm216, %v5265
      %5298 = vst.msk [vmem:[%s206 + $0x50] sm:$0xff] %vm216, %v5266
      %5299 = vst.msk [vmem:[%s206 + $0x58] sm:$0xff] %vm216, %v5267
      %5300 = vst.msk [vmem:[%s206 + $0x60] sm:$0xff] %vm216, %v5268
      %5301 = vst.msk [vmem:[%s206 + $0x68] sm:$0xff] %vm216, %v5269
      %5302 = vst.msk [vmem:[%s206 + $0x70] sm:$0xff] %vm216, %v5270
      %5303 = vst.msk [vmem:[%s206 + $0x78] sm:$0xff] %vm216, %v5271
      %5304 = vst.msk [vmem:[%s206 + $0x80] sm:$0xff] %vm216, %v5272
      %5305 = vst.msk [vmem:[%s206 + $0x88] sm:$0xff] %vm216, %v5273
      %5306 = vst.msk [vmem:[%s206 + $0x90] sm:$0xff] %vm216, %v5274
      %5307 = vst.msk [vmem:[%s206 + $0x98] sm:$0xff] %vm216, %v5275
      %5308 = vst.msk [vmem:[%s206 + $0xa0] sm:$0xff] %vm216, %v5276
      %5309 = vst.msk [vmem:[%s206 + $0xa8] sm:$0xff] %vm216, %v5277
      %5310 = vst.msk [vmem:[%s206 + $0xb0] sm:$0xff] %vm216, %v5278
      %5311 = vst.msk [vmem:[%s206 + $0xb8] sm:$0xff] %vm216, %v5279
      %5312 = vst.msk [vmem:[%s206 + $0xc0] sm:$0xff] %vm216, %v5280
      %5313 = vst.msk [vmem:[%s206 + $0xc8] sm:$0xff] %vm216, %v5281
      %5314 = vst.msk [vmem:[%s206 + $0xd0] sm:$0xff] %vm216, %v5282
      %5315 = vst.msk [vmem:[%s206 + $0xd8] sm:$0xff] %vm216, %v5283
      %5316 = vst.msk [vmem:[%s206 + $0xe0] sm:$0xff] %vm216, %v5284
      %5317 = vst.msk [vmem:[%s206 + $0xe8] sm:$0xff] %vm216, %v5285
      %5318 = vst.msk [vmem:[%s206 + $0xf0] sm:$0xff] %vm216, %v5286
      %5319 = vst.msk [vmem:[%s206 + $0xf8] sm:$0xff] %vm216, %v5287
      %s5320 = smul.u32 32, %s19
      %p5321 = scmp.lt.s32.totalorder %s18, 1
      %s5322 = scalar_select %p5321, %s18, 1
      %p5323 = scmp.lt.s32.totalorder %s5320, 31
      %s5324 = scalar_select %p5323, %s5320, 31
      %s5325 = smul.addr %s5322, 32
      %s5326 = sadd.s32 %s5324, %s5325
      %s5327 = smul.addr %s5326, 8
      %s5328 = scalar_lea.vmem %s3, %s5327
      // Predicated region
      $region33: #{tpu_custom_call.1} parent=31 // pred_check
        %p5329 = pneg %p116
      $region34: #{tpu_custom_call.1} parent=31 // pred_check_branch
        %5331 = sbr.rel (%p5329) target = $region36
      $region35: #{tpu_custom_call.1} parent=31 // pred_region
        %s5332 = smul.u32 32, %s19
      $region36: #{tpu_custom_call.1} parent=31 // pred_fallthru
        _
    $region32: #{tpu_custom_call.1} parent=5 // pred_fallthru
      _
    %p5333 = scmp.le.s32.totalorder 2, %s9
    // Predicated region
    $region37: #{tpu_custom_call.1} parent=5 // pred_check
      %p5334 = pneg %p5333
    $region38: #{tpu_custom_call.1} parent=5 // pred_check_branch
      %5336 = sbr.rel (%p5334) target = $region40
    $region39: #{tpu_custom_call.1} parent=5 // pred_region
      %s5337 = ssub.s32 %s9, 2
      // Predicated region
      $region41: #{tpu_custom_call.1} parent=39 // pred_check
        %p5338 = pneg %p122
      $region42: #{tpu_custom_call.1} parent=39 // pred_check_branch
        %5340 = sbr.rel (%p5338) target = $region44
      $region43: #{tpu_custom_call.1} parent=39 // pred_region
        %s5341 = smul.u32 32, %s21
        %p5342 = scmp.lt.s32.totalorder %s20, 1
        %s5343 = scalar_select %p5342, %s20, 1
        %p5344 = scmp.lt.s32.totalorder %s5341, 31
        %s5345 = scalar_select %p5344, %s5341, 31
        %s5346 = smul.addr %s5343, 32
        %s5347 = sadd.s32 %s5345, %s5346
        %s5348 = smul.addr %s5347, 8
        %s5349 = scalar_lea.vmem %s3, %s5348
      $region44: #{tpu_custom_call.1} parent=39 // pred_fallthru
        _
    $region40: #{tpu_custom_call.1} parent=5 // pred_fallthru
      _
  $region6: #{tpu_custom_call.1} parent=0 // loop_footer
    %s13 = sadd.s32 1, %s9
  $region7: #{tpu_custom_call.1} parent=0 // loop_footer_branch
    %8 = sbr.rel target = $region3
  $region8: #{tpu_custom_call.1} parent=0 // loop_exit
    _

</llo_original>
